<compile_context>
chip_gen: v7x
topology: tpu7x:2x2x1
jax: 0.10.0
libtpu: 0.0.40
codegen_flags: <defaults>
</compile_context>

<pallas_src>
import jax
import jax.numpy as jnp
from jax.experimental import pallas as pl
from jax.experimental.pallas import tpu as pltpu

EPS = 1e-5


# ---------------------------------------------------------------------------
# Fused kernel
# ---------------------------------------------------------------------------
def _make_bottleneck_kernel(*, h, w, stride, hout, wout, has_shortcut, use_im2col):
    def kernel(x_ref, w1_ref, t1_ref, w2_ref, t2_ref, w3_ref, t3_ref,
               o_ref, pad_ref):
        cin = x_ref.shape[-1]
        cmid = w1_ref.shape[-1]
        cexp = w3_ref.shape[-1]
        cdt = w1_ref.dtype                       # MXU operand dtype (f32 or bf16)

        xm = x_ref[0]                            # (h*w, cin), lane-dense, no reshape

        # ---- conv1 (1x1) + BN (scale folded into w1) + ReLU -----------------
        y1 = jnp.dot(xm, w1_ref[...], preferred_element_type=jnp.float32)
        y1 = jnp.maximum(y1 + t1_ref[...], 0.0)  # (h*w, cmid) f32

        # ---- conv2 (3x3, pad=1, stride) + BN + ReLU --------------------------
        # Zero only the 4 halo strips (the interior is fully overwritten below),
        # not the whole buffer — correct under megacore sharding and cheap.
        zrow = jnp.zeros((1, w + 2, cmid), pad_ref.dtype)
        zcol = jnp.zeros((h + 2, 1, cmid), pad_ref.dtype)
        pad_ref[0:1, :, :] = zrow
        pad_ref[h + 1:h + 2, :, :] = zrow
        pad_ref[:, 0:1, :] = zcol
        pad_ref[:, w + 1:w + 2, :] = zcol
        pad_ref[1:h + 1, 1:w + 1, :] = y1.reshape(h, w, cmid).astype(pad_ref.dtype)

        def tap(ky, kx):
            # Read only the window each tap needs, directly from the scratch ref.
            if stride == 1:
                p = pad_ref[pl.ds(ky, hout), pl.ds(kx, wout), :]
            else:
                p = pad_ref[pl.ds(ky, hout, stride), pl.ds(kx, wout, stride), :]
            return p.reshape(hout * wout, cmid)

        if use_im2col:
            # Single lane-dense im2col matmul: (M, 9*cmid) @ (9*cmid, cmid).
            patches = jnp.concatenate(
                [tap(ky, kx) for ky in range(3) for kx in range(3)], axis=-1)
            w2_mat = w2_ref[...].reshape(9 * cmid, cmid)
            y2 = jnp.dot(patches, w2_mat, preferred_element_type=jnp.float32)
        else:
            # Very narrow channels (demo size): 9 accumulated taps, f32 accumulator.
            y2 = jnp.zeros((hout * wout, cmid), jnp.float32)
            for k in range(9):
                ky, kx = divmod(k, 3)
                y2 = y2 + jnp.dot(tap(ky, kx), w2_ref[k],
                                  preferred_element_type=jnp.float32)
        y2 = jnp.maximum(y2 + t2_ref[...], 0.0)  # (hout*wout, cmid) f32

        # ---- conv3 (1x1) K-fused with the 1x1-conv shortcut ------------------
        if has_shortcut:
            if stride == 1:
                xs = xm
            else:
                xs = jax.lax.slice(
                    xm.reshape(h, w, cin), (0, 0, 0),
                    ((hout - 1) * stride + 1, (wout - 1) * stride + 1, cin),
                    (stride, stride, 1)).reshape(hout * wout, cin)
            feat = jnp.concatenate([y2.astype(cdt), xs.astype(cdt)], axis=-1)
            y3 = jnp.dot(feat, w3_ref[...], preferred_element_type=jnp.float32)
            y = jnp.maximum(y3 + t3_ref[...], 0.0)       # t3 already includes ts
        else:
            # Identity shortcut: cin == cexp and stride == 1 (asserted host-side).
            y3 = jnp.dot(y2.astype(cdt), w3_ref[...],
                         preferred_element_type=jnp.float32)
            y = jnp.maximum(y3 + t3_ref[...] + xm.astype(jnp.float32), 0.0)

        o_ref[0] = y.astype(o_ref.dtype)                 # (hout*wout, cexp)

    return kernel


# ---------------------------------------------------------------------------
# Host-side folding + wrapper
# ---------------------------------------------------------------------------
def bn_fold_into_weights(w, b, bn, compute_dtype):
    """Fold conv bias + eval-mode BatchNorm into (scaled weight, f32 shift)."""
    gamma, beta, mean, var = bn
    s = gamma / jnp.sqrt(var + EPS)                       # (cout,)
    w_f = (w * s).astype(compute_dtype)                   # scale output channels
    shift = ((b - mean) * s + beta).reshape(1, -1).astype(jnp.float32)
    return w_f, shift


def _pick_vmem_limit():
    """~3/4 of this chip's per-core VMEM, clamped to [32, 96] MiB."""
    mib = 1024 * 1024
    try:
        cap = int(pltpu.get_tpu_info().vmem_capacity_bytes)
    except Exception:
        cap = 64 * mib                                    # conservative (v7x per-TC)
    return max(32 * mib, min((cap * 3) // 4, 96 * mib))


def bottleneck_forward(x_nhwc, p, stride, expansion=4, compute_dtype=jnp.float32):
    """Fused BottleNeck forward.

    compute_dtype=jnp.bfloat16 halves HBM traffic / VMEM footprint and doubles
    MXU rate on v6e/v7x (f32 accumulation via preferred_element_type); the
    BN-shift / ReLU / residual epilogue stays in f32.
    """
    n, h, w, cin = x_nhwc.shape
    cmid = p["w1"].shape[-1]
    cexp = expansion * cmid
    hout = (h + 2 - 3) // stride + 1
    wout = (w + 2 - 3) // stride + 1
    has_shortcut = p["has_shortcut"]
    if not has_shortcut:
        assert stride == 1 and cin == cexp, (
            "identity shortcut requires stride == 1 and cin == expansion*cmid")

    w1f, t1 = bn_fold_into_weights(p["w1"], p["b1"], p["bn1"], compute_dtype)
    w2f, t2 = bn_fold_into_weights(p["w2"], p["b2"], p["bn2"], compute_dtype)
    w3f, t3 = bn_fold_into_weights(p["w3"], p["b3"], p["bn3"], compute_dtype)
    w1f = w1f.reshape(cin, cmid)          # (1,1,cin,cmid)   -> (cin, cmid)
    w2f = w2f.reshape(9, cmid, cmid)      # (3,3,cmid,cmid)  -> (9, cmid, cmid)
    w3f = w3f.reshape(cmid, cexp)         # (1,1,cmid,cexp)  -> (cmid, cexp)

    if has_shortcut:
        # K-fuse conv3 with the 1x1 shortcut conv: [w3 ; ws] along K, t3 + ts.
        wsf, ts = bn_fold_into_weights(p["ws"], p["bs"], p["bns"], compute_dtype)
        w3f = jnp.concatenate([w3f, wsf.reshape(cin, cexp)], axis=0)  # (cmid+cin, cexp)
        t3 = t3 + ts
    k3 = w3f.shape[0]

    # Flatten spatial dims at the BlockSpec boundary (host-side reshape is free).
    x_flat = x_nhwc.reshape(n, h * w, cin).astype(compute_dtype)

    args = [x_flat, w1f, t1, w2f, t2, w3f, t3]
    in_specs = [
        pl.BlockSpec((1, h * w, cin), lambda b: (b, 0, 0)),
        pl.BlockSpec((cin, cmid), lambda b: (0, 0)),
        pl.BlockSpec((1, cmid), lambda b: (0, 0)),
        pl.BlockSpec((9, cmid, cmid), lambda b: (0, 0, 0)),
        pl.BlockSpec((1, cmid), lambda b: (0, 0)),
        pl.BlockSpec((k3, cexp), lambda b: (0, 0)),
        pl.BlockSpec((1, cexp), lambda b: (0, 0)),
    ]

    kernel = _make_bottleneck_kernel(
        h=h, w=w, stride=stride, hout=hout, wout=wout,
        has_shortcut=has_shortcut,
        # One im2col matmul as soon as K = 9*cmid fills an MXU pass (v5e: 128).
        use_im2col=(9 * cmid >= 128),
    )

    out_flat = pl.pallas_call(
        kernel,
        out_shape=jax.ShapeDtypeStruct((n, hout * wout, cexp), x_nhwc.dtype),
        grid=(n,),
        in_specs=in_specs,
        out_specs=pl.BlockSpec((1, hout * wout, cexp), lambda b: (b, 0, 0)),
        scratch_shapes=[pltpu.VMEM((h + 2, w + 2, cmid), compute_dtype)],
        compiler_params=pltpu.CompilerParams(
            dimension_semantics=("parallel",),          # batch across TCs on v7x
            vmem_limit_bytes=_pick_vmem_limit(),
        ),
    )(*args)
    return out_flat.reshape(n, hout, wout, cexp)


# ---------------------------------------------------------------------------
# Parameter init (PyTorch-like) and pure-JAX reference
# ---------------------------------------------------------------------------
def init_bottleneck_params(key, in_channels, out_channels, stride, expansion=4):
    exp_out = expansion * out_channels
    ks = jax.random.split(key, 12)

    def conv_w(k, kh, kw, cin, cout):
        bound = 1.0 / jnp.sqrt(kh * kw * cin)
        return jax.random.uniform(k, (kh, kw, cin, cout), jnp.float32, -bound, bound)

    def conv_b(k, kh, kw, cin, cout):
        bound = 1.0 / jnp.sqrt(kh * kw * cin)
        return jax.random.uniform(k, (cout,), jnp.float32, -bound, bound)

    def bn_params(k, c):
        kg, kb = jax.random.split(k)
        return (1.0 + 0.1 * jax.random.normal(kg, (c,), jnp.float32),
                0.1 * jax.random.normal(kb, (c,), jnp.float32),
                jnp.zeros((c,), jnp.float32),
                jnp.ones((c,), jnp.float32))

    p = {
        "w1": conv_w(ks[0], 1, 1, in_channels, out_channels),
        "b1": conv_b(ks[1], 1, 1, in_channels, out_channels),
        "bn1": bn_params(ks[2], out_channels),
        "w2": conv_w(ks[3], 3, 3, out_channels, out_channels),
        "b2": conv_b(ks[4], 3, 3, out_channels, out_channels),
        "bn2": bn_params(ks[5], out_channels),
        "w3": conv_w(ks[6], 1, 1, out_channels, exp_out),
        "b3": conv_b(ks[7], 1, 1, out_channels, exp_out),
        "bn3": bn_params(ks[8], exp_out),
        "has_shortcut": (stride != 1) or (in_channels != exp_out),
    }
    if p["has_shortcut"]:
        p["ws"] = conv_w(ks[9], 1, 1, in_channels, exp_out)
        p["bs"] = conv_b(ks[10], 1, 1, in_channels, exp_out)
        p["bns"] = bn_params(ks[11], exp_out)
    return p


def reference_forward(x_nhwc, p, stride, expansion=4):
    def conv(x, w, b, st, pad):
        y = jax.lax.conv_general_dilated(
            x, w, window_strides=(st, st), padding=pad,
            dimension_numbers=("NHWC", "HWIO", "NHWC"))
        return y + b.reshape(1, 1, 1, -1)

    def bn(y, params):
        gamma, beta, mean, var = params
        return (y - mean) / jnp.sqrt(var + EPS) * gamma + beta

    out = jax.nn.relu(bn(conv(x_nhwc, p["w1"], p["b1"], 1, "VALID"), p["bn1"]))
    out = jax.nn.relu(bn(conv(out, p["w2"], p["b2"], stride, [(1, 1), (1, 1)]), p["bn2"]))
    out = bn(conv(out, p["w3"], p["b3"], 1, "VALID"), p["bn3"])
    if p["has_shortcut"]:
        sc = bn(conv(x_nhwc, p["ws"], p["bs"], stride, "VALID"), p["bns"])
    else:
        sc = x_nhwc
    return jax.nn.relu(out + sc)


# ---------------------------------------------------------------------------
if __name__ == "__main__":
    key = jax.random.PRNGKey(0)
    kx, kp = jax.random.split(key)

    # PyTorch-equivalent input: NCHW (2, 4, 16, 16); kernels use NHWC.
    in_channels, out_channels, stride = 4, 4, 1
    x_nchw = jax.random.normal(kx, (2, in_channels, 16, 16), jnp.float32)
    x_nhwc = jnp.transpose(x_nchw, (0, 2, 3, 1))

    params = init_bottleneck_params(kp, in_channels, out_channels, stride)

    y = bottleneck_forward(x_nhwc, params, stride)
    y = jax.block_until_ready(y)

    y_ref = reference_forward(x_nhwc, params, stride)
    assert y.shape == (2, 16, 16, 4 * out_channels), y.shape
    assert jnp.allclose(y, y_ref, atol=2e-4, rtol=2e-4), float(
        jnp.max(jnp.abs(y - y_ref))
    )

    print("KERNEL_OK")
</pallas_src>

<mosaic_0001>
module attributes {stable_mosaic.version = 11 : i64} {
  func.func @kernel(%arg0: i32, %arg1: memref<1x256x4xf32, #tpu.memory_space<vmem>>, %arg2: memref<4x4xf32, #tpu.memory_space<vmem>>, %arg3: memref<1x4xf32, #tpu.memory_space<vmem>>, %arg4: memref<9x4x4xf32, #tpu.memory_space<vmem>>, %arg5: memref<1x4xf32, #tpu.memory_space<vmem>>, %arg6: memref<8x16xf32, #tpu.memory_space<vmem>>, %arg7: memref<1x16xf32, #tpu.memory_space<vmem>>, %arg8: memref<1x256x16xf32, #tpu.memory_space<vmem>>, %arg9: memref<18x18x4xf32, #tpu.memory_space<vmem>>) attributes {dimension_semantics = [#tpu.dimension_semantics<parallel>], iteration_bounds = array<i64: 2>, scalar_prefetch = 0 : i64, scratch_operands = 1 : i64, tpu.core_type = #tpu.core_type<tc>, window_params = [{transform_indices = @transform_0, window_bounds = array<i64: 1, 256, 4>}, {pipeline_mode = #tpu.pipeline_mode<synchronous>, transform_indices = @transform_1, window_bounds = array<i64: 4, 4>}, {pipeline_mode = #tpu.pipeline_mode<synchronous>, transform_indices = @transform_2, window_bounds = array<i64: 1, 4>}, {pipeline_mode = #tpu.pipeline_mode<synchronous>, transform_indices = @transform_3, window_bounds = array<i64: 9, 4, 4>}, {pipeline_mode = #tpu.pipeline_mode<synchronous>, transform_indices = @transform_4, window_bounds = array<i64: 1, 4>}, {pipeline_mode = #tpu.pipeline_mode<synchronous>, transform_indices = @transform_5, window_bounds = array<i64: 8, 16>}, {pipeline_mode = #tpu.pipeline_mode<synchronous>, transform_indices = @transform_6, window_bounds = array<i64: 1, 16>}, {transform_indices = @transform_7, window_bounds = array<i64: 1, 256, 16>}]} {
    %c0 = arith.constant 0 : index
    %c0_0 = arith.constant 0 : index
    %c0_1 = arith.constant 0 : index
    %0 = vector.load %arg1[%c0, %c0_0, %c0_1] : memref<1x256x4xf32, #tpu.memory_space<vmem>>, vector<1x256x4xf32>
    %1 = vector.shape_cast %0 : vector<1x256x4xf32> to vector<256x4xf32>
    %c0_2 = arith.constant 0 : index
    %c0_3 = arith.constant 0 : index
    %2 = vector.load %arg2[%c0_2, %c0_3] : memref<4x4xf32, #tpu.memory_space<vmem>>, vector<4x4xf32>
    %cst = arith.constant dense<0.000000e+00> : vector<256x4xf32>
    %3 = tpu.matmul %1, %2, %cst {dimension_numbers = #tpu.dot_dimension_numbers<[1], [0], [0], [1], [0, 0, 1, 1], [], []>} : vector<256x4xf32>, vector<4x4xf32>, vector<256x4xf32> -> vector<256x4xf32>
    %c0_4 = arith.constant 0 : index
    %c0_5 = arith.constant 0 : index
    %4 = vector.load %arg3[%c0_4, %c0_5] : memref<1x4xf32, #tpu.memory_space<vmem>>, vector<1x4xf32>
    %5 = vector.broadcast %4 : vector<1x4xf32> to vector<256x4xf32>
    %6 = arith.addf %3, %5 : vector<256x4xf32>
    %cst_6 = arith.constant 0.000000e+00 : f32
    %7 = vector.broadcast %cst_6 : f32 to vector<256x4xf32>
    %8 = arith.maximumf %6, %7 : vector<256x4xf32>
    %cst_7 = arith.constant 0.000000e+00 : f32
    %9 = vector.broadcast %cst_7 : f32 to vector<1x18x4xf32>
    %cst_8 = arith.constant 0.000000e+00 : f32
    %10 = vector.broadcast %cst_8 : f32 to vector<18x1x4xf32>
    %c0_9 = arith.constant 0 : index
    %c0_10 = arith.constant 0 : index
    %c0_11 = arith.constant 0 : index
    %11 = vector.load %arg9[%c0_9, %c0_10, %c0_11] : memref<18x18x4xf32, #tpu.memory_space<vmem>>, vector<1x18x4xf32>
    tpu.vector_store %arg9[%c0_9, %c0_10, %c0_11], %9 {strides = array<i32>} : memref<18x18x4xf32, #tpu.memory_space<vmem>>, vector<1x18x4xf32>,
    %c17 = arith.constant 17 : index
    %c0_12 = arith.constant 0 : index
    %c0_13 = arith.constant 0 : index
    %12 = vector.load %arg9[%c17, %c0_12, %c0_13] : memref<18x18x4xf32, #tpu.memory_space<vmem>>, vector<1x18x4xf32>
    tpu.vector_store %arg9[%c17, %c0_12, %c0_13], %9 {strides = array<i32>} : memref<18x18x4xf32, #tpu.memory_space<vmem>>, vector<1x18x4xf32>,
    %c0_14 = arith.constant 0 : index
    %c0_15 = arith.constant 0 : index
    %c0_16 = arith.constant 0 : index
    %13 = vector.load %arg9[%c0_14, %c0_15, %c0_16] : memref<18x18x4xf32, #tpu.memory_space<vmem>>, vector<18x1x4xf32>
    tpu.vector_store %arg9[%c0_14, %c0_15, %c0_16], %10 {strides = array<i32>} : memref<18x18x4xf32, #tpu.memory_space<vmem>>, vector<18x1x4xf32>,
    %c0_17 = arith.constant 0 : index
    %c17_18 = arith.constant 17 : index
    %c0_19 = arith.constant 0 : index
    %14 = vector.load %arg9[%c0_17, %c17_18, %c0_19] : memref<18x18x4xf32, #tpu.memory_space<vmem>>, vector<18x1x4xf32>
    tpu.vector_store %arg9[%c0_17, %c17_18, %c0_19], %10 {strides = array<i32>} : memref<18x18x4xf32, #tpu.memory_space<vmem>>, vector<18x1x4xf32>,
    %15 = vector.shape_cast %8 : vector<256x4xf32> to vector<16x16x4xf32>
    %c1 = arith.constant 1 : index
    %c1_20 = arith.constant 1 : index
    %c0_21 = arith.constant 0 : index
    %16 = vector.load %arg9[%c1, %c1_20, %c0_21] : memref<18x18x4xf32, #tpu.memory_space<vmem>>, vector<16x16x4xf32>
    tpu.vector_store %arg9[%c1, %c1_20, %c0_21], %15 {strides = array<i32>} : memref<18x18x4xf32, #tpu.memory_space<vmem>>, vector<16x16x4xf32>,
    %cst_22 = arith.constant 0.000000e+00 : f32
    %17 = vector.broadcast %cst_22 : f32 to vector<256x4xf32>
    %c0_23 = arith.constant 0 : index
    %c0_24 = arith.constant 0 : index
    %c0_25 = arith.constant 0 : index
    %18 = vector.load %arg9[%c0_23, %c0_24, %c0_25] : memref<18x18x4xf32, #tpu.memory_space<vmem>>, vector<16x16x4xf32>
    %19 = vector.shape_cast %18 : vector<16x16x4xf32> to vector<256x4xf32>
    %c0_26 = arith.constant 0 : index
    %c0_27 = arith.constant 0 : index
    %c0_28 = arith.constant 0 : index
    %20 = vector.load %arg4[%c0_26, %c0_27, %c0_28] : memref<9x4x4xf32, #tpu.memory_space<vmem>>, vector<1x4x4xf32>
    %21 = vector.shape_cast %20 : vector<1x4x4xf32> to vector<4x4xf32>
    %cst_29 = arith.constant dense<0.000000e+00> : vector<256x4xf32>
    %22 = tpu.matmul %19, %21, %cst_29 {dimension_numbers = #tpu.dot_dimension_numbers<[1], [0], [0], [1], [0, 0, 1, 1], [], []>} : vector<256x4xf32>, vector<4x4xf32>, vector<256x4xf32> -> vector<256x4xf32>
    %23 = arith.addf %17, %22 : vector<256x4xf32>
    %c0_30 = arith.constant 0 : index
    %c1_31 = arith.constant 1 : index
    %c0_32 = arith.constant 0 : index
    %24 = vector.load %arg9[%c0_30, %c1_31, %c0_32] : memref<18x18x4xf32, #tpu.memory_space<vmem>>, vector<16x16x4xf32>
    %25 = vector.shape_cast %24 : vector<16x16x4xf32> to vector<256x4xf32>
    %c1_33 = arith.constant 1 : index
    %c0_34 = arith.constant 0 : index
    %c0_35 = arith.constant 0 : index
    %26 = vector.load %arg4[%c1_33, %c0_34, %c0_35] : memref<9x4x4xf32, #tpu.memory_space<vmem>>, vector<1x4x4xf32>
    %27 = vector.shape_cast %26 : vector<1x4x4xf32> to vector<4x4xf32>
    %cst_36 = arith.constant dense<0.000000e+00> : vector<256x4xf32>
    %28 = tpu.matmul %25, %27, %cst_36 {dimension_numbers = #tpu.dot_dimension_numbers<[1], [0], [0], [1], [0, 0, 1, 1], [], []>} : vector<256x4xf32>, vector<4x4xf32>, vector<256x4xf32> -> vector<256x4xf32>
    %29 = arith.addf %23, %28 : vector<256x4xf32>
    %c0_37 = arith.constant 0 : index
    %c2 = arith.constant 2 : index
    %c0_38 = arith.constant 0 : index
    %30 = vector.load %arg9[%c0_37, %c2, %c0_38] : memref<18x18x4xf32, #tpu.memory_space<vmem>>, vector<16x16x4xf32>
    %31 = vector.shape_cast %30 : vector<16x16x4xf32> to vector<256x4xf32>
    %c2_39 = arith.constant 2 : index
    %c0_40 = arith.constant 0 : index
    %c0_41 = arith.constant 0 : index
    %32 = vector.load %arg4[%c2_39, %c0_40, %c0_41] : memref<9x4x4xf32, #tpu.memory_space<vmem>>, vector<1x4x4xf32>
    %33 = vector.shape_cast %32 : vector<1x4x4xf32> to vector<4x4xf32>
    %cst_42 = arith.constant dense<0.000000e+00> : vector<256x4xf32>
    %34 = tpu.matmul %31, %33, %cst_42 {dimension_numbers = #tpu.dot_dimension_numbers<[1], [0], [0], [1], [0, 0, 1, 1], [], []>} : vector<256x4xf32>, vector<4x4xf32>, vector<256x4xf32> -> vector<256x4xf32>
    %35 = arith.addf %29, %34 : vector<256x4xf32>
    %c1_43 = arith.constant 1 : index
    %c0_44 = arith.constant 0 : index
    %c0_45 = arith.constant 0 : index
    %36 = vector.load %arg9[%c1_43, %c0_44, %c0_45] : memref<18x18x4xf32, #tpu.memory_space<vmem>>, vector<16x16x4xf32>
    %37 = vector.shape_cast %36 : vector<16x16x4xf32> to vector<256x4xf32>
    %c3 = arith.constant 3 : index
    %c0_46 = arith.constant 0 : index
    %c0_47 = arith.constant 0 : index
    %38 = vector.load %arg4[%c3, %c0_46, %c0_47] : memref<9x4x4xf32, #tpu.memory_space<vmem>>, vector<1x4x4xf32>
    %39 = vector.shape_cast %38 : vector<1x4x4xf32> to vector<4x4xf32>
    %cst_48 = arith.constant dense<0.000000e+00> : vector<256x4xf32>
    %40 = tpu.matmul %37, %39, %cst_48 {dimension_numbers = #tpu.dot_dimension_numbers<[1], [0], [0], [1], [0, 0, 1, 1], [], []>} : vector<256x4xf32>, vector<4x4xf32>, vector<256x4xf32> -> vector<256x4xf32>
    %41 = arith.addf %35, %40 : vector<256x4xf32>
    %c1_49 = arith.constant 1 : index
    %c1_50 = arith.constant 1 : index
    %c0_51 = arith.constant 0 : index
    %42 = vector.load %arg9[%c1_49, %c1_50, %c0_51] : memref<18x18x4xf32, #tpu.memory_space<vmem>>, vector<16x16x4xf32>
    %43 = vector.shape_cast %42 : vector<16x16x4xf32> to vector<256x4xf32>
    %c4 = arith.constant 4 : index
    %c0_52 = arith.constant 0 : index
    %c0_53 = arith.constant 0 : index
    %44 = vector.load %arg4[%c4, %c0_52, %c0_53] : memref<9x4x4xf32, #tpu.memory_space<vmem>>, vector<1x4x4xf32>
    %45 = vector.shape_cast %44 : vector<1x4x4xf32> to vector<4x4xf32>
    %cst_54 = arith.constant dense<0.000000e+00> : vector<256x4xf32>
    %46 = tpu.matmul %43, %45, %cst_54 {dimension_numbers = #tpu.dot_dimension_numbers<[1], [0], [0], [1], [0, 0, 1, 1], [], []>} : vector<256x4xf32>, vector<4x4xf32>, vector<256x4xf32> -> vector<256x4xf32>
    %47 = arith.addf %41, %46 : vector<256x4xf32>
    %c1_55 = arith.constant 1 : index
    %c2_56 = arith.constant 2 : index
    %c0_57 = arith.constant 0 : index
    %48 = vector.load %arg9[%c1_55, %c2_56, %c0_57] : memref<18x18x4xf32, #tpu.memory_space<vmem>>, vector<16x16x4xf32>
    %49 = vector.shape_cast %48 : vector<16x16x4xf32> to vector<256x4xf32>
    %c5 = arith.constant 5 : index
    %c0_58 = arith.constant 0 : index
    %c0_59 = arith.constant 0 : index
    %50 = vector.load %arg4[%c5, %c0_58, %c0_59] : memref<9x4x4xf32, #tpu.memory_space<vmem>>, vector<1x4x4xf32>
    %51 = vector.shape_cast %50 : vector<1x4x4xf32> to vector<4x4xf32>
    %cst_60 = arith.constant dense<0.000000e+00> : vector<256x4xf32>
    %52 = tpu.matmul %49, %51, %cst_60 {dimension_numbers = #tpu.dot_dimension_numbers<[1], [0], [0], [1], [0, 0, 1, 1], [], []>} : vector<256x4xf32>, vector<4x4xf32>, vector<256x4xf32> -> vector<256x4xf32>
    %53 = arith.addf %47, %52 : vector<256x4xf32>
    %c2_61 = arith.constant 2 : index
    %c0_62 = arith.constant 0 : index
    %c0_63 = arith.constant 0 : index
    %54 = vector.load %arg9[%c2_61, %c0_62, %c0_63] : memref<18x18x4xf32, #tpu.memory_space<vmem>>, vector<16x16x4xf32>
    %55 = vector.shape_cast %54 : vector<16x16x4xf32> to vector<256x4xf32>
    %c6 = arith.constant 6 : index
    %c0_64 = arith.constant 0 : index
    %c0_65 = arith.constant 0 : index
    %56 = vector.load %arg4[%c6, %c0_64, %c0_65] : memref<9x4x4xf32, #tpu.memory_space<vmem>>, vector<1x4x4xf32>
    %57 = vector.shape_cast %56 : vector<1x4x4xf32> to vector<4x4xf32>
    %cst_66 = arith.constant dense<0.000000e+00> : vector<256x4xf32>
    %58 = tpu.matmul %55, %57, %cst_66 {dimension_numbers = #tpu.dot_dimension_numbers<[1], [0], [0], [1], [0, 0, 1, 1], [], []>} : vector<256x4xf32>, vector<4x4xf32>, vector<256x4xf32> -> vector<256x4xf32>
    %59 = arith.addf %53, %58 : vector<256x4xf32>
    %c2_67 = arith.constant 2 : index
    %c1_68 = arith.constant 1 : index
    %c0_69 = arith.constant 0 : index
    %60 = vector.load %arg9[%c2_67, %c1_68, %c0_69] : memref<18x18x4xf32, #tpu.memory_space<vmem>>, vector<16x16x4xf32>
    %61 = vector.shape_cast %60 : vector<16x16x4xf32> to vector<256x4xf32>
    %c7 = arith.constant 7 : index
    %c0_70 = arith.constant 0 : index
    %c0_71 = arith.constant 0 : index
    %62 = vector.load %arg4[%c7, %c0_70, %c0_71] : memref<9x4x4xf32, #tpu.memory_space<vmem>>, vector<1x4x4xf32>
    %63 = vector.shape_cast %62 : vector<1x4x4xf32> to vector<4x4xf32>
    %cst_72 = arith.constant dense<0.000000e+00> : vector<256x4xf32>
    %64 = tpu.matmul %61, %63, %cst_72 {dimension_numbers = #tpu.dot_dimension_numbers<[1], [0], [0], [1], [0, 0, 1, 1], [], []>} : vector<256x4xf32>, vector<4x4xf32>, vector<256x4xf32> -> vector<256x4xf32>
    %65 = arith.addf %59, %64 : vector<256x4xf32>
    %c2_73 = arith.constant 2 : index
    %c2_74 = arith.constant 2 : index
    %c0_75 = arith.constant 0 : index
    %66 = vector.load %arg9[%c2_73, %c2_74, %c0_75] : memref<18x18x4xf32, #tpu.memory_space<vmem>>, vector<16x16x4xf32>
    %67 = vector.shape_cast %66 : vector<16x16x4xf32> to vector<256x4xf32>
    %c8 = arith.constant 8 : index
    %c0_76 = arith.constant 0 : index
    %c0_77 = arith.constant 0 : index
    %68 = vector.load %arg4[%c8, %c0_76, %c0_77] : memref<9x4x4xf32, #tpu.memory_space<vmem>>, vector<1x4x4xf32>
    %69 = vector.shape_cast %68 : vector<1x4x4xf32> to vector<4x4xf32>
    %cst_78 = arith.constant dense<0.000000e+00> : vector<256x4xf32>
    %70 = tpu.matmul %67, %69, %cst_78 {dimension_numbers = #tpu.dot_dimension_numbers<[1], [0], [0], [1], [0, 0, 1, 1], [], []>} : vector<256x4xf32>, vector<4x4xf32>, vector<256x4xf32> -> vector<256x4xf32>
    %71 = arith.addf %65, %70 : vector<256x4xf32>
    %c0_79 = arith.constant 0 : index
    %c0_80 = arith.constant 0 : index
    %72 = vector.load %arg5[%c0_79, %c0_80] : memref<1x4xf32, #tpu.memory_space<vmem>>, vector<1x4xf32>
    %73 = vector.broadcast %72 : vector<1x4xf32> to vector<256x4xf32>
    %74 = arith.addf %71, %73 : vector<256x4xf32>
    %cst_81 = arith.constant 0.000000e+00 : f32
    %75 = vector.broadcast %cst_81 : f32 to vector<256x4xf32>
    %76 = arith.maximumf %74, %75 : vector<256x4xf32>
    %77 = tpu.concatenate %76, %1 in 1 : vector<256x4xf32>, vector<256x4xf32> -> vector<256x8xf32>
    %c0_82 = arith.constant 0 : index
    %c0_83 = arith.constant 0 : index
    %78 = vector.load %arg6[%c0_82, %c0_83] : memref<8x16xf32, #tpu.memory_space<vmem>>, vector<8x16xf32>
    %cst_84 = arith.constant dense<0.000000e+00> : vector<256x16xf32>
    %79 = tpu.matmul %77, %78, %cst_84 {dimension_numbers = #tpu.dot_dimension_numbers<[1], [0], [0], [1], [0, 0, 1, 1], [], []>} : vector<256x8xf32>, vector<8x16xf32>, vector<256x16xf32> -> vector<256x16xf32>
    %c0_85 = arith.constant 0 : index
    %c0_86 = arith.constant 0 : index
    %80 = vector.load %arg7[%c0_85, %c0_86] : memref<1x16xf32, #tpu.memory_space<vmem>>, vector<1x16xf32>
    %81 = vector.broadcast %80 : vector<1x16xf32> to vector<256x16xf32>
    %82 = arith.addf %79, %81 : vector<256x16xf32>
    %cst_87 = arith.constant 0.000000e+00 : f32
    %83 = vector.broadcast %cst_87 : f32 to vector<256x16xf32>
    %84 = arith.maximumf %82, %83 : vector<256x16xf32>
    %c0_88 = arith.constant 0 : index
    %c0_89 = arith.constant 0 : index
    %c0_90 = arith.constant 0 : index
    %85 = vector.load %arg8[%c0_88, %c0_89, %c0_90] : memref<1x256x16xf32, #tpu.memory_space<vmem>>, vector<1x256x16xf32>
    %86 = vector.shape_cast %85 : vector<1x256x16xf32> to vector<256x16xf32>
    %87 = vector.shape_cast %84 : vector<256x16xf32> to vector<1x256x16xf32>
    tpu.vector_store %arg8[%c0_88, %c0_89, %c0_90], %87 {strides = array<i32>} : memref<1x256x16xf32, #tpu.memory_space<vmem>>, vector<1x256x16xf32>,
    return
  }
  func.func @transform_0(%arg0: i32) -> (i32, i32, i32) {
    %c0_i32 = arith.constant 0 : i32
    %c0_i32_0 = arith.constant 0 : i32
    %c0_i32_1 = arith.constant 0 : i32
    return %arg0, %c0_i32, %c0_i32_0 : i32, i32, i32
  }
  func.func @transform_1(%arg0: i32) -> (i32, i32) {
    %c0_i32 = arith.constant 0 : i32
    %c0_i32_0 = arith.constant 0 : i32
    %c0_i32_1 = arith.constant 0 : i32
    return %c0_i32, %c0_i32_0 : i32, i32
  }
  func.func @transform_2(%arg0: i32) -> (i32, i32) {
    %c0_i32 = arith.constant 0 : i32
    %c0_i32_0 = arith.constant 0 : i32
    %c0_i32_1 = arith.constant 0 : i32
    return %c0_i32, %c0_i32_0 : i32, i32
  }
  func.func @transform_3(%arg0: i32) -> (i32, i32, i32) {
    %c0_i32 = arith.constant 0 : i32
    %c0_i32_0 = arith.constant 0 : i32
    %c0_i32_1 = arith.constant 0 : i32
    %c0_i32_2 = arith.constant 0 : i32
    return %c0_i32, %c0_i32_0, %c0_i32_1 : i32, i32, i32
  }
  func.func @transform_4(%arg0: i32) -> (i32, i32) {
    %c0_i32 = arith.constant 0 : i32
    %c0_i32_0 = arith.constant 0 : i32
    %c0_i32_1 = arith.constant 0 : i32
    return %c0_i32, %c0_i32_0 : i32, i32
  }
  func.func @transform_5(%arg0: i32) -> (i32, i32) {
    %c0_i32 = arith.constant 0 : i32
    %c0_i32_0 = arith.constant 0 : i32
    %c0_i32_1 = arith.constant 0 : i32
    return %c0_i32, %c0_i32_0 : i32, i32
  }
  func.func @transform_6(%arg0: i32) -> (i32, i32) {
    %c0_i32 = arith.constant 0 : i32
    %c0_i32_0 = arith.constant 0 : i32
    %c0_i32_1 = arith.constant 0 : i32
    return %c0_i32, %c0_i32_0 : i32, i32
  }
  func.func @transform_7(%arg0: i32) -> (i32, i32, i32) {
    %c0_i32 = arith.constant 0 : i32
    %c0_i32_0 = arith.constant 0 : i32
    %c0_i32_1 = arith.constant 0 : i32
    return %arg0, %c0_i32, %c0_i32_0 : i32, i32, i32
  }
}

</mosaic_0001>

<llo_original>
// kernel: tpu_custom_call.1
$region0: #{tpu_custom_call.1}
  #allocation0 [shape = 'u32[]', space=smem, size = 0x4, offset = 0x4, fixed_abs, tag = 'smem constant byte address 0x4 - core index']
  #allocation1 [shape = 'u32[144,128]{1,0:T(1,128)}', space=vmem, size = 0x12000, scoped, tag = 'internal scratch']
  #allocation2 [shape = 'f32[18,18,4]{2,1,0:T(8,128)}', space=vmem, size = 0x36000, scoped, tag = 'scratch operand']
  %s0 = inlined_call_operand.vmem [shape: f32[2,256,4], index: 0, kind: input, shape index: {}]
  %s1 = inlined_call_operand.vmem [shape: f32[4,4], index: 1, kind: input, shape index: {}]
  %s2 = inlined_call_operand.vmem [shape: f32[1,4], index: 2, kind: input, shape index: {}]
  %s3 = inlined_call_operand.vmem [shape: f32[9,4,4], index: 3, kind: input, shape index: {}]
  %s4 = inlined_call_operand.vmem [shape: f32[1,4], index: 4, kind: input, shape index: {}]
  %s5 = inlined_call_operand.vmem [shape: f32[8,16], index: 5, kind: input, shape index: {}]
  %s6 = inlined_call_operand.vmem [shape: f32[1,16], index: 6, kind: input, shape index: {}]
  %s7 = inlined_call_operand.vmem [shape: f32[2,256,16], index: 7, kind: output, shape index: {}]
  %s8 = sld [smem:[#allocation0]]
  $region61: #{tpu_custom_call.1} parent=0
    _
  %s10 = ssub.s32 1, %s8
  %s11 = scalar_select 0, %s10, %s8
  loop: start=0, step=1, limit=4
  $region2: #{tpu_custom_call.1} parent=0 // loop_pre_header
    _
  $region3: #{tpu_custom_call.1} parent=0 // loop_header
    %s13 = sphi 0, %s17
    %p14 = scmp.ge.s32.totalorder %s13, 4
    %s23 = sphi 0, %s25
    %s26 = sphi 0, %s23
    %s27 = sphi 0, %s26
    %s43 = sphi 0, %s27
    %s47 = sphi 0, %s47
    %s49 = sphi 0, %s47
    %s50 = sphi 0, %s49
    %s64 = sphi 0, %s50
    %s68 = sphi 0, %s68
    %s70 = sphi 0, %s68
    %s71 = sphi 0, %s70
    %s85 = sphi 0, %s71
    %s89 = sphi 0, %s89
    %s91 = sphi 0, %s89
    %s92 = sphi 0, %s91
    %s106 = sphi 0, %s92
    %s110 = sphi 0, %s110
    %s112 = sphi 0, %s110
    %s113 = sphi 0, %s112
    %s127 = sphi 0, %s113
    %s131 = sphi 0, %s131
    %s133 = sphi 0, %s131
    %s134 = sphi 0, %s133
    %s148 = sphi 0, %s134
    %s152 = sphi 0, %s152
    %s154 = sphi 0, %s152
    %s155 = sphi 0, %s154
    %s169 = sphi 0, %s155
    %s175 = sphi 0, %s177
    %s178 = sphi 0, %s175
    %s179 = sphi 0, %s178
    %s195 = sphi 0, %s179
  $region4: #{tpu_custom_call.1} parent=0 // loop_header_branch
    %16 = sbr.rel (%p14) target = $region8
  $region5: #{tpu_custom_call.1} parent=0 // loop_body
    %s18 = ssub.s32 %s13, 1
    %s19 = ssub.s32 %s13, 2
    %s20 = sadd.s32 %s13, 1
    %s21 = ssub.s32 %s13, %s20
    %p22 = scmp.eq.s32.totalorder %s21, 0
    %s24 = sadd.s32 %s23, 1
    %s25 = scalar_select %p22, %s23, %s24
    %p28 = pneg %p22
    %p29 = scmp.eq.s32.totalorder %s13, 1
    %p30 = por %p28, %p29
    %p31 = scmp.ne.s32.totalorder %s23, %s26
    %p32 = scmp.eq.s32.totalorder %s13, 0
    %p33 = por %p31, %p32
    %p34 = scmp.ne.s32.totalorder %s23, %s26
    %p35 = scmp.eq.s32.totalorder %s18, 1
    %p36 = por %p34, %p35
    %p37 = scmp.ne.s32.totalorder %s26, %s27
    %p38 = scmp.eq.s32.totalorder %s18, 0
    %p39 = por %p37, %p38
    %p40 = scmp.ne.s32.totalorder %s26, %s27
    %p41 = scmp.eq.s32.totalorder %s19, 1
    %p42 = por %p40, %p41
    %p44 = scmp.ne.s32.totalorder %s27, %s43
    %p45 = scmp.eq.s32.totalorder %s19, 0
    %p46 = por %p44, %p45
    %s48 = sadd.s32 %s47, 1
    %p51 = scmp.eq.s32.totalorder %s13, 1
    %p52 = scmp.ne.s32.totalorder %s47, %s49
    %p53 = scmp.eq.s32.totalorder %s13, 0
    %p54 = por %p52, %p53
    %p55 = scmp.ne.s32.totalorder %s47, %s49
    %p56 = scmp.eq.s32.totalorder %s18, 1
    %p57 = por %p55, %p56
    %p58 = scmp.ne.s32.totalorder %s49, %s50
    %p59 = scmp.eq.s32.totalorder %s18, 0
    %p60 = por %p58, %p59
    %p61 = scmp.ne.s32.totalorder %s49, %s50
    %p62 = scmp.eq.s32.totalorder %s19, 1
    %p63 = por %p61, %p62
    %p65 = scmp.ne.s32.totalorder %s50, %s64
    %p66 = scmp.eq.s32.totalorder %s19, 0
    %p67 = por %p65, %p66
    %s69 = sadd.s32 %s68, 1
    %p72 = scmp.eq.s32.totalorder %s13, 1
    %p73 = scmp.ne.s32.totalorder %s68, %s70
    %p74 = scmp.eq.s32.totalorder %s13, 0
    %p75 = por %p73, %p74
    %p76 = scmp.ne.s32.totalorder %s68, %s70
    %p77 = scmp.eq.s32.totalorder %s18, 1
    %p78 = por %p76, %p77
    %p79 = scmp.ne.s32.totalorder %s70, %s71
    %p80 = scmp.eq.s32.totalorder %s18, 0
    %p81 = por %p79, %p80
    %p82 = scmp.ne.s32.totalorder %s70, %s71
    %p83 = scmp.eq.s32.totalorder %s19, 1
    %p84 = por %p82, %p83
    %p86 = scmp.ne.s32.totalorder %s71, %s85
    %p87 = scmp.eq.s32.totalorder %s19, 0
    %p88 = por %p86, %p87
    %s90 = sadd.s32 %s89, 1
    %p93 = scmp.eq.s32.totalorder %s13, 1
    %p94 = scmp.ne.s32.totalorder %s89, %s91
    %p95 = scmp.eq.s32.totalorder %s13, 0
    %p96 = por %p94, %p95
    %p97 = scmp.ne.s32.totalorder %s89, %s91
    %p98 = scmp.eq.s32.totalorder %s18, 1
    %p99 = por %p97, %p98
    %p100 = scmp.ne.s32.totalorder %s91, %s92
    %p101 = scmp.eq.s32.totalorder %s18, 0
    %p102 = por %p100, %p101
    %p103 = scmp.ne.s32.totalorder %s91, %s92
    %p104 = scmp.eq.s32.totalorder %s19, 1
    %p105 = por %p103, %p104
    %p107 = scmp.ne.s32.totalorder %s92, %s106
    %p108 = scmp.eq.s32.totalorder %s19, 0
    %p109 = por %p107, %p108
    %s111 = sadd.s32 %s110, 1
    %p114 = scmp.eq.s32.totalorder %s13, 1
    %p115 = scmp.ne.s32.totalorder %s110, %s112
    %p116 = scmp.eq.s32.totalorder %s13, 0
    %p117 = por %p115, %p116
    %p118 = scmp.ne.s32.totalorder %s110, %s112
    %p119 = scmp.eq.s32.totalorder %s18, 1
    %p120 = por %p118, %p119
    %p121 = scmp.ne.s32.totalorder %s112, %s113
    %p122 = scmp.eq.s32.totalorder %s18, 0
    %p123 = por %p121, %p122
    %p124 = scmp.ne.s32.totalorder %s112, %s113
    %p125 = scmp.eq.s32.totalorder %s19, 1
    %p126 = por %p124, %p125
    %p128 = scmp.ne.s32.totalorder %s113, %s127
    %p129 = scmp.eq.s32.totalorder %s19, 0
    %p130 = por %p128, %p129
    %s132 = sadd.s32 %s131, 1
    %p135 = scmp.eq.s32.totalorder %s13, 1
    %p136 = scmp.ne.s32.totalorder %s131, %s133
    %p137 = scmp.eq.s32.totalorder %s13, 0
    %p138 = por %p136, %p137
    %p139 = scmp.ne.s32.totalorder %s131, %s133
    %p140 = scmp.eq.s32.totalorder %s18, 1
    %p141 = por %p139, %p140
    %p142 = scmp.ne.s32.totalorder %s133, %s134
    %p143 = scmp.eq.s32.totalorder %s18, 0
    %p144 = por %p142, %p143
    %p145 = scmp.ne.s32.totalorder %s133, %s134
    %p146 = scmp.eq.s32.totalorder %s19, 1
    %p147 = por %p145, %p146
    %p149 = scmp.ne.s32.totalorder %s134, %s148
    %p150 = scmp.eq.s32.totalorder %s19, 0
    %p151 = por %p149, %p150
    %s153 = sadd.s32 %s152, 1
    %p156 = scmp.eq.s32.totalorder %s13, 1
    %p157 = scmp.ne.s32.totalorder %s152, %s154
    %p158 = scmp.eq.s32.totalorder %s13, 0
    %p159 = por %p157, %p158
    %p160 = scmp.ne.s32.totalorder %s152, %s154
    %p161 = scmp.eq.s32.totalorder %s18, 1
    %p162 = por %p160, %p161
    %p163 = scmp.ne.s32.totalorder %s154, %s155
    %p164 = scmp.eq.s32.totalorder %s18, 0
    %p165 = por %p163, %p164
    %p166 = scmp.ne.s32.totalorder %s154, %s155
    %p167 = scmp.eq.s32.totalorder %s19, 1
    %p168 = por %p166, %p167
    %p170 = scmp.ne.s32.totalorder %s155, %s169
    %p171 = scmp.eq.s32.totalorder %s19, 0
    %p172 = por %p170, %p171
    %s173 = ssub.s32 %s13, %s20
    %p174 = scmp.eq.s32.totalorder %s173, 0
    %s176 = sadd.s32 %s175, 1
    %s177 = scalar_select %p174, %s175, %s176
    %p180 = pneg %p174
    %p181 = scmp.eq.s32.totalorder %s13, 1
    %p182 = por %p180, %p181
    %p183 = scmp.ne.s32.totalorder %s175, %s178
    %p184 = scmp.eq.s32.totalorder %s13, 0
    %p185 = por %p183, %p184
    %p186 = scmp.ne.s32.totalorder %s175, %s178
    %p187 = scmp.eq.s32.totalorder %s18, 1
    %p188 = por %p186, %p187
    %p189 = scmp.ne.s32.totalorder %s178, %s179
    %p190 = scmp.eq.s32.totalorder %s18, 0
    %p191 = por %p189, %p190
    %p192 = scmp.ne.s32.totalorder %s178, %s179
    %p193 = scmp.eq.s32.totalorder %s19, 1
    %p194 = por %p192, %p193
    %p196 = scmp.ne.s32.totalorder %s179, %s195
    %p197 = scmp.eq.s32.totalorder %s19, 0
    %p198 = por %p196, %p197
    %p199 = scmp.le.s32.totalorder 1, %s13
    %p200 = scmp.lt.s32.totalorder %s13, 3
    %p201 = pnand %p199, %p200
    %p202 = pneg %p201
    // Predicated region
    $region9: #{tpu_custom_call.1} parent=5 // pred_check
      _
    $region10: #{tpu_custom_call.1} parent=5 // pred_check_branch
      %204 = sbr.rel (%p201) target = $region12
    $region11: #{tpu_custom_call.1} parent=5 // pred_region
      %s205 = ssub.s32 %s13, 1
      // Predicated region
      $region13: #{tpu_custom_call.1} parent=11 // pred_check
        %p206 = pneg %p60
      $region14: #{tpu_custom_call.1} parent=11 // pred_check_branch
        %208 = sbr.rel (%p206) target = $region16
      $region15: #{tpu_custom_call.1} parent=11 // pred_region
        _
      $region16: #{tpu_custom_call.1} parent=11 // pred_fallthru
        _
      // Predicated region
      $region17: #{tpu_custom_call.1} parent=11 // pred_check
        %p209 = pneg %p81
      $region18: #{tpu_custom_call.1} parent=11 // pred_check_branch
        %211 = sbr.rel (%p209) target = $region20
      $region19: #{tpu_custom_call.1} parent=11 // pred_region
        _
      $region20: #{tpu_custom_call.1} parent=11 // pred_fallthru
        _
      // Predicated region
      $region21: #{tpu_custom_call.1} parent=11 // pred_check
        %p212 = pneg %p102
      $region22: #{tpu_custom_call.1} parent=11 // pred_check_branch
        %214 = sbr.rel (%p212) target = $region24
      $region23: #{tpu_custom_call.1} parent=11 // pred_region
        _
      $region24: #{tpu_custom_call.1} parent=11 // pred_fallthru
        _
      // Predicated region
      $region25: #{tpu_custom_call.1} parent=11 // pred_check
        %p215 = pneg %p123
      $region26: #{tpu_custom_call.1} parent=11 // pred_check_branch
        %217 = sbr.rel (%p215) target = $region28
      $region27: #{tpu_custom_call.1} parent=11 // pred_region
        _
      $region28: #{tpu_custom_call.1} parent=11 // pred_fallthru
        _
      // Predicated region
      $region29: #{tpu_custom_call.1} parent=11 // pred_check
        %p218 = pneg %p144
      $region30: #{tpu_custom_call.1} parent=11 // pred_check_branch
        %220 = sbr.rel (%p218) target = $region32
      $region31: #{tpu_custom_call.1} parent=11 // pred_region
        _
      $region32: #{tpu_custom_call.1} parent=11 // pred_fallthru
        _
      // Predicated region
      $region33: #{tpu_custom_call.1} parent=11 // pred_check
        %p221 = pneg %p165
      $region34: #{tpu_custom_call.1} parent=11 // pred_check_branch
        %223 = sbr.rel (%p221) target = $region36
      $region35: #{tpu_custom_call.1} parent=11 // pred_region
        _
      $region36: #{tpu_custom_call.1} parent=11 // pred_fallthru
        _
    $region12: #{tpu_custom_call.1} parent=5 // pred_fallthru
      _
    %p224 = scmp.lt.s32.totalorder %s13, 2
    // Predicated region
    $region37: #{tpu_custom_call.1} parent=5 // pred_check
      %p225 = pneg %p224
    $region38: #{tpu_custom_call.1} parent=5 // pred_check_branch
      %227 = sbr.rel (%p225) target = $region40
    $region39: #{tpu_custom_call.1} parent=5 // pred_region
      // Predicated region
      $region41: #{tpu_custom_call.1} parent=39 // pred_check
        %p228 = pneg %p33
      $region42: #{tpu_custom_call.1} parent=39 // pred_check_branch
        %230 = sbr.rel (%p228) target = $region44
      $region43: #{tpu_custom_call.1} parent=39 // pred_region
        %p231 = scmp.lt.s32.totalorder %s13, 1
        %s232 = scalar_select %p231, %s13, 1
        %s233 = smul.addr %s232, 32
        %s234 = smul.addr %s233, 8
        %s235 = scalar_lea.vmem %s0, %s234
      $region44: #{tpu_custom_call.1} parent=39 // pred_fallthru
        _
    $region40: #{tpu_custom_call.1} parent=5 // pred_fallthru
      _
    %p236 = scmp.le.s32.totalorder 1, %s13
    %p237 = scmp.lt.s32.totalorder %s13, 3
    %p238 = pnand %p236, %p237
    %p239 = pneg %p238
    // Predicated region
    $region45: #{tpu_custom_call.1} parent=5 // pred_check
      _
    $region46: #{tpu_custom_call.1} parent=5 // pred_check_branch
      %241 = sbr.rel (%p238) target = $region48
    $region47: #{tpu_custom_call.1} parent=5 // pred_region
      %s242 = ssub.s32 %s13, 1
      %p243 = scmp.lt.s32.totalorder %s18, 1
      %s244 = scalar_select %p243, %s18, 1
      %s245 = smul.addr %s244, 32
      %s246 = smul.addr %s245, 8
      %s247 = scalar_lea.vmem %s0, %s246
      %p248 = pneg %p39
      %p249 = pneg %p36
      %p250 = pneg %p60
      %p251 = pneg %p57
      %p252 = pneg %p81
      %p253 = pneg %p78
      %p254 = pneg %p102
      %p255 = pneg %p99
      %p256 = pneg %p123
      %p257 = pneg %p120
      %p258 = pneg %p144
      %p259 = pneg %p141
      %p260 = pneg %p165
      %p261 = pneg %p162
      %p262 = pneg %p191
      %p263 = pneg %p188
      %p264 = scmp.lt.s32.totalorder %s18, 1
      %s265 = scalar_select %p264, %s18, 1
      %s266 = smul.addr %s265, 32
      %s267 = smul.addr %s266, 8
      %s268 = scalar_lea.vmem %s7, %s267
      %p269 = scmp.lt.s32.totalorder %s18, 1
      %s270 = scalar_select %p269, %s18, 1
      %s271 = smul.addr %s270, 32
      %s272 = smul.addr %s271, 8
      %s273 = scalar_lea.vmem %s0, %s272
      %p274 = scmp.lt.s32.totalorder %s18, 1
      %s275 = scalar_select %p274, %s18, 1
      %s276 = smul.addr %s275, 32
      %s277 = smul.addr %s276, 8
      %s278 = scalar_lea.vmem %s7, %s277
      %v279 = vld [vmem:[%s273] sm:$0xff]
      %v280 = vld [vmem:[%s273 + $0x8] sm:$0xff]
      %v281 = vld [vmem:[%s273 + $0x10] sm:$0xff]
      %v282 = vld [vmem:[%s273 + $0x18] sm:$0xff]
      %v283 = vld [vmem:[%s273 + $0x20] sm:$0xff]
      %v284 = vld [vmem:[%s273 + $0x28] sm:$0xff]
      %v285 = vld [vmem:[%s273 + $0x30] sm:$0xff]
      %v286 = vld [vmem:[%s273 + $0x38] sm:$0xff]
      %v287 = vld [vmem:[%s273 + $0x40] sm:$0xff]
      %v288 = vld [vmem:[%s273 + $0x48] sm:$0xff]
      %v289 = vld [vmem:[%s273 + $0x50] sm:$0xff]
      %v290 = vld [vmem:[%s273 + $0x58] sm:$0xff]
      %v291 = vld [vmem:[%s273 + $0x60] sm:$0xff]
      %v292 = vld [vmem:[%s273 + $0x68] sm:$0xff]
      %v293 = vld [vmem:[%s273 + $0x70] sm:$0xff]
      %v294 = vld [vmem:[%s273 + $0x78] sm:$0xff]
      %v295 = vld [vmem:[%s273 + $0x80] sm:$0xff]
      %v296 = vld [vmem:[%s273 + $0x88] sm:$0xff]
      %v297 = vld [vmem:[%s273 + $0x90] sm:$0xff]
      %v298 = vld [vmem:[%s273 + $0x98] sm:$0xff]
      %v299 = vld [vmem:[%s273 + $0xa0] sm:$0xff]
      %v300 = vld [vmem:[%s273 + $0xa8] sm:$0xff]
      %v301 = vld [vmem:[%s273 + $0xb0] sm:$0xff]
      %v302 = vld [vmem:[%s273 + $0xb8] sm:$0xff]
      %v303 = vld [vmem:[%s273 + $0xc0] sm:$0xff]
      %v304 = vld [vmem:[%s273 + $0xc8] sm:$0xff]
      %v305 = vld [vmem:[%s273 + $0xd0] sm:$0xff]
      %v306 = vld [vmem:[%s273 + $0xd8] sm:$0xff]
      %v307 = vld [vmem:[%s273 + $0xe0] sm:$0xff]
      %v308 = vld [vmem:[%s273 + $0xe8] sm:$0xff]
      %v309 = vld [vmem:[%s273 + $0xf0] sm:$0xff]
      %v310 = vld [vmem:[%s273 + $0xf8] sm:$0xff]
      %v311 = vld [vmem:[%s1] sm:$0xf]
      %v312 = vld [vmem:[%s2] sm:$0x1]
      %v314 = vlaneseq
      %v315 = vshrl.u32 %v314, 7
      %v316 = vsub.s32 0, %v315
      %v317 = vrot.slane %v312, %v316
      %vm319 = vcmask 31744
      %v321 = vsel %vm319, %v279, 0
      %v324 = vsel %vm319, %v280, 0
      %v327 = vsel %vm319, %v281, 0
      %v330 = vsel %vm319, %v282, 0
      %v333 = vsel %vm319, %v283, 0
      %v336 = vsel %vm319, %v284, 0
      %v339 = vsel %vm319, %v285, 0
      %v342 = vsel %vm319, %v286, 0
      %v345 = vsel %vm319, %v287, 0
      %v348 = vsel %vm319, %v288, 0
      %v351 = vsel %vm319, %v289, 0
      %v354 = vsel %vm319, %v290, 0
      %v357 = vsel %vm319, %v291, 0
      %v360 = vsel %vm319, %v292, 0
      %v363 = vsel %vm319, %v293, 0
      %v366 = vsel %vm319, %v294, 0
      %v369 = vsel %vm319, %v295, 0
      %v372 = vsel %vm319, %v296, 0
      %v375 = vsel %vm319, %v297, 0
      %v378 = vsel %vm319, %v298, 0
      %v381 = vsel %vm319, %v299, 0
      %v384 = vsel %vm319, %v300, 0
      %v387 = vsel %vm319, %v301, 0
      %v390 = vsel %vm319, %v302, 0
      %v393 = vsel %vm319, %v303, 0
      %v396 = vsel %vm319, %v304, 0
      %v399 = vsel %vm319, %v305, 0
      %v402 = vsel %vm319, %v306, 0
      %v405 = vsel %vm319, %v307, 0
      %v408 = vsel %vm319, %v308, 0
      %v411 = vsel %vm319, %v309, 0
      %v414 = vsel %vm319, %v310, 0
      %vm416 = vcmask 1043456
      %v418 = vsel %vm416, %v311, 0
      %420 = vmatprep.subr.mxu0 0.0
      %421 = vmatpush1.msra.mxu0 %v418
      %422 = vmatprep.subr.mxu0 0.0
      %423 = vmatpush1.msra.mxu0 0.0
      %424 = vmatprep.subr.mxu0 0.0
      %425 = vmatpush1.msra.mxu0 0.0
      %426 = vmatprep.subr.mxu0 0.0
      %427 = vmatpush1.msra.mxu0 0.0
      %428 = vmatprep.subr.mxu0 0.0
      %429 = vmatpush1.msra.mxu0 0.0
      %430 = vmatprep.subr.mxu0 0.0
      %431 = vmatpush1.msra.mxu0 0.0
      %432 = vmatprep.subr.mxu0 0.0
      %433 = vmatpush1.msra.mxu0 0.0
      %434 = vmatprep.subr.mxu0 0.0
      %435 = vmatpush1.msra.mxu0 0.0
      %436 = vmatprep.subr.mxu0 0.0
      %437 = vmatpush1.msra.mxu0 0.0
      %438 = vmatprep.subr.mxu0 0.0
      %439 = vmatpush1.msra.mxu0 0.0
      %440 = vmatprep.subr.mxu0 0.0
      %441 = vmatpush1.msra.mxu0 0.0
      %442 = vmatprep.subr.mxu0 0.0
      %443 = vmatpush1.msra.mxu0 0.0
      %444 = vmatprep.subr.mxu0 0.0
      %445 = vmatpush1.msra.mxu0 0.0
      %446 = vmatprep.subr.mxu0 0.0
      %447 = vmatpush1.msra.mxu0 0.0
      %448 = vmatprep.subr.mxu0 0.0
      %449 = vmatpush1.msra.mxu0 0.0
      %450 = vmatprep.subr.mxu0 0.0
      %451 = vmatpush1.msra.mxu0 0.0
      %452 = vmatprep.subr.mxu0 0.0
      %453 = vmatpush1.msra.mxu0 0.0
      %454 = vmatprep.subr.mxu0 0.0
      %455 = vmatpush1.msra.mxu0 0.0
      %456 = vmatprep.subr.mxu0 0.0
      %457 = vmatpush1.msra.mxu0 0.0
      %458 = vmatprep.subr.mxu0 0.0
      %459 = vmatpush1.msra.mxu0 0.0
      %460 = vmatprep.subr.mxu0 0.0
      %461 = vmatpush1.msra.mxu0 0.0
      %462 = vmatprep.subr.mxu0 0.0
      %463 = vmatpush1.msra.mxu0 0.0
      %464 = vmatprep.subr.mxu0 0.0
      %465 = vmatpush1.msra.mxu0 0.0
      %466 = vmatprep.subr.mxu0 0.0
      %467 = vmatpush1.msra.mxu0 0.0
      %468 = vmatprep.subr.mxu0 0.0
      %469 = vmatpush1.msra.mxu0 0.0
      %470 = vmatprep.subr.mxu0 0.0
      %471 = vmatpush1.msra.mxu0 0.0
      %472 = vmatprep.subr.mxu0 0.0
      %473 = vmatpush1.msra.mxu0 0.0
      %474 = vmatprep.subr.mxu0 0.0
      %475 = vmatpush1.msra.mxu0 0.0
      %476 = vmatprep.subr.mxu0 0.0
      %477 = vmatpush1.msra.mxu0 0.0
      %478 = vmatprep.subr.mxu0 0.0
      %479 = vmatpush1.msra.mxu0 0.0
      %480 = vmatprep.subr.mxu0 0.0
      %481 = vmatpush1.msra.mxu0 0.0
      %482 = vmatprep.subr.mxu0 0.0
      %483 = vmatpush1.msra.mxu0 0.0
      %484 = vmatprep.mubr.f32.mxu0 0.0
      %485 = vmatmul.mubr.f32.gmra.mrb[0].mxu0 %v321
      %v486 = vpop.f32.mrb[0].mxu0
      %v487 = vadd.f32 %v317, %v486
      %v488 = vpop.f32.mrb[0].mxu0
      %489 = vmatprep.mubr.f32.mxu0 0.0
      %490 = vmatmul.mubr.f32.gmra.mrb[0].mxu0 %v324
      %v491 = vpop.f32.mrb[0].mxu0
      %v492 = vadd.f32 %v317, %v491
      %v493 = vpop.f32.mrb[0].mxu0
      %494 = vmatprep.mubr.f32.mxu0 0.0
      %495 = vmatmul.mubr.f32.gmra.mrb[0].mxu0 %v327
      %v496 = vpop.f32.mrb[0].mxu0
      %v497 = vadd.f32 %v317, %v496
      %v498 = vpop.f32.mrb[0].mxu0
      %499 = vmatprep.mubr.f32.mxu0 0.0
      %500 = vmatmul.mubr.f32.gmra.mrb[0].mxu0 %v330
      %v501 = vpop.f32.mrb[0].mxu0
      %v502 = vadd.f32 %v317, %v501
      %v503 = vpop.f32.mrb[0].mxu0
      %504 = vmatprep.mubr.f32.mxu0 0.0
      %505 = vmatmul.mubr.f32.gmra.mrb[0].mxu0 %v333
      %v506 = vpop.f32.mrb[0].mxu0
      %v507 = vadd.f32 %v317, %v506
      %v508 = vpop.f32.mrb[0].mxu0
      %509 = vmatprep.mubr.f32.mxu0 0.0
      %510 = vmatmul.mubr.f32.gmra.mrb[0].mxu0 %v336
      %v511 = vpop.f32.mrb[0].mxu0
      %v512 = vadd.f32 %v317, %v511
      %v513 = vpop.f32.mrb[0].mxu0
      %514 = vmatprep.mubr.f32.mxu0 0.0
      %515 = vmatmul.mubr.f32.gmra.mrb[0].mxu0 %v339
      %v516 = vpop.f32.mrb[0].mxu0
      %v517 = vadd.f32 %v317, %v516
      %v518 = vpop.f32.mrb[0].mxu0
      %519 = vmatprep.mubr.f32.mxu0 0.0
      %520 = vmatmul.mubr.f32.gmra.mrb[0].mxu0 %v342
      %v521 = vpop.f32.mrb[0].mxu0
      %v522 = vadd.f32 %v317, %v521
      %v523 = vpop.f32.mrb[0].mxu0
      %524 = vmatprep.mubr.f32.mxu0 0.0
      %525 = vmatmul.mubr.f32.gmra.mrb[0].mxu0 %v345
      %v526 = vpop.f32.mrb[0].mxu0
      %v527 = vadd.f32 %v317, %v526
      %v528 = vpop.f32.mrb[0].mxu0
      %529 = vmatprep.mubr.f32.mxu0 0.0
      %530 = vmatmul.mubr.f32.gmra.mrb[0].mxu0 %v348
      %v531 = vpop.f32.mrb[0].mxu0
      %v532 = vadd.f32 %v317, %v531
      %v533 = vpop.f32.mrb[0].mxu0
      %534 = vmatprep.mubr.f32.mxu0 0.0
      %535 = vmatmul.mubr.f32.gmra.mrb[0].mxu0 %v351
      %v536 = vpop.f32.mrb[0].mxu0
      %v537 = vadd.f32 %v317, %v536
      %v538 = vpop.f32.mrb[0].mxu0
      %539 = vmatprep.mubr.f32.mxu0 0.0
      %540 = vmatmul.mubr.f32.gmra.mrb[0].mxu0 %v354
      %v541 = vpop.f32.mrb[0].mxu0
      %v542 = vadd.f32 %v317, %v541
      %v543 = vpop.f32.mrb[0].mxu0
      %544 = vmatprep.mubr.f32.mxu0 0.0
      %545 = vmatmul.mubr.f32.gmra.mrb[0].mxu0 %v357
      %v546 = vpop.f32.mrb[0].mxu0
      %v547 = vadd.f32 %v317, %v546
      %v548 = vpop.f32.mrb[0].mxu0
      %549 = vmatprep.mubr.f32.mxu0 0.0
      %550 = vmatmul.mubr.f32.gmra.mrb[0].mxu0 %v360
      %v551 = vpop.f32.mrb[0].mxu0
      %v552 = vadd.f32 %v317, %v551
      %v553 = vpop.f32.mrb[0].mxu0
      %554 = vmatprep.mubr.f32.mxu0 0.0
      %555 = vmatmul.mubr.f32.gmra.mrb[0].mxu0 %v363
      %v556 = vpop.f32.mrb[0].mxu0
      %v557 = vadd.f32 %v317, %v556
      %v558 = vpop.f32.mrb[0].mxu0
      %559 = vmatprep.mubr.f32.mxu0 0.0
      %560 = vmatmul.mubr.f32.gmra.mrb[0].mxu0 %v366
      %v561 = vpop.f32.mrb[0].mxu0
      %v562 = vadd.f32 %v317, %v561
      %v563 = vpop.f32.mrb[0].mxu0
      %564 = vmatprep.mubr.f32.mxu0 0.0
      %565 = vmatmul.mubr.f32.gmra.mrb[0].mxu0 %v369
      %v566 = vpop.f32.mrb[0].mxu0
      %v567 = vadd.f32 %v317, %v566
      %v568 = vpop.f32.mrb[0].mxu0
      %569 = vmatprep.mubr.f32.mxu0 0.0
      %570 = vmatmul.mubr.f32.gmra.mrb[0].mxu0 %v372
      %v571 = vpop.f32.mrb[0].mxu0
      %v572 = vadd.f32 %v317, %v571
      %v573 = vpop.f32.mrb[0].mxu0
      %574 = vmatprep.mubr.f32.mxu0 0.0
      %575 = vmatmul.mubr.f32.gmra.mrb[0].mxu0 %v375
      %v576 = vpop.f32.mrb[0].mxu0
      %v577 = vadd.f32 %v317, %v576
      %v578 = vpop.f32.mrb[0].mxu0
      %579 = vmatprep.mubr.f32.mxu0 0.0
      %580 = vmatmul.mubr.f32.gmra.mrb[0].mxu0 %v378
      %v581 = vpop.f32.mrb[0].mxu0
      %v582 = vadd.f32 %v317, %v581
      %v583 = vpop.f32.mrb[0].mxu0
      %584 = vmatprep.mubr.f32.mxu0 0.0
      %585 = vmatmul.mubr.f32.gmra.mrb[0].mxu0 %v381
      %v586 = vpop.f32.mrb[0].mxu0
      %v587 = vadd.f32 %v317, %v586
      %v588 = vpop.f32.mrb[0].mxu0
      %589 = vmatprep.mubr.f32.mxu0 0.0
      %590 = vmatmul.mubr.f32.gmra.mrb[0].mxu0 %v384
      %v591 = vpop.f32.mrb[0].mxu0
      %v592 = vadd.f32 %v317, %v591
      %v593 = vpop.f32.mrb[0].mxu0
      %594 = vmatprep.mubr.f32.mxu0 0.0
      %595 = vmatmul.mubr.f32.gmra.mrb[0].mxu0 %v387
      %v596 = vpop.f32.mrb[0].mxu0
      %v597 = vadd.f32 %v317, %v596
      %v598 = vpop.f32.mrb[0].mxu0
      %599 = vmatprep.mubr.f32.mxu0 0.0
      %600 = vmatmul.mubr.f32.gmra.mrb[0].mxu0 %v390
      %v601 = vpop.f32.mrb[0].mxu0
      %v602 = vadd.f32 %v317, %v601
      %v603 = vpop.f32.mrb[0].mxu0
      %604 = vmatprep.mubr.f32.mxu0 0.0
      %605 = vmatmul.mubr.f32.gmra.mrb[0].mxu0 %v393
      %v606 = vpop.f32.mrb[0].mxu0
      %v607 = vadd.f32 %v317, %v606
      %v608 = vpop.f32.mrb[0].mxu0
      %609 = vmatprep.mubr.f32.mxu0 0.0
      %610 = vmatmul.mubr.f32.gmra.mrb[0].mxu0 %v396
      %v611 = vpop.f32.mrb[0].mxu0
      %v612 = vadd.f32 %v317, %v611
      %v613 = vpop.f32.mrb[0].mxu0
      %614 = vmatprep.mubr.f32.mxu0 0.0
      %615 = vmatmul.mubr.f32.gmra.mrb[0].mxu0 %v399
      %v616 = vpop.f32.mrb[0].mxu0
      %v617 = vadd.f32 %v317, %v616
      %v618 = vpop.f32.mrb[0].mxu0
      %619 = vmatprep.mubr.f32.mxu0 0.0
      %620 = vmatmul.mubr.f32.gmra.mrb[0].mxu0 %v402
      %v621 = vpop.f32.mrb[0].mxu0
      %v622 = vadd.f32 %v317, %v621
      %v623 = vpop.f32.mrb[0].mxu0
      %624 = vmatprep.mubr.f32.mxu0 0.0
      %625 = vmatmul.mubr.f32.gmra.mrb[0].mxu0 %v405
      %v626 = vpop.f32.mrb[0].mxu0
      %v627 = vadd.f32 %v317, %v626
      %v628 = vpop.f32.mrb[0].mxu0
      %629 = vmatprep.mubr.f32.mxu0 0.0
      %630 = vmatmul.mubr.f32.gmra.mrb[0].mxu0 %v408
      %v631 = vpop.f32.mrb[0].mxu0
      %v632 = vadd.f32 %v317, %v631
      %v633 = vpop.f32.mrb[0].mxu0
      %634 = vmatprep.mubr.f32.mxu0 0.0
      %635 = vmatmul.mubr.f32.gmra.mrb[0].mxu0 %v411
      %v636 = vpop.f32.mrb[0].mxu0
      %v637 = vadd.f32 %v317, %v636
      %v638 = vpop.f32.mrb[0].mxu0
      %639 = vmatprep.mubr.f32.mxu0 0.0
      %640 = vmatmul.mubr.f32.gmra.mrb[0].mxu0 %v414
      %v641 = vpop.f32.mrb[0].mxu0
      %v642 = vadd.f32 %v317, %v641
      %v643 = vpop.f32.mrb[0].mxu0
      %644 = vdwg.mxu0
      %v645 = vmax.f32 %v487, 0.0
      %v646 = vmax.f32 %v492, 0.0
      %v647 = vmax.f32 %v497, 0.0
      %v648 = vmax.f32 %v502, 0.0
      %v649 = vmax.f32 %v507, 0.0
      %v650 = vmax.f32 %v512, 0.0
      %v651 = vmax.f32 %v517, 0.0
      %v652 = vmax.f32 %v522, 0.0
      %v653 = vmax.f32 %v527, 0.0
      %v654 = vmax.f32 %v532, 0.0
      %v655 = vmax.f32 %v537, 0.0
      %v656 = vmax.f32 %v542, 0.0
      %v657 = vmax.f32 %v547, 0.0
      %v658 = vmax.f32 %v552, 0.0
      %v659 = vmax.f32 %v557, 0.0
      %v660 = vmax.f32 %v562, 0.0
      %v661 = vmax.f32 %v567, 0.0
      %v662 = vmax.f32 %v572, 0.0
      %v663 = vmax.f32 %v577, 0.0
      %v664 = vmax.f32 %v582, 0.0
      %v665 = vmax.f32 %v587, 0.0
      %v666 = vmax.f32 %v592, 0.0
      %v667 = vmax.f32 %v597, 0.0
      %v668 = vmax.f32 %v602, 0.0
      %v669 = vmax.f32 %v607, 0.0
      %v670 = vmax.f32 %v612, 0.0
      %v671 = vmax.f32 %v617, 0.0
      %v672 = vmax.f32 %v622, 0.0
      %v673 = vmax.f32 %v627, 0.0
      %v674 = vmax.f32 %v632, 0.0
      %v675 = vmax.f32 %v637, 0.0
      %v676 = vmax.f32 %v642, 0.0
      %677 = vst.msk [vmem:[#allocation2] sm:$0xff] %vm319, 0.0
      %678 = vst.msk [vmem:[#allocation2 + $0x8] sm:$0xff] %vm319, 0.0
      %vm679 = vcmask 25600
      %680 = vst.msk [vmem:[#allocation2 + $0x10] sm:$0x3] %vm679, 0.0
      %s681 = scalar_lea.vmem [#allocation2], 408
      %682 = vst.msk [vmem:[%s681] sm:$0xff] %vm319, 0.0
      %683 = vst.msk [vmem:[%s681 + $0x8] sm:$0xff] %vm319, 0.0
      %684 = vst.msk [vmem:[%s681 + $0x10] sm:$0x3] %vm679, 0.0
      %vm685 = vcmask 24576
      %686 = vst.msk [vmem:[#allocation2] sm:$0x1] %vm685, 0.0
      %687 = vst.msk [vmem:[#allocation2 + $0x18] sm:$0x1] %vm685, 0.0
      %688 = vst.msk [vmem:[#allocation2 + $0x30] sm:$0x1] %vm685, 0.0
      %689 = vst.msk [vmem:[#allocation2 + $0x48] sm:$0x1] %vm685, 0.0
      %690 = vst.msk [vmem:[#allocation2 + $0x60] sm:$0x1] %vm685, 0.0
      %691 = vst.msk [vmem:[#allocation2 + $0x78] sm:$0x1] %vm685, 0.0
      %692 = vst.msk [vmem:[#allocation2 + $0x90] sm:$0x1] %vm685, 0.0
      %693 = vst.msk [vmem:[#allocation2 + $0xa8] sm:$0x1] %vm685, 0.0
      %694 = vst.msk [vmem:[#allocation2 + $0xc0] sm:$0x1] %vm685, 0.0
      %695 = vst.msk [vmem:[#allocation2 + $0xd8] sm:$0x1] %vm685, 0.0
      %696 = vst.msk [vmem:[#allocation2 + $0xf0] sm:$0x1] %vm685, 0.0
      %697 = vst.msk [vmem:[#allocation2 + $0x108] sm:$0x1] %vm685, 0.0
      %698 = vst.msk [vmem:[#allocation2 + $0x120] sm:$0x1] %vm685, 0.0
      %699 = vst.msk [vmem:[#allocation2 + $0x138] sm:$0x1] %vm685, 0.0
      %700 = vst.msk [vmem:[#allocation2 + $0x150] sm:$0x1] %vm685, 0.0
      %701 = vst.msk [vmem:[#allocation2 + $0x168] sm:$0x1] %vm685, 0.0
      %702 = vst.msk [vmem:[#allocation2 + $0x180] sm:$0x1] %vm685, 0.0
      %703 = vst.msk [vmem:[#allocation2 + $0x198] sm:$0x1] %vm685, 0.0
      %704 = vst.msk [vmem:[#allocation2 + $0x11] sm:$0x1] %vm685, 0.0
      %705 = vst.msk [vmem:[#allocation2 + $0x29] sm:$0x1] %vm685, 0.0
      %706 = vst.msk [vmem:[#allocation2 + $0x41] sm:$0x1] %vm685, 0.0
      %707 = vst.msk [vmem:[#allocation2 + $0x59] sm:$0x1] %vm685, 0.0
      %708 = vst.msk [vmem:[#allocation2 + $0x71] sm:$0x1] %vm685, 0.0
      %709 = vst.msk [vmem:[#allocation2 + $0x89] sm:$0x1] %vm685, 0.0
      %710 = vst.msk [vmem:[#allocation2 + $0xa1] sm:$0x1] %vm685, 0.0
      %711 = vst.msk [vmem:[#allocation2 + $0xb9] sm:$0x1] %vm685, 0.0
      %712 = vst.msk [vmem:[#allocation2 + $0xd1] sm:$0x1] %vm685, 0.0
      %713 = vst.msk [vmem:[#allocation2 + $0xe9] sm:$0x1] %vm685, 0.0
      %714 = vst.msk [vmem:[#allocation2 + $0x101] sm:$0x1] %vm685, 0.0
      %715 = vst.msk [vmem:[#allocation2 + $0x119] sm:$0x1] %vm685, 0.0
      %716 = vst.msk [vmem:[#allocation2 + $0x131] sm:$0x1] %vm685, 0.0
      %717 = vst.msk [vmem:[#allocation2 + $0x149] sm:$0x1] %vm685, 0.0
      %718 = vst.msk [vmem:[#allocation2 + $0x161] sm:$0x1] %vm685, 0.0
      %719 = vst.msk [vmem:[#allocation2 + $0x179] sm:$0x1] %vm685, 0.0
      %720 = vst.msk [vmem:[#allocation2 + $0x191] sm:$0x1] %vm685, 0.0
      %721 = vst.msk [vmem:[#allocation2 + $0x1a9] sm:$0x1] %vm685, 0.0
      %s722 = scalar_lea.vmem [#allocation2], 24
      %723 = vst.msk [vmem:[%s722 + $0x1] sm:$0xff] %vm319, %v645
      %724 = vst.msk [vmem:[%s722 + $0x9] sm:$0xff] %vm319, %v646
      %725 = vst.msk [vmem:[%s722 + $0x19] sm:$0xff] %vm319, %v647
      %726 = vst.msk [vmem:[%s722 + $0x21] sm:$0xff] %vm319, %v648
      %727 = vst.msk [vmem:[%s722 + $0x31] sm:$0xff] %vm319, %v649
      %728 = vst.msk [vmem:[%s722 + $0x39] sm:$0xff] %vm319, %v650
      %729 = vst.msk [vmem:[%s722 + $0x49] sm:$0xff] %vm319, %v651
      %730 = vst.msk [vmem:[%s722 + $0x51] sm:$0xff] %vm319, %v652
      %731 = vst.msk [vmem:[%s722 + $0x61] sm:$0xff] %vm319, %v653
      %732 = vst.msk [vmem:[%s722 + $0x69] sm:$0xff] %vm319, %v654
      %733 = vst.msk [vmem:[%s722 + $0x79] sm:$0xff] %vm319, %v655
      %734 = vst.msk [vmem:[%s722 + $0x81] sm:$0xff] %vm319, %v656
      %735 = vst.msk [vmem:[%s722 + $0x91] sm:$0xff] %vm319, %v657
      %736 = vst.msk [vmem:[%s722 + $0x99] sm:$0xff] %vm319, %v658
      %737 = vst.msk [vmem:[%s722 + $0xa9] sm:$0xff] %vm319, %v659
      %738 = vst.msk [vmem:[%s722 + $0xb1] sm:$0xff] %vm319, %v660
      %739 = vst.msk [vmem:[%s722 + $0xc1] sm:$0xff] %vm319, %v661
      %740 = vst.msk [vmem:[%s722 + $0xc9] sm:$0xff] %vm319, %v662
      %741 = vst.msk [vmem:[%s722 + $0xd9] sm:$0xff] %vm319, %v663
      %742 = vst.msk [vmem:[%s722 + $0xe1] sm:$0xff] %vm319, %v664
      %743 = vst.msk [vmem:[%s722 + $0xf1] sm:$0xff] %vm319, %v665
      %744 = vst.msk [vmem:[%s722 + $0xf9] sm:$0xff] %vm319, %v666
      %745 = vst.msk [vmem:[%s722 + $0x109] sm:$0xff] %vm319, %v667
      %746 = vst.msk [vmem:[%s722 + $0x111] sm:$0xff] %vm319, %v668
      %747 = vst.msk [vmem:[%s722 + $0x121] sm:$0xff] %vm319, %v669
      %748 = vst.msk [vmem:[%s722 + $0x129] sm:$0xff] %vm319, %v670
      %749 = vst.msk [vmem:[%s722 + $0x139] sm:$0xff] %vm319, %v671
      %750 = vst.msk [vmem:[%s722 + $0x141] sm:$0xff] %vm319, %v672
      %751 = vst.msk [vmem:[%s722 + $0x151] sm:$0xff] %vm319, %v673
      %752 = vst.msk [vmem:[%s722 + $0x159] sm:$0xff] %vm319, %v674
      %753 = vst.msk [vmem:[%s722 + $0x169] sm:$0xff] %vm319, %v675
      %754 = vst.msk [vmem:[%s722 + $0x171] sm:$0xff] %vm319, %v676
      %v755 = vld [vmem:[#allocation2] sm:$0xff]
      %v756 = vld [vmem:[#allocation2 + $0x8] sm:$0xff]
      %v757 = vld [vmem:[#allocation2 + $0x18] sm:$0xff]
      %v758 = vld [vmem:[#allocation2 + $0x20] sm:$0xff]
      %v759 = vld [vmem:[#allocation2 + $0x30] sm:$0xff]
      %v760 = vld [vmem:[#allocation2 + $0x38] sm:$0xff]
      %v761 = vld [vmem:[#allocation2 + $0x48] sm:$0xff]
      %v762 = vld [vmem:[#allocation2 + $0x50] sm:$0xff]
      %v763 = vld [vmem:[#allocation2 + $0x60] sm:$0xff]
      %v764 = vld [vmem:[#allocation2 + $0x68] sm:$0xff]
      %v765 = vld [vmem:[#allocation2 + $0x78] sm:$0xff]
      %v766 = vld [vmem:[#allocation2 + $0x80] sm:$0xff]
      %v767 = vld [vmem:[#allocation2 + $0x90] sm:$0xff]
      %v768 = vld [vmem:[#allocation2 + $0x98] sm:$0xff]
      %v769 = vld [vmem:[#allocation2 + $0xa8] sm:$0xff]
      %v770 = vld [vmem:[#allocation2 + $0xb0] sm:$0xff]
      %v771 = vld [vmem:[#allocation2 + $0xc0] sm:$0xff]
      %v772 = vld [vmem:[#allocation2 + $0xc8] sm:$0xff]
      %v773 = vld [vmem:[#allocation2 + $0xd8] sm:$0xff]
      %v774 = vld [vmem:[#allocation2 + $0xe0] sm:$0xff]
      %v775 = vld [vmem:[#allocation2 + $0xf0] sm:$0xff]
      %v776 = vld [vmem:[#allocation2 + $0xf8] sm:$0xff]
      %v777 = vld [vmem:[#allocation2 + $0x108] sm:$0xff]
      %v778 = vld [vmem:[#allocation2 + $0x110] sm:$0xff]
      %v779 = vld [vmem:[#allocation2 + $0x120] sm:$0xff]
      %v780 = vld [vmem:[#allocation2 + $0x128] sm:$0xff]
      %v781 = vld [vmem:[#allocation2 + $0x138] sm:$0xff]
      %v782 = vld [vmem:[#allocation2 + $0x140] sm:$0xff]
      %v783 = vld [vmem:[#allocation2 + $0x150] sm:$0xff]
      %v784 = vld [vmem:[#allocation2 + $0x158] sm:$0xff]
      %v785 = vld [vmem:[#allocation2 + $0x168] sm:$0xff]
      %v786 = vld [vmem:[#allocation2 + $0x170] sm:$0xff]
      %v787 = vld [vmem:[%s3] sm:$0xf]
      %v788 = vld [vmem:[#allocation2 + $0x1] sm:$0xff]
      %v789 = vld [vmem:[#allocation2 + $0x9] sm:$0xff]
      %v790 = vld [vmem:[#allocation2 + $0x19] sm:$0xff]
      %v791 = vld [vmem:[#allocation2 + $0x21] sm:$0xff]
      %v792 = vld [vmem:[#allocation2 + $0x31] sm:$0xff]
      %v793 = vld [vmem:[#allocation2 + $0x39] sm:$0xff]
      %v794 = vld [vmem:[#allocation2 + $0x49] sm:$0xff]
      %v795 = vld [vmem:[#allocation2 + $0x51] sm:$0xff]
      %v796 = vld [vmem:[#allocation2 + $0x61] sm:$0xff]
      %v797 = vld [vmem:[#allocation2 + $0x69] sm:$0xff]
      %v798 = vld [vmem:[#allocation2 + $0x79] sm:$0xff]
      %v799 = vld [vmem:[#allocation2 + $0x81] sm:$0xff]
      %v800 = vld [vmem:[#allocation2 + $0x91] sm:$0xff]
      %v801 = vld [vmem:[#allocation2 + $0x99] sm:$0xff]
      %v802 = vld [vmem:[#allocation2 + $0xa9] sm:$0xff]
      %v803 = vld [vmem:[#allocation2 + $0xb1] sm:$0xff]
      %v804 = vld [vmem:[#allocation2 + $0xc1] sm:$0xff]
      %v805 = vld [vmem:[#allocation2 + $0xc9] sm:$0xff]
      %v806 = vld [vmem:[#allocation2 + $0xd9] sm:$0xff]
      %v807 = vld [vmem:[#allocation2 + $0xe1] sm:$0xff]
      %v808 = vld [vmem:[#allocation2 + $0xf1] sm:$0xff]
      %v809 = vld [vmem:[#allocation2 + $0xf9] sm:$0xff]
      %v810 = vld [vmem:[#allocation2 + $0x109] sm:$0xff]
      %v811 = vld [vmem:[#allocation2 + $0x111] sm:$0xff]
      %v812 = vld [vmem:[#allocation2 + $0x121] sm:$0xff]
      %v813 = vld [vmem:[#allocation2 + $0x129] sm:$0xff]
      %v814 = vld [vmem:[#allocation2 + $0x139] sm:$0xff]
      %v815 = vld [vmem:[#allocation2 + $0x141] sm:$0xff]
      %v816 = vld [vmem:[#allocation2 + $0x151] sm:$0xff]
      %v817 = vld [vmem:[#allocation2 + $0x159] sm:$0xff]
      %v818 = vld [vmem:[#allocation2 + $0x169] sm:$0xff]
      %v819 = vld [vmem:[#allocation2 + $0x171] sm:$0xff]
      %s820 = scalar_lea.vmem %s3, 4
      %v821 = vld [vmem:[%s820] sm:$0xf]
      %v823 = vsel %vm319, %v788, 0
      %v826 = vsel %vm319, %v789, 0
      %v829 = vsel %vm319, %v790, 0
      %v832 = vsel %vm319, %v791, 0
      %v835 = vsel %vm319, %v792, 0
      %v838 = vsel %vm319, %v793, 0
      %v841 = vsel %vm319, %v794, 0
      %v844 = vsel %vm319, %v795, 0
      %v847 = vsel %vm319, %v796, 0
      %v850 = vsel %vm319, %v797, 0
      %v853 = vsel %vm319, %v798, 0
      %v856 = vsel %vm319, %v799, 0
      %v859 = vsel %vm319, %v800, 0
      %v862 = vsel %vm319, %v801, 0
      %v865 = vsel %vm319, %v802, 0
      %v868 = vsel %vm319, %v803, 0
      %v871 = vsel %vm319, %v804, 0
      %v874 = vsel %vm319, %v805, 0
      %v877 = vsel %vm319, %v806, 0
      %v880 = vsel %vm319, %v807, 0
      %v883 = vsel %vm319, %v808, 0
      %v886 = vsel %vm319, %v809, 0
      %v889 = vsel %vm319, %v810, 0
      %v892 = vsel %vm319, %v811, 0
      %v895 = vsel %vm319, %v812, 0
      %v898 = vsel %vm319, %v813, 0
      %v901 = vsel %vm319, %v814, 0
      %v904 = vsel %vm319, %v815, 0
      %v907 = vsel %vm319, %v816, 0
      %v910 = vsel %vm319, %v817, 0
      %v913 = vsel %vm319, %v818, 0
      %v916 = vsel %vm319, %v819, 0
      %v919 = vsel %vm416, %v821, 0
      %921 = vmatprep.subr.mxu0 0.0
      %922 = vmatpush1.msra.mxu0 %v919
      %923 = vmatprep.subr.mxu0 0.0
      %924 = vmatpush1.msra.mxu0 0.0
      %925 = vmatprep.subr.mxu0 0.0
      %926 = vmatpush1.msra.mxu0 0.0
      %927 = vmatprep.subr.mxu0 0.0
      %928 = vmatpush1.msra.mxu0 0.0
      %929 = vmatprep.subr.mxu0 0.0
      %930 = vmatpush1.msra.mxu0 0.0
      %931 = vmatprep.subr.mxu0 0.0
      %932 = vmatpush1.msra.mxu0 0.0
      %933 = vmatprep.subr.mxu0 0.0
      %934 = vmatpush1.msra.mxu0 0.0
      %935 = vmatprep.subr.mxu0 0.0
      %936 = vmatpush1.msra.mxu0 0.0
      %937 = vmatprep.subr.mxu0 0.0
      %938 = vmatpush1.msra.mxu0 0.0
      %939 = vmatprep.subr.mxu0 0.0
      %940 = vmatpush1.msra.mxu0 0.0
      %941 = vmatprep.subr.mxu0 0.0
      %942 = vmatpush1.msra.mxu0 0.0
      %943 = vmatprep.subr.mxu0 0.0
      %944 = vmatpush1.msra.mxu0 0.0
      %945 = vmatprep.subr.mxu0 0.0
      %946 = vmatpush1.msra.mxu0 0.0
      %947 = vmatprep.subr.mxu0 0.0
      %948 = vmatpush1.msra.mxu0 0.0
      %949 = vmatprep.subr.mxu0 0.0
      %950 = vmatpush1.msra.mxu0 0.0
      %951 = vmatprep.subr.mxu0 0.0
      %952 = vmatpush1.msra.mxu0 0.0
      %953 = vmatprep.subr.mxu0 0.0
      %954 = vmatpush1.msra.mxu0 0.0
      %955 = vmatprep.subr.mxu0 0.0
      %956 = vmatpush1.msra.mxu0 0.0
      %957 = vmatprep.subr.mxu0 0.0
      %958 = vmatpush1.msra.mxu0 0.0
      %959 = vmatprep.subr.mxu0 0.0
      %960 = vmatpush1.msra.mxu0 0.0
      %961 = vmatprep.subr.mxu0 0.0
      %962 = vmatpush1.msra.mxu0 0.0
      %963 = vmatprep.subr.mxu0 0.0
      %964 = vmatpush1.msra.mxu0 0.0
      %965 = vmatprep.subr.mxu0 0.0
      %966 = vmatpush1.msra.mxu0 0.0
      %967 = vmatprep.subr.mxu0 0.0
      %968 = vmatpush1.msra.mxu0 0.0
      %969 = vmatprep.subr.mxu0 0.0
      %970 = vmatpush1.msra.mxu0 0.0
      %971 = vmatprep.subr.mxu0 0.0
      %972 = vmatpush1.msra.mxu0 0.0
      %973 = vmatprep.subr.mxu0 0.0
      %974 = vmatpush1.msra.mxu0 0.0
      %975 = vmatprep.subr.mxu0 0.0
      %976 = vmatpush1.msra.mxu0 0.0
      %977 = vmatprep.subr.mxu0 0.0
      %978 = vmatpush1.msra.mxu0 0.0
      %979 = vmatprep.subr.mxu0 0.0
      %980 = vmatpush1.msra.mxu0 0.0
      %981 = vmatprep.subr.mxu0 0.0
      %982 = vmatpush1.msra.mxu0 0.0
      %983 = vmatprep.subr.mxu0 0.0
      %984 = vmatpush1.msra.mxu0 0.0
      %985 = vmatprep.mubr.f32.mxu0 0.0
      %986 = vmatmul.mubr.f32.gmra.mrb[0].mxu0 %v823
      %v987 = vpop.f32.mrb[0].mxu0
      %v988 = vadd.f32 0.0, %v987
      %v989 = vpop.f32.mrb[0].mxu0
      %990 = vmatprep.mubr.f32.mxu0 0.0
      %991 = vmatmul.mubr.f32.gmra.mrb[0].mxu0 %v826
      %v992 = vpop.f32.mrb[0].mxu0
      %v993 = vadd.f32 0.0, %v992
      %v994 = vpop.f32.mrb[0].mxu0
      %995 = vmatprep.mubr.f32.mxu0 0.0
      %996 = vmatmul.mubr.f32.gmra.mrb[0].mxu0 %v829
      %v997 = vpop.f32.mrb[0].mxu0
      %v998 = vadd.f32 0.0, %v997
      %v999 = vpop.f32.mrb[0].mxu0
      %1000 = vmatprep.mubr.f32.mxu0 0.0
      %1001 = vmatmul.mubr.f32.gmra.mrb[0].mxu0 %v832
      %v1002 = vpop.f32.mrb[0].mxu0
      %v1003 = vadd.f32 0.0, %v1002
      %v1004 = vpop.f32.mrb[0].mxu0
      %1005 = vmatprep.mubr.f32.mxu0 0.0
      %1006 = vmatmul.mubr.f32.gmra.mrb[0].mxu0 %v835
      %v1007 = vpop.f32.mrb[0].mxu0
      %v1008 = vadd.f32 0.0, %v1007
      %v1009 = vpop.f32.mrb[0].mxu0
      %1010 = vmatprep.mubr.f32.mxu0 0.0
      %1011 = vmatmul.mubr.f32.gmra.mrb[0].mxu0 %v838
      %v1012 = vpop.f32.mrb[0].mxu0
      %v1013 = vadd.f32 0.0, %v1012
      %v1014 = vpop.f32.mrb[0].mxu0
      %1015 = vmatprep.mubr.f32.mxu0 0.0
      %1016 = vmatmul.mubr.f32.gmra.mrb[0].mxu0 %v841
      %v1017 = vpop.f32.mrb[0].mxu0
      %v1018 = vadd.f32 0.0, %v1017
      %v1019 = vpop.f32.mrb[0].mxu0
      %1020 = vmatprep.mubr.f32.mxu0 0.0
      %1021 = vmatmul.mubr.f32.gmra.mrb[0].mxu0 %v844
      %v1022 = vpop.f32.mrb[0].mxu0
      %v1023 = vadd.f32 0.0, %v1022
      %v1024 = vpop.f32.mrb[0].mxu0
      %1025 = vmatprep.mubr.f32.mxu0 0.0
      %1026 = vmatmul.mubr.f32.gmra.mrb[0].mxu0 %v847
      %v1027 = vpop.f32.mrb[0].mxu0
      %v1028 = vadd.f32 0.0, %v1027
      %v1029 = vpop.f32.mrb[0].mxu0
      %1030 = vmatprep.mubr.f32.mxu0 0.0
      %1031 = vmatmul.mubr.f32.gmra.mrb[0].mxu0 %v850
      %v1032 = vpop.f32.mrb[0].mxu0
      %v1033 = vadd.f32 0.0, %v1032
      %v1034 = vpop.f32.mrb[0].mxu0
      %1035 = vmatprep.mubr.f32.mxu0 0.0
      %1036 = vmatmul.mubr.f32.gmra.mrb[0].mxu0 %v853
      %v1037 = vpop.f32.mrb[0].mxu0
      %v1038 = vadd.f32 0.0, %v1037
      %v1039 = vpop.f32.mrb[0].mxu0
      %1040 = vmatprep.mubr.f32.mxu0 0.0
      %1041 = vmatmul.mubr.f32.gmra.mrb[0].mxu0 %v856
      %v1042 = vpop.f32.mrb[0].mxu0
      %v1043 = vadd.f32 0.0, %v1042
      %v1044 = vpop.f32.mrb[0].mxu0
      %1045 = vmatprep.mubr.f32.mxu0 0.0
      %1046 = vmatmul.mubr.f32.gmra.mrb[0].mxu0 %v859
      %v1047 = vpop.f32.mrb[0].mxu0
      %v1048 = vadd.f32 0.0, %v1047
      %v1049 = vpop.f32.mrb[0].mxu0
      %1050 = vmatprep.mubr.f32.mxu0 0.0
      %1051 = vmatmul.mubr.f32.gmra.mrb[0].mxu0 %v862
      %v1052 = vpop.f32.mrb[0].mxu0
      %v1053 = vadd.f32 0.0, %v1052
      %v1054 = vpop.f32.mrb[0].mxu0
      %1055 = vmatprep.mubr.f32.mxu0 0.0
      %1056 = vmatmul.mubr.f32.gmra.mrb[0].mxu0 %v865
      %v1057 = vpop.f32.mrb[0].mxu0
      %v1058 = vadd.f32 0.0, %v1057
      %v1059 = vpop.f32.mrb[0].mxu0
      %1060 = vmatprep.mubr.f32.mxu0 0.0
      %1061 = vmatmul.mubr.f32.gmra.mrb[0].mxu0 %v868
      %v1062 = vpop.f32.mrb[0].mxu0
      %v1063 = vadd.f32 0.0, %v1062
      %v1064 = vpop.f32.mrb[0].mxu0
      %1065 = vmatprep.mubr.f32.mxu0 0.0
      %1066 = vmatmul.mubr.f32.gmra.mrb[0].mxu0 %v871
      %v1067 = vpop.f32.mrb[0].mxu0
      %v1068 = vadd.f32 0.0, %v1067
      %v1069 = vpop.f32.mrb[0].mxu0
      %1070 = vmatprep.mubr.f32.mxu0 0.0
      %1071 = vmatmul.mubr.f32.gmra.mrb[0].mxu0 %v874
      %v1072 = vpop.f32.mrb[0].mxu0
      %v1073 = vadd.f32 0.0, %v1072
      %v1074 = vpop.f32.mrb[0].mxu0
      %1075 = vmatprep.mubr.f32.mxu0 0.0
      %1076 = vmatmul.mubr.f32.gmra.mrb[0].mxu0 %v877
      %v1077 = vpop.f32.mrb[0].mxu0
      %v1078 = vadd.f32 0.0, %v1077
      %v1079 = vpop.f32.mrb[0].mxu0
      %1080 = vmatprep.mubr.f32.mxu0 0.0
      %1081 = vmatmul.mubr.f32.gmra.mrb[0].mxu0 %v880
      %v1082 = vpop.f32.mrb[0].mxu0
      %v1083 = vadd.f32 0.0, %v1082
      %v1084 = vpop.f32.mrb[0].mxu0
      %1085 = vmatprep.mubr.f32.mxu0 0.0
      %1086 = vmatmul.mubr.f32.gmra.mrb[0].mxu0 %v883
      %v1087 = vpop.f32.mrb[0].mxu0
      %v1088 = vadd.f32 0.0, %v1087
      %v1089 = vpop.f32.mrb[0].mxu0
      %1090 = vmatprep.mubr.f32.mxu0 0.0
      %1091 = vmatmul.mubr.f32.gmra.mrb[0].mxu0 %v886
      %v1092 = vpop.f32.mrb[0].mxu0
      %v1093 = vadd.f32 0.0, %v1092
      %v1094 = vpop.f32.mrb[0].mxu0
      %1095 = vmatprep.mubr.f32.mxu0 0.0
      %1096 = vmatmul.mubr.f32.gmra.mrb[0].mxu0 %v889
      %v1097 = vpop.f32.mrb[0].mxu0
      %v1098 = vadd.f32 0.0, %v1097
      %v1099 = vpop.f32.mrb[0].mxu0
      %1100 = vmatprep.mubr.f32.mxu0 0.0
      %1101 = vmatmul.mubr.f32.gmra.mrb[0].mxu0 %v892
      %v1102 = vpop.f32.mrb[0].mxu0
      %v1103 = vadd.f32 0.0, %v1102
      %v1104 = vpop.f32.mrb[0].mxu0
      %1105 = vmatprep.mubr.f32.mxu0 0.0
      %1106 = vmatmul.mubr.f32.gmra.mrb[0].mxu0 %v895
      %v1107 = vpop.f32.mrb[0].mxu0
      %v1108 = vadd.f32 0.0, %v1107
      %v1109 = vpop.f32.mrb[0].mxu0
      %1110 = vmatprep.mubr.f32.mxu0 0.0
      %1111 = vmatmul.mubr.f32.gmra.mrb[0].mxu0 %v898
      %v1112 = vpop.f32.mrb[0].mxu0
      %v1113 = vadd.f32 0.0, %v1112
      %v1114 = vpop.f32.mrb[0].mxu0
      %1115 = vmatprep.mubr.f32.mxu0 0.0
      %1116 = vmatmul.mubr.f32.gmra.mrb[0].mxu0 %v901
      %v1117 = vpop.f32.mrb[0].mxu0
      %v1118 = vadd.f32 0.0, %v1117
      %v1119 = vpop.f32.mrb[0].mxu0
      %1120 = vmatprep.mubr.f32.mxu0 0.0
      %1121 = vmatmul.mubr.f32.gmra.mrb[0].mxu0 %v904
      %v1122 = vpop.f32.mrb[0].mxu0
      %v1123 = vadd.f32 0.0, %v1122
      %v1124 = vpop.f32.mrb[0].mxu0
      %1125 = vmatprep.mubr.f32.mxu0 0.0
      %1126 = vmatmul.mubr.f32.gmra.mrb[0].mxu0 %v907
      %v1127 = vpop.f32.mrb[0].mxu0
      %v1128 = vadd.f32 0.0, %v1127
      %v1129 = vpop.f32.mrb[0].mxu0
      %1130 = vmatprep.mubr.f32.mxu0 0.0
      %1131 = vmatmul.mubr.f32.gmra.mrb[0].mxu0 %v910
      %v1132 = vpop.f32.mrb[0].mxu0
      %v1133 = vadd.f32 0.0, %v1132
      %v1134 = vpop.f32.mrb[0].mxu0
      %1135 = vmatprep.mubr.f32.mxu0 0.0
      %1136 = vmatmul.mubr.f32.gmra.mrb[0].mxu0 %v913
      %v1137 = vpop.f32.mrb[0].mxu0
      %v1138 = vadd.f32 0.0, %v1137
      %v1139 = vpop.f32.mrb[0].mxu0
      %1140 = vmatprep.mubr.f32.mxu0 0.0
      %1141 = vmatmul.mubr.f32.gmra.mrb[0].mxu0 %v916
      %v1142 = vpop.f32.mrb[0].mxu0
      %v1143 = vadd.f32 0.0, %v1142
      %v1144 = vpop.f32.mrb[0].mxu0
      %1145 = vdwg.mxu0
      %v1147 = vsel %vm319, %v755, 0
      %v1150 = vsel %vm319, %v756, 0
      %v1153 = vsel %vm319, %v757, 0
      %v1156 = vsel %vm319, %v758, 0
      %v1159 = vsel %vm319, %v759, 0
      %v1162 = vsel %vm319, %v760, 0
      %v1165 = vsel %vm319, %v761, 0
      %v1168 = vsel %vm319, %v762, 0
      %v1171 = vsel %vm319, %v763, 0
      %v1174 = vsel %vm319, %v764, 0
      %v1177 = vsel %vm319, %v765, 0
      %v1180 = vsel %vm319, %v766, 0
      %v1183 = vsel %vm319, %v767, 0
      %v1186 = vsel %vm319, %v768, 0
      %v1189 = vsel %vm319, %v769, 0
      %v1192 = vsel %vm319, %v770, 0
      %v1195 = vsel %vm319, %v771, 0
      %v1198 = vsel %vm319, %v772, 0
      %v1201 = vsel %vm319, %v773, 0
      %v1204 = vsel %vm319, %v774, 0
      %v1207 = vsel %vm319, %v775, 0
      %v1210 = vsel %vm319, %v776, 0
      %v1213 = vsel %vm319, %v777, 0
      %v1216 = vsel %vm319, %v778, 0
      %v1219 = vsel %vm319, %v779, 0
      %v1222 = vsel %vm319, %v780, 0
      %v1225 = vsel %vm319, %v781, 0
      %v1228 = vsel %vm319, %v782, 0
      %v1231 = vsel %vm319, %v783, 0
      %v1234 = vsel %vm319, %v784, 0
      %v1237 = vsel %vm319, %v785, 0
      %v1240 = vsel %vm319, %v786, 0
      %v1243 = vsel %vm416, %v787, 0
      %1245 = vmatprep.subr.mxu0 0.0
      %1246 = vmatpush1.msra.mxu0 %v1243
      %1247 = vmatprep.subr.mxu0 0.0
      %1248 = vmatpush1.msra.mxu0 0.0
      %1249 = vmatprep.subr.mxu0 0.0
      %1250 = vmatpush1.msra.mxu0 0.0
      %1251 = vmatprep.subr.mxu0 0.0
      %1252 = vmatpush1.msra.mxu0 0.0
      %1253 = vmatprep.subr.mxu0 0.0
      %1254 = vmatpush1.msra.mxu0 0.0
      %1255 = vmatprep.subr.mxu0 0.0
      %1256 = vmatpush1.msra.mxu0 0.0
      %1257 = vmatprep.subr.mxu0 0.0
      %1258 = vmatpush1.msra.mxu0 0.0
      %1259 = vmatprep.subr.mxu0 0.0
      %1260 = vmatpush1.msra.mxu0 0.0
      %1261 = vmatprep.subr.mxu0 0.0
      %1262 = vmatpush1.msra.mxu0 0.0
      %1263 = vmatprep.subr.mxu0 0.0
      %1264 = vmatpush1.msra.mxu0 0.0
      %1265 = vmatprep.subr.mxu0 0.0
      %1266 = vmatpush1.msra.mxu0 0.0
      %1267 = vmatprep.subr.mxu0 0.0
      %1268 = vmatpush1.msra.mxu0 0.0
      %1269 = vmatprep.subr.mxu0 0.0
      %1270 = vmatpush1.msra.mxu0 0.0
      %1271 = vmatprep.subr.mxu0 0.0
      %1272 = vmatpush1.msra.mxu0 0.0
      %1273 = vmatprep.subr.mxu0 0.0
      %1274 = vmatpush1.msra.mxu0 0.0
      %1275 = vmatprep.subr.mxu0 0.0
      %1276 = vmatpush1.msra.mxu0 0.0
      %1277 = vmatprep.subr.mxu0 0.0
      %1278 = vmatpush1.msra.mxu0 0.0
      %1279 = vmatprep.subr.mxu0 0.0
      %1280 = vmatpush1.msra.mxu0 0.0
      %1281 = vmatprep.subr.mxu0 0.0
      %1282 = vmatpush1.msra.mxu0 0.0
      %1283 = vmatprep.subr.mxu0 0.0
      %1284 = vmatpush1.msra.mxu0 0.0
      %1285 = vmatprep.subr.mxu0 0.0
      %1286 = vmatpush1.msra.mxu0 0.0
      %1287 = vmatprep.subr.mxu0 0.0
      %1288 = vmatpush1.msra.mxu0 0.0
      %1289 = vmatprep.subr.mxu0 0.0
      %1290 = vmatpush1.msra.mxu0 0.0
      %1291 = vmatprep.subr.mxu0 0.0
      %1292 = vmatpush1.msra.mxu0 0.0
      %1293 = vmatprep.subr.mxu0 0.0
      %1294 = vmatpush1.msra.mxu0 0.0
      %1295 = vmatprep.subr.mxu0 0.0
      %1296 = vmatpush1.msra.mxu0 0.0
      %1297 = vmatprep.subr.mxu0 0.0
      %1298 = vmatpush1.msra.mxu0 0.0
      %1299 = vmatprep.subr.mxu0 0.0
      %1300 = vmatpush1.msra.mxu0 0.0
      %1301 = vmatprep.subr.mxu0 0.0
      %1302 = vmatpush1.msra.mxu0 0.0
      %1303 = vmatprep.subr.mxu0 0.0
      %1304 = vmatpush1.msra.mxu0 0.0
      %1305 = vmatprep.subr.mxu0 0.0
      %1306 = vmatpush1.msra.mxu0 0.0
      %1307 = vmatprep.subr.mxu0 0.0
      %1308 = vmatpush1.msra.mxu0 0.0
      %1309 = vmatprep.mubr.f32.mxu0 0.0
      %1310 = vmatmul.mubr.f32.gmra.mrb[0].mxu0 %v1147
      %v1311 = vpop.f32.mrb[0].mxu0
      %v1312 = vadd.f32 %v988, %v1311
      %v1313 = vpop.f32.mrb[0].mxu0
      %1314 = vmatprep.mubr.f32.mxu0 0.0
      %1315 = vmatmul.mubr.f32.gmra.mrb[0].mxu0 %v1150
      %v1316 = vpop.f32.mrb[0].mxu0
      %v1317 = vadd.f32 %v993, %v1316
      %v1318 = vpop.f32.mrb[0].mxu0
      %1319 = vmatprep.mubr.f32.mxu0 0.0
      %1320 = vmatmul.mubr.f32.gmra.mrb[0].mxu0 %v1153
      %v1321 = vpop.f32.mrb[0].mxu0
      %v1322 = vadd.f32 %v998, %v1321
      %v1323 = vpop.f32.mrb[0].mxu0
      %1324 = vmatprep.mubr.f32.mxu0 0.0
      %1325 = vmatmul.mubr.f32.gmra.mrb[0].mxu0 %v1156
      %v1326 = vpop.f32.mrb[0].mxu0
      %v1327 = vadd.f32 %v1003, %v1326
      %v1328 = vpop.f32.mrb[0].mxu0
      %1329 = vmatprep.mubr.f32.mxu0 0.0
      %1330 = vmatmul.mubr.f32.gmra.mrb[0].mxu0 %v1159
      %v1331 = vpop.f32.mrb[0].mxu0
      %v1332 = vadd.f32 %v1008, %v1331
      %v1333 = vpop.f32.mrb[0].mxu0
      %1334 = vmatprep.mubr.f32.mxu0 0.0
      %1335 = vmatmul.mubr.f32.gmra.mrb[0].mxu0 %v1162
      %v1336 = vpop.f32.mrb[0].mxu0
      %v1337 = vadd.f32 %v1013, %v1336
      %v1338 = vpop.f32.mrb[0].mxu0
      %1339 = vmatprep.mubr.f32.mxu0 0.0
      %1340 = vmatmul.mubr.f32.gmra.mrb[0].mxu0 %v1165
      %v1341 = vpop.f32.mrb[0].mxu0
      %v1342 = vadd.f32 %v1018, %v1341
      %v1343 = vpop.f32.mrb[0].mxu0
      %1344 = vmatprep.mubr.f32.mxu0 0.0
      %1345 = vmatmul.mubr.f32.gmra.mrb[0].mxu0 %v1168
      %v1346 = vpop.f32.mrb[0].mxu0
      %v1347 = vadd.f32 %v1023, %v1346
      %v1348 = vpop.f32.mrb[0].mxu0
      %1349 = vmatprep.mubr.f32.mxu0 0.0
      %1350 = vmatmul.mubr.f32.gmra.mrb[0].mxu0 %v1171
      %v1351 = vpop.f32.mrb[0].mxu0
      %v1352 = vadd.f32 %v1028, %v1351
      %v1353 = vpop.f32.mrb[0].mxu0
      %1354 = vmatprep.mubr.f32.mxu0 0.0
      %1355 = vmatmul.mubr.f32.gmra.mrb[0].mxu0 %v1174
      %v1356 = vpop.f32.mrb[0].mxu0
      %v1357 = vadd.f32 %v1033, %v1356
      %v1358 = vpop.f32.mrb[0].mxu0
      %1359 = vmatprep.mubr.f32.mxu0 0.0
      %1360 = vmatmul.mubr.f32.gmra.mrb[0].mxu0 %v1177
      %v1361 = vpop.f32.mrb[0].mxu0
      %v1362 = vadd.f32 %v1038, %v1361
      %v1363 = vpop.f32.mrb[0].mxu0
      %1364 = vmatprep.mubr.f32.mxu0 0.0
      %1365 = vmatmul.mubr.f32.gmra.mrb[0].mxu0 %v1180
      %v1366 = vpop.f32.mrb[0].mxu0
      %v1367 = vadd.f32 %v1043, %v1366
      %v1368 = vpop.f32.mrb[0].mxu0
      %1369 = vmatprep.mubr.f32.mxu0 0.0
      %1370 = vmatmul.mubr.f32.gmra.mrb[0].mxu0 %v1183
      %v1371 = vpop.f32.mrb[0].mxu0
      %v1372 = vadd.f32 %v1048, %v1371
      %v1373 = vpop.f32.mrb[0].mxu0
      %1374 = vmatprep.mubr.f32.mxu0 0.0
      %1375 = vmatmul.mubr.f32.gmra.mrb[0].mxu0 %v1186
      %v1376 = vpop.f32.mrb[0].mxu0
      %v1377 = vadd.f32 %v1053, %v1376
      %v1378 = vpop.f32.mrb[0].mxu0
      %1379 = vmatprep.mubr.f32.mxu0 0.0
      %1380 = vmatmul.mubr.f32.gmra.mrb[0].mxu0 %v1189
      %v1381 = vpop.f32.mrb[0].mxu0
      %v1382 = vadd.f32 %v1058, %v1381
      %v1383 = vpop.f32.mrb[0].mxu0
      %1384 = vmatprep.mubr.f32.mxu0 0.0
      %1385 = vmatmul.mubr.f32.gmra.mrb[0].mxu0 %v1192
      %v1386 = vpop.f32.mrb[0].mxu0
      %v1387 = vadd.f32 %v1063, %v1386
      %v1388 = vpop.f32.mrb[0].mxu0
      %1389 = vmatprep.mubr.f32.mxu0 0.0
      %1390 = vmatmul.mubr.f32.gmra.mrb[0].mxu0 %v1195
      %v1391 = vpop.f32.mrb[0].mxu0
      %v1392 = vadd.f32 %v1068, %v1391
      %v1393 = vpop.f32.mrb[0].mxu0
      %1394 = vmatprep.mubr.f32.mxu0 0.0
      %1395 = vmatmul.mubr.f32.gmra.mrb[0].mxu0 %v1198
      %v1396 = vpop.f32.mrb[0].mxu0
      %v1397 = vadd.f32 %v1073, %v1396
      %v1398 = vpop.f32.mrb[0].mxu0
      %1399 = vmatprep.mubr.f32.mxu0 0.0
      %1400 = vmatmul.mubr.f32.gmra.mrb[0].mxu0 %v1201
      %v1401 = vpop.f32.mrb[0].mxu0
      %v1402 = vadd.f32 %v1078, %v1401
      %v1403 = vpop.f32.mrb[0].mxu0
      %1404 = vmatprep.mubr.f32.mxu0 0.0
      %1405 = vmatmul.mubr.f32.gmra.mrb[0].mxu0 %v1204
      %v1406 = vpop.f32.mrb[0].mxu0
      %v1407 = vadd.f32 %v1083, %v1406
      %v1408 = vpop.f32.mrb[0].mxu0
      %1409 = vmatprep.mubr.f32.mxu0 0.0
      %1410 = vmatmul.mubr.f32.gmra.mrb[0].mxu0 %v1207
      %v1411 = vpop.f32.mrb[0].mxu0
      %v1412 = vadd.f32 %v1088, %v1411
      %v1413 = vpop.f32.mrb[0].mxu0
      %1414 = vmatprep.mubr.f32.mxu0 0.0
      %1415 = vmatmul.mubr.f32.gmra.mrb[0].mxu0 %v1210
      %v1416 = vpop.f32.mrb[0].mxu0
      %v1417 = vadd.f32 %v1093, %v1416
      %v1418 = vpop.f32.mrb[0].mxu0
      %1419 = vmatprep.mubr.f32.mxu0 0.0
      %1420 = vmatmul.mubr.f32.gmra.mrb[0].mxu0 %v1213
      %v1421 = vpop.f32.mrb[0].mxu0
      %v1422 = vadd.f32 %v1098, %v1421
      %v1423 = vpop.f32.mrb[0].mxu0
      %1424 = vmatprep.mubr.f32.mxu0 0.0
      %1425 = vmatmul.mubr.f32.gmra.mrb[0].mxu0 %v1216
      %v1426 = vpop.f32.mrb[0].mxu0
      %v1427 = vadd.f32 %v1103, %v1426
      %v1428 = vpop.f32.mrb[0].mxu0
      %1429 = vmatprep.mubr.f32.mxu0 0.0
      %1430 = vmatmul.mubr.f32.gmra.mrb[0].mxu0 %v1219
      %v1431 = vpop.f32.mrb[0].mxu0
      %v1432 = vadd.f32 %v1108, %v1431
      %v1433 = vpop.f32.mrb[0].mxu0
      %1434 = vmatprep.mubr.f32.mxu0 0.0
      %1435 = vmatmul.mubr.f32.gmra.mrb[0].mxu0 %v1222
      %v1436 = vpop.f32.mrb[0].mxu0
      %v1437 = vadd.f32 %v1113, %v1436
      %v1438 = vpop.f32.mrb[0].mxu0
      %1439 = vmatprep.mubr.f32.mxu0 0.0
      %1440 = vmatmul.mubr.f32.gmra.mrb[0].mxu0 %v1225
      %v1441 = vpop.f32.mrb[0].mxu0
      %v1442 = vadd.f32 %v1118, %v1441
      %v1443 = vpop.f32.mrb[0].mxu0
      %1444 = vmatprep.mubr.f32.mxu0 0.0
      %1445 = vmatmul.mubr.f32.gmra.mrb[0].mxu0 %v1228
      %v1446 = vpop.f32.mrb[0].mxu0
      %v1447 = vadd.f32 %v1123, %v1446
      %v1448 = vpop.f32.mrb[0].mxu0
      %1449 = vmatprep.mubr.f32.mxu0 0.0
      %1450 = vmatmul.mubr.f32.gmra.mrb[0].mxu0 %v1231
      %v1451 = vpop.f32.mrb[0].mxu0
      %v1452 = vadd.f32 %v1128, %v1451
      %v1453 = vpop.f32.mrb[0].mxu0
      %1454 = vmatprep.mubr.f32.mxu0 0.0
      %1455 = vmatmul.mubr.f32.gmra.mrb[0].mxu0 %v1234
      %v1456 = vpop.f32.mrb[0].mxu0
      %v1457 = vadd.f32 %v1133, %v1456
      %v1458 = vpop.f32.mrb[0].mxu0
      %1459 = vmatprep.mubr.f32.mxu0 0.0
      %1460 = vmatmul.mubr.f32.gmra.mrb[0].mxu0 %v1237
      %v1461 = vpop.f32.mrb[0].mxu0
      %v1462 = vadd.f32 %v1138, %v1461
      %v1463 = vpop.f32.mrb[0].mxu0
      %1464 = vmatprep.mubr.f32.mxu0 0.0
      %1465 = vmatmul.mubr.f32.gmra.mrb[0].mxu0 %v1240
      %v1466 = vpop.f32.mrb[0].mxu0
      %v1467 = vadd.f32 %v1143, %v1466
      %v1468 = vpop.f32.mrb[0].mxu0
      %1469 = vdwg.mxu0
      %v1470 = vld [vmem:[#allocation2 + $0x2] sm:$0xff]
      %v1471 = vld [vmem:[#allocation2 + $0xa] sm:$0xff]
      %v1472 = vld [vmem:[#allocation2 + $0x1a] sm:$0xff]
      %v1473 = vld [vmem:[#allocation2 + $0x22] sm:$0xff]
      %v1474 = vld [vmem:[#allocation2 + $0x32] sm:$0xff]
      %v1475 = vld [vmem:[#allocation2 + $0x3a] sm:$0xff]
      %v1476 = vld [vmem:[#allocation2 + $0x4a] sm:$0xff]
      %v1477 = vld [vmem:[#allocation2 + $0x52] sm:$0xff]
      %v1478 = vld [vmem:[#allocation2 + $0x62] sm:$0xff]
      %v1479 = vld [vmem:[#allocation2 + $0x6a] sm:$0xff]
      %v1480 = vld [vmem:[#allocation2 + $0x7a] sm:$0xff]
      %v1481 = vld [vmem:[#allocation2 + $0x82] sm:$0xff]
      %v1482 = vld [vmem:[#allocation2 + $0x92] sm:$0xff]
      %v1483 = vld [vmem:[#allocation2 + $0x9a] sm:$0xff]
      %v1484 = vld [vmem:[#allocation2 + $0xaa] sm:$0xff]
      %v1485 = vld [vmem:[#allocation2 + $0xb2] sm:$0xff]
      %v1486 = vld [vmem:[#allocation2 + $0xc2] sm:$0xff]
      %v1487 = vld [vmem:[#allocation2 + $0xca] sm:$0xff]
      %v1488 = vld [vmem:[#allocation2 + $0xda] sm:$0xff]
      %v1489 = vld [vmem:[#allocation2 + $0xe2] sm:$0xff]
      %v1490 = vld [vmem:[#allocation2 + $0xf2] sm:$0xff]
      %v1491 = vld [vmem:[#allocation2 + $0xfa] sm:$0xff]
      %v1492 = vld [vmem:[#allocation2 + $0x10a] sm:$0xff]
      %v1493 = vld [vmem:[#allocation2 + $0x112] sm:$0xff]
      %v1494 = vld [vmem:[#allocation2 + $0x122] sm:$0xff]
      %v1495 = vld [vmem:[#allocation2 + $0x12a] sm:$0xff]
      %v1496 = vld [vmem:[#allocation2 + $0x13a] sm:$0xff]
      %v1497 = vld [vmem:[#allocation2 + $0x142] sm:$0xff]
      %v1498 = vld [vmem:[#allocation2 + $0x152] sm:$0xff]
      %v1499 = vld [vmem:[#allocation2 + $0x15a] sm:$0xff]
      %v1500 = vld [vmem:[#allocation2 + $0x16a] sm:$0xff]
      %v1501 = vld [vmem:[#allocation2 + $0x172] sm:$0xff]
      %s1502 = scalar_lea.vmem %s3, 8
      %v1503 = vld [vmem:[%s1502] sm:$0xf]
      %v1505 = vsel %vm319, %v1470, 0
      %v1508 = vsel %vm319, %v1471, 0
      %v1511 = vsel %vm319, %v1472, 0
      %v1514 = vsel %vm319, %v1473, 0
      %v1517 = vsel %vm319, %v1474, 0
      %v1520 = vsel %vm319, %v1475, 0
      %v1523 = vsel %vm319, %v1476, 0
      %v1526 = vsel %vm319, %v1477, 0
      %v1529 = vsel %vm319, %v1478, 0
      %v1532 = vsel %vm319, %v1479, 0
      %v1535 = vsel %vm319, %v1480, 0
      %v1538 = vsel %vm319, %v1481, 0
      %v1541 = vsel %vm319, %v1482, 0
      %v1544 = vsel %vm319, %v1483, 0
      %v1547 = vsel %vm319, %v1484, 0
      %v1550 = vsel %vm319, %v1485, 0
      %v1553 = vsel %vm319, %v1486, 0
      %v1556 = vsel %vm319, %v1487, 0
      %v1559 = vsel %vm319, %v1488, 0
      %v1562 = vsel %vm319, %v1489, 0
      %v1565 = vsel %vm319, %v1490, 0
      %v1568 = vsel %vm319, %v1491, 0
      %v1571 = vsel %vm319, %v1492, 0
      %v1574 = vsel %vm319, %v1493, 0
      %v1577 = vsel %vm319, %v1494, 0
      %v1580 = vsel %vm319, %v1495, 0
      %v1583 = vsel %vm319, %v1496, 0
      %v1586 = vsel %vm319, %v1497, 0
      %v1589 = vsel %vm319, %v1498, 0
      %v1592 = vsel %vm319, %v1499, 0
      %v1595 = vsel %vm319, %v1500, 0
      %v1598 = vsel %vm319, %v1501, 0
      %v1601 = vsel %vm416, %v1503, 0
      %1603 = vmatprep.subr.mxu0 0.0
      %1604 = vmatpush1.msra.mxu0 %v1601
      %1605 = vmatprep.subr.mxu0 0.0
      %1606 = vmatpush1.msra.mxu0 0.0
      %1607 = vmatprep.subr.mxu0 0.0
      %1608 = vmatpush1.msra.mxu0 0.0
      %1609 = vmatprep.subr.mxu0 0.0
      %1610 = vmatpush1.msra.mxu0 0.0
      %1611 = vmatprep.subr.mxu0 0.0
      %1612 = vmatpush1.msra.mxu0 0.0
      %1613 = vmatprep.subr.mxu0 0.0
      %1614 = vmatpush1.msra.mxu0 0.0
      %1615 = vmatprep.subr.mxu0 0.0
      %1616 = vmatpush1.msra.mxu0 0.0
      %1617 = vmatprep.subr.mxu0 0.0
      %1618 = vmatpush1.msra.mxu0 0.0
      %1619 = vmatprep.subr.mxu0 0.0
      %1620 = vmatpush1.msra.mxu0 0.0
      %1621 = vmatprep.subr.mxu0 0.0
      %1622 = vmatpush1.msra.mxu0 0.0
      %1623 = vmatprep.subr.mxu0 0.0
      %1624 = vmatpush1.msra.mxu0 0.0
      %1625 = vmatprep.subr.mxu0 0.0
      %1626 = vmatpush1.msra.mxu0 0.0
      %1627 = vmatprep.subr.mxu0 0.0
      %1628 = vmatpush1.msra.mxu0 0.0
      %1629 = vmatprep.subr.mxu0 0.0
      %1630 = vmatpush1.msra.mxu0 0.0
      %1631 = vmatprep.subr.mxu0 0.0
      %1632 = vmatpush1.msra.mxu0 0.0
      %1633 = vmatprep.subr.mxu0 0.0
      %1634 = vmatpush1.msra.mxu0 0.0
      %1635 = vmatprep.subr.mxu0 0.0
      %1636 = vmatpush1.msra.mxu0 0.0
      %1637 = vmatprep.subr.mxu0 0.0
      %1638 = vmatpush1.msra.mxu0 0.0
      %1639 = vmatprep.subr.mxu0 0.0
      %1640 = vmatpush1.msra.mxu0 0.0
      %1641 = vmatprep.subr.mxu0 0.0
      %1642 = vmatpush1.msra.mxu0 0.0
      %1643 = vmatprep.subr.mxu0 0.0
      %1644 = vmatpush1.msra.mxu0 0.0
      %1645 = vmatprep.subr.mxu0 0.0
      %1646 = vmatpush1.msra.mxu0 0.0
      %1647 = vmatprep.subr.mxu0 0.0
      %1648 = vmatpush1.msra.mxu0 0.0
      %1649 = vmatprep.subr.mxu0 0.0
      %1650 = vmatpush1.msra.mxu0 0.0
      %1651 = vmatprep.subr.mxu0 0.0
      %1652 = vmatpush1.msra.mxu0 0.0
      %1653 = vmatprep.subr.mxu0 0.0
      %1654 = vmatpush1.msra.mxu0 0.0
      %1655 = vmatprep.subr.mxu0 0.0
      %1656 = vmatpush1.msra.mxu0 0.0
      %1657 = vmatprep.subr.mxu0 0.0
      %1658 = vmatpush1.msra.mxu0 0.0
      %1659 = vmatprep.subr.mxu0 0.0
      %1660 = vmatpush1.msra.mxu0 0.0
      %1661 = vmatprep.subr.mxu0 0.0
      %1662 = vmatpush1.msra.mxu0 0.0
      %1663 = vmatprep.subr.mxu0 0.0
      %1664 = vmatpush1.msra.mxu0 0.0
      %1665 = vmatprep.subr.mxu0 0.0
      %1666 = vmatpush1.msra.mxu0 0.0
      %1667 = vmatprep.mubr.f32.mxu0 0.0
      %1668 = vmatmul.mubr.f32.gmra.mrb[0].mxu0 %v1505
      %v1669 = vpop.f32.mrb[0].mxu0
      %v1670 = vadd.f32 0.0, %v1669
      %v1671 = vpop.f32.mrb[0].mxu0
      %1672 = vmatprep.mubr.f32.mxu0 0.0
      %1673 = vmatmul.mubr.f32.gmra.mrb[0].mxu0 %v1508
      %v1674 = vpop.f32.mrb[0].mxu0
      %v1675 = vadd.f32 0.0, %v1674
      %v1676 = vpop.f32.mrb[0].mxu0
      %1677 = vmatprep.mubr.f32.mxu0 0.0
      %1678 = vmatmul.mubr.f32.gmra.mrb[0].mxu0 %v1511
      %v1679 = vpop.f32.mrb[0].mxu0
      %v1680 = vadd.f32 0.0, %v1679
      %v1681 = vpop.f32.mrb[0].mxu0
      %1682 = vmatprep.mubr.f32.mxu0 0.0
      %1683 = vmatmul.mubr.f32.gmra.mrb[0].mxu0 %v1514
      %v1684 = vpop.f32.mrb[0].mxu0
      %v1685 = vadd.f32 0.0, %v1684
      %v1686 = vpop.f32.mrb[0].mxu0
      %1687 = vmatprep.mubr.f32.mxu0 0.0
      %1688 = vmatmul.mubr.f32.gmra.mrb[0].mxu0 %v1517
      %v1689 = vpop.f32.mrb[0].mxu0
      %v1690 = vadd.f32 0.0, %v1689
      %v1691 = vpop.f32.mrb[0].mxu0
      %1692 = vmatprep.mubr.f32.mxu0 0.0
      %1693 = vmatmul.mubr.f32.gmra.mrb[0].mxu0 %v1520
      %v1694 = vpop.f32.mrb[0].mxu0
      %v1695 = vadd.f32 0.0, %v1694
      %v1696 = vpop.f32.mrb[0].mxu0
      %1697 = vmatprep.mubr.f32.mxu0 0.0
      %1698 = vmatmul.mubr.f32.gmra.mrb[0].mxu0 %v1523
      %v1699 = vpop.f32.mrb[0].mxu0
      %v1700 = vadd.f32 0.0, %v1699
      %v1701 = vpop.f32.mrb[0].mxu0
      %1702 = vmatprep.mubr.f32.mxu0 0.0
      %1703 = vmatmul.mubr.f32.gmra.mrb[0].mxu0 %v1526
      %v1704 = vpop.f32.mrb[0].mxu0
      %v1705 = vadd.f32 0.0, %v1704
      %v1706 = vpop.f32.mrb[0].mxu0
      %1707 = vmatprep.mubr.f32.mxu0 0.0
      %1708 = vmatmul.mubr.f32.gmra.mrb[0].mxu0 %v1529
      %v1709 = vpop.f32.mrb[0].mxu0
      %v1710 = vadd.f32 0.0, %v1709
      %v1711 = vpop.f32.mrb[0].mxu0
      %1712 = vmatprep.mubr.f32.mxu0 0.0
      %1713 = vmatmul.mubr.f32.gmra.mrb[0].mxu0 %v1532
      %v1714 = vpop.f32.mrb[0].mxu0
      %v1715 = vadd.f32 0.0, %v1714
      %v1716 = vpop.f32.mrb[0].mxu0
      %1717 = vmatprep.mubr.f32.mxu0 0.0
      %1718 = vmatmul.mubr.f32.gmra.mrb[0].mxu0 %v1535
      %v1719 = vpop.f32.mrb[0].mxu0
      %v1720 = vadd.f32 0.0, %v1719
      %v1721 = vpop.f32.mrb[0].mxu0
      %1722 = vmatprep.mubr.f32.mxu0 0.0
      %1723 = vmatmul.mubr.f32.gmra.mrb[0].mxu0 %v1538
      %v1724 = vpop.f32.mrb[0].mxu0
      %v1725 = vadd.f32 0.0, %v1724
      %v1726 = vpop.f32.mrb[0].mxu0
      %1727 = vmatprep.mubr.f32.mxu0 0.0
      %1728 = vmatmul.mubr.f32.gmra.mrb[0].mxu0 %v1541
      %v1729 = vpop.f32.mrb[0].mxu0
      %v1730 = vadd.f32 0.0, %v1729
      %v1731 = vpop.f32.mrb[0].mxu0
      %1732 = vmatprep.mubr.f32.mxu0 0.0
      %1733 = vmatmul.mubr.f32.gmra.mrb[0].mxu0 %v1544
      %v1734 = vpop.f32.mrb[0].mxu0
      %v1735 = vadd.f32 0.0, %v1734
      %v1736 = vpop.f32.mrb[0].mxu0
      %1737 = vmatprep.mubr.f32.mxu0 0.0
      %1738 = vmatmul.mubr.f32.gmra.mrb[0].mxu0 %v1547
      %v1739 = vpop.f32.mrb[0].mxu0
      %v1740 = vadd.f32 0.0, %v1739
      %v1741 = vpop.f32.mrb[0].mxu0
      %1742 = vmatprep.mubr.f32.mxu0 0.0
      %1743 = vmatmul.mubr.f32.gmra.mrb[0].mxu0 %v1550
      %v1744 = vpop.f32.mrb[0].mxu0
      %v1745 = vadd.f32 0.0, %v1744
      %v1746 = vpop.f32.mrb[0].mxu0
      %1747 = vmatprep.mubr.f32.mxu0 0.0
      %1748 = vmatmul.mubr.f32.gmra.mrb[0].mxu0 %v1553
      %v1749 = vpop.f32.mrb[0].mxu0
      %v1750 = vadd.f32 0.0, %v1749
      %v1751 = vpop.f32.mrb[0].mxu0
      %1752 = vmatprep.mubr.f32.mxu0 0.0
      %1753 = vmatmul.mubr.f32.gmra.mrb[0].mxu0 %v1556
      %v1754 = vpop.f32.mrb[0].mxu0
      %v1755 = vadd.f32 0.0, %v1754
      %v1756 = vpop.f32.mrb[0].mxu0
      %1757 = vmatprep.mubr.f32.mxu0 0.0
      %1758 = vmatmul.mubr.f32.gmra.mrb[0].mxu0 %v1559
      %v1759 = vpop.f32.mrb[0].mxu0
      %v1760 = vadd.f32 0.0, %v1759
      %v1761 = vpop.f32.mrb[0].mxu0
      %1762 = vmatprep.mubr.f32.mxu0 0.0
      %1763 = vmatmul.mubr.f32.gmra.mrb[0].mxu0 %v1562
      %v1764 = vpop.f32.mrb[0].mxu0
      %v1765 = vadd.f32 0.0, %v1764
      %v1766 = vpop.f32.mrb[0].mxu0
      %1767 = vmatprep.mubr.f32.mxu0 0.0
      %1768 = vmatmul.mubr.f32.gmra.mrb[0].mxu0 %v1565
      %v1769 = vpop.f32.mrb[0].mxu0
      %v1770 = vadd.f32 0.0, %v1769
      %v1771 = vpop.f32.mrb[0].mxu0
      %1772 = vmatprep.mubr.f32.mxu0 0.0
      %1773 = vmatmul.mubr.f32.gmra.mrb[0].mxu0 %v1568
      %v1774 = vpop.f32.mrb[0].mxu0
      %v1775 = vadd.f32 0.0, %v1774
      %v1776 = vpop.f32.mrb[0].mxu0
      %1777 = vmatprep.mubr.f32.mxu0 0.0
      %1778 = vmatmul.mubr.f32.gmra.mrb[0].mxu0 %v1571
      %v1779 = vpop.f32.mrb[0].mxu0
      %v1780 = vadd.f32 0.0, %v1779
      %v1781 = vpop.f32.mrb[0].mxu0
      %1782 = vmatprep.mubr.f32.mxu0 0.0
      %1783 = vmatmul.mubr.f32.gmra.mrb[0].mxu0 %v1574
      %v1784 = vpop.f32.mrb[0].mxu0
      %v1785 = vadd.f32 0.0, %v1784
      %v1786 = vpop.f32.mrb[0].mxu0
      %1787 = vmatprep.mubr.f32.mxu0 0.0
      %1788 = vmatmul.mubr.f32.gmra.mrb[0].mxu0 %v1577
      %v1789 = vpop.f32.mrb[0].mxu0
      %v1790 = vadd.f32 0.0, %v1789
      %v1791 = vpop.f32.mrb[0].mxu0
      %1792 = vmatprep.mubr.f32.mxu0 0.0
      %1793 = vmatmul.mubr.f32.gmra.mrb[0].mxu0 %v1580
      %v1794 = vpop.f32.mrb[0].mxu0
      %v1795 = vadd.f32 0.0, %v1794
      %v1796 = vpop.f32.mrb[0].mxu0
      %1797 = vmatprep.mubr.f32.mxu0 0.0
      %1798 = vmatmul.mubr.f32.gmra.mrb[0].mxu0 %v1583
      %v1799 = vpop.f32.mrb[0].mxu0
      %v1800 = vadd.f32 0.0, %v1799
      %v1801 = vpop.f32.mrb[0].mxu0
      %1802 = vmatprep.mubr.f32.mxu0 0.0
      %1803 = vmatmul.mubr.f32.gmra.mrb[0].mxu0 %v1586
      %v1804 = vpop.f32.mrb[0].mxu0
      %v1805 = vadd.f32 0.0, %v1804
      %v1806 = vpop.f32.mrb[0].mxu0
      %1807 = vmatprep.mubr.f32.mxu0 0.0
      %1808 = vmatmul.mubr.f32.gmra.mrb[0].mxu0 %v1589
      %v1809 = vpop.f32.mrb[0].mxu0
      %v1810 = vadd.f32 0.0, %v1809
      %v1811 = vpop.f32.mrb[0].mxu0
      %1812 = vmatprep.mubr.f32.mxu0 0.0
      %1813 = vmatmul.mubr.f32.gmra.mrb[0].mxu0 %v1592
      %v1814 = vpop.f32.mrb[0].mxu0
      %v1815 = vadd.f32 0.0, %v1814
      %v1816 = vpop.f32.mrb[0].mxu0
      %1817 = vmatprep.mubr.f32.mxu0 0.0
      %1818 = vmatmul.mubr.f32.gmra.mrb[0].mxu0 %v1595
      %v1819 = vpop.f32.mrb[0].mxu0
      %v1820 = vadd.f32 0.0, %v1819
      %v1821 = vpop.f32.mrb[0].mxu0
      %1822 = vmatprep.mubr.f32.mxu0 0.0
      %1823 = vmatmul.mubr.f32.gmra.mrb[0].mxu0 %v1598
      %v1824 = vpop.f32.mrb[0].mxu0
      %v1825 = vadd.f32 0.0, %v1824
      %v1826 = vpop.f32.mrb[0].mxu0
      %1827 = vdwg.mxu0
      %v1828 = vadd.f32 %v1312, %v1670
      %v1829 = vadd.f32 %v1317, %v1675
      %v1830 = vadd.f32 %v1322, %v1680
      %v1831 = vadd.f32 %v1327, %v1685
      %v1832 = vadd.f32 %v1332, %v1690
      %v1833 = vadd.f32 %v1337, %v1695
      %v1834 = vadd.f32 %v1342, %v1700
      %v1835 = vadd.f32 %v1347, %v1705
      %v1836 = vadd.f32 %v1352, %v1710
      %v1837 = vadd.f32 %v1357, %v1715
      %v1838 = vadd.f32 %v1362, %v1720
      %v1839 = vadd.f32 %v1367, %v1725
      %v1840 = vadd.f32 %v1372, %v1730
      %v1841 = vadd.f32 %v1377, %v1735
      %v1842 = vadd.f32 %v1382, %v1740
      %v1843 = vadd.f32 %v1387, %v1745
      %v1844 = vadd.f32 %v1392, %v1750
      %v1845 = vadd.f32 %v1397, %v1755
      %v1846 = vadd.f32 %v1402, %v1760
      %v1847 = vadd.f32 %v1407, %v1765
      %v1848 = vadd.f32 %v1412, %v1770
      %v1849 = vadd.f32 %v1417, %v1775
      %v1850 = vadd.f32 %v1422, %v1780
      %v1851 = vadd.f32 %v1427, %v1785
      %v1852 = vadd.f32 %v1432, %v1790
      %v1853 = vadd.f32 %v1437, %v1795
      %v1854 = vadd.f32 %v1442, %v1800
      %v1855 = vadd.f32 %v1447, %v1805
      %v1856 = vadd.f32 %v1452, %v1810
      %v1857 = vadd.f32 %v1457, %v1815
      %v1858 = vadd.f32 %v1462, %v1820
      %v1859 = vadd.f32 %v1467, %v1825
      %v1860 = vld [vmem:[%s722] sm:$0xff]
      %v1861 = vld [vmem:[%s722 + $0x8] sm:$0xff]
      %v1862 = vld [vmem:[%s722 + $0x18] sm:$0xff]
      %v1863 = vld [vmem:[%s722 + $0x20] sm:$0xff]
      %v1864 = vld [vmem:[%s722 + $0x30] sm:$0xff]
      %v1865 = vld [vmem:[%s722 + $0x38] sm:$0xff]
      %v1866 = vld [vmem:[%s722 + $0x48] sm:$0xff]
      %v1867 = vld [vmem:[%s722 + $0x50] sm:$0xff]
      %v1868 = vld [vmem:[%s722 + $0x60] sm:$0xff]
      %v1869 = vld [vmem:[%s722 + $0x68] sm:$0xff]
      %v1870 = vld [vmem:[%s722 + $0x78] sm:$0xff]
      %v1871 = vld [vmem:[%s722 + $0x80] sm:$0xff]
      %v1872 = vld [vmem:[%s722 + $0x90] sm:$0xff]
      %v1873 = vld [vmem:[%s722 + $0x98] sm:$0xff]
      %v1874 = vld [vmem:[%s722 + $0xa8] sm:$0xff]
      %v1875 = vld [vmem:[%s722 + $0xb0] sm:$0xff]
      %v1876 = vld [vmem:[%s722 + $0xc0] sm:$0xff]
      %v1877 = vld [vmem:[%s722 + $0xc8] sm:$0xff]
      %v1878 = vld [vmem:[%s722 + $0xd8] sm:$0xff]
      %v1879 = vld [vmem:[%s722 + $0xe0] sm:$0xff]
      %v1880 = vld [vmem:[%s722 + $0xf0] sm:$0xff]
      %v1881 = vld [vmem:[%s722 + $0xf8] sm:$0xff]
      %v1882 = vld [vmem:[%s722 + $0x108] sm:$0xff]
      %v1883 = vld [vmem:[%s722 + $0x110] sm:$0xff]
      %v1884 = vld [vmem:[%s722 + $0x120] sm:$0xff]
      %v1885 = vld [vmem:[%s722 + $0x128] sm:$0xff]
      %v1886 = vld [vmem:[%s722 + $0x138] sm:$0xff]
      %v1887 = vld [vmem:[%s722 + $0x140] sm:$0xff]
      %v1888 = vld [vmem:[%s722 + $0x150] sm:$0xff]
      %v1889 = vld [vmem:[%s722 + $0x158] sm:$0xff]
      %v1890 = vld [vmem:[%s722 + $0x168] sm:$0xff]
      %v1891 = vld [vmem:[%s722 + $0x170] sm:$0xff]
      %s1892 = scalar_lea.vmem %s3, 12
      %v1893 = vld [vmem:[%s1892] sm:$0xf]
      %v1895 = vsel %vm319, %v1860, 0
      %v1898 = vsel %vm319, %v1861, 0
      %v1901 = vsel %vm319, %v1862, 0
      %v1904 = vsel %vm319, %v1863, 0
      %v1907 = vsel %vm319, %v1864, 0
      %v1910 = vsel %vm319, %v1865, 0
      %v1913 = vsel %vm319, %v1866, 0
      %v1916 = vsel %vm319, %v1867, 0
      %v1919 = vsel %vm319, %v1868, 0
      %v1922 = vsel %vm319, %v1869, 0
      %v1925 = vsel %vm319, %v1870, 0
      %v1928 = vsel %vm319, %v1871, 0
      %v1931 = vsel %vm319, %v1872, 0
      %v1934 = vsel %vm319, %v1873, 0
      %v1937 = vsel %vm319, %v1874, 0
      %v1940 = vsel %vm319, %v1875, 0
      %v1943 = vsel %vm319, %v1876, 0
      %v1946 = vsel %vm319, %v1877, 0
      %v1949 = vsel %vm319, %v1878, 0
      %v1952 = vsel %vm319, %v1879, 0
      %v1955 = vsel %vm319, %v1880, 0
      %v1958 = vsel %vm319, %v1881, 0
      %v1961 = vsel %vm319, %v1882, 0
      %v1964 = vsel %vm319, %v1883, 0
      %v1967 = vsel %vm319, %v1884, 0
      %v1970 = vsel %vm319, %v1885, 0
      %v1973 = vsel %vm319, %v1886, 0
      %v1976 = vsel %vm319, %v1887, 0
      %v1979 = vsel %vm319, %v1888, 0
      %v1982 = vsel %vm319, %v1889, 0
      %v1985 = vsel %vm319, %v1890, 0
      %v1988 = vsel %vm319, %v1891, 0
      %v1991 = vsel %vm416, %v1893, 0
      %1993 = vmatprep.subr.mxu0 0.0
      %1994 = vmatpush1.msra.mxu0 %v1991
      %1995 = vmatprep.subr.mxu0 0.0
      %1996 = vmatpush1.msra.mxu0 0.0
      %1997 = vmatprep.subr.mxu0 0.0
      %1998 = vmatpush1.msra.mxu0 0.0
      %1999 = vmatprep.subr.mxu0 0.0
      %2000 = vmatpush1.msra.mxu0 0.0
      %2001 = vmatprep.subr.mxu0 0.0
      %2002 = vmatpush1.msra.mxu0 0.0
      %2003 = vmatprep.subr.mxu0 0.0
      %2004 = vmatpush1.msra.mxu0 0.0
      %2005 = vmatprep.subr.mxu0 0.0
      %2006 = vmatpush1.msra.mxu0 0.0
      %2007 = vmatprep.subr.mxu0 0.0
      %2008 = vmatpush1.msra.mxu0 0.0
      %2009 = vmatprep.subr.mxu0 0.0
      %2010 = vmatpush1.msra.mxu0 0.0
      %2011 = vmatprep.subr.mxu0 0.0
      %2012 = vmatpush1.msra.mxu0 0.0
      %2013 = vmatprep.subr.mxu0 0.0
      %2014 = vmatpush1.msra.mxu0 0.0
      %2015 = vmatprep.subr.mxu0 0.0
      %2016 = vmatpush1.msra.mxu0 0.0
      %2017 = vmatprep.subr.mxu0 0.0
      %2018 = vmatpush1.msra.mxu0 0.0
      %2019 = vmatprep.subr.mxu0 0.0
      %2020 = vmatpush1.msra.mxu0 0.0
      %2021 = vmatprep.subr.mxu0 0.0
      %2022 = vmatpush1.msra.mxu0 0.0
      %2023 = vmatprep.subr.mxu0 0.0
      %2024 = vmatpush1.msra.mxu0 0.0
      %2025 = vmatprep.subr.mxu0 0.0
      %2026 = vmatpush1.msra.mxu0 0.0
      %2027 = vmatprep.subr.mxu0 0.0
      %2028 = vmatpush1.msra.mxu0 0.0
      %2029 = vmatprep.subr.mxu0 0.0
      %2030 = vmatpush1.msra.mxu0 0.0
      %2031 = vmatprep.subr.mxu0 0.0
      %2032 = vmatpush1.msra.mxu0 0.0
      %2033 = vmatprep.subr.mxu0 0.0
      %2034 = vmatpush1.msra.mxu0 0.0
      %2035 = vmatprep.subr.mxu0 0.0
      %2036 = vmatpush1.msra.mxu0 0.0
      %2037 = vmatprep.subr.mxu0 0.0
      %2038 = vmatpush1.msra.mxu0 0.0
      %2039 = vmatprep.subr.mxu0 0.0
      %2040 = vmatpush1.msra.mxu0 0.0
      %2041 = vmatprep.subr.mxu0 0.0
      %2042 = vmatpush1.msra.mxu0 0.0
      %2043 = vmatprep.subr.mxu0 0.0
      %2044 = vmatpush1.msra.mxu0 0.0
      %2045 = vmatprep.subr.mxu0 0.0
      %2046 = vmatpush1.msra.mxu0 0.0
      %2047 = vmatprep.subr.mxu0 0.0
      %2048 = vmatpush1.msra.mxu0 0.0
      %2049 = vmatprep.subr.mxu0 0.0
      %2050 = vmatpush1.msra.mxu0 0.0
      %2051 = vmatprep.subr.mxu0 0.0
      %2052 = vmatpush1.msra.mxu0 0.0
      %2053 = vmatprep.subr.mxu0 0.0
      %2054 = vmatpush1.msra.mxu0 0.0
      %2055 = vmatprep.subr.mxu0 0.0
      %2056 = vmatpush1.msra.mxu0 0.0
      %2057 = vmatprep.mubr.f32.mxu0 0.0
      %2058 = vmatmul.mubr.f32.gmra.mrb[0].mxu0 %v1895
      %v2059 = vpop.f32.mrb[0].mxu0
      %v2060 = vadd.f32 0.0, %v2059
      %v2061 = vpop.f32.mrb[0].mxu0
      %2062 = vmatprep.mubr.f32.mxu0 0.0
      %2063 = vmatmul.mubr.f32.gmra.mrb[0].mxu0 %v1898
      %v2064 = vpop.f32.mrb[0].mxu0
      %v2065 = vadd.f32 0.0, %v2064
      %v2066 = vpop.f32.mrb[0].mxu0
      %2067 = vmatprep.mubr.f32.mxu0 0.0
      %2068 = vmatmul.mubr.f32.gmra.mrb[0].mxu0 %v1901
      %v2069 = vpop.f32.mrb[0].mxu0
      %v2070 = vadd.f32 0.0, %v2069
      %v2071 = vpop.f32.mrb[0].mxu0
      %2072 = vmatprep.mubr.f32.mxu0 0.0
      %2073 = vmatmul.mubr.f32.gmra.mrb[0].mxu0 %v1904
      %v2074 = vpop.f32.mrb[0].mxu0
      %v2075 = vadd.f32 0.0, %v2074
      %v2076 = vpop.f32.mrb[0].mxu0
      %2077 = vmatprep.mubr.f32.mxu0 0.0
      %2078 = vmatmul.mubr.f32.gmra.mrb[0].mxu0 %v1907
      %v2079 = vpop.f32.mrb[0].mxu0
      %v2080 = vadd.f32 0.0, %v2079
      %v2081 = vpop.f32.mrb[0].mxu0
      %2082 = vmatprep.mubr.f32.mxu0 0.0
      %2083 = vmatmul.mubr.f32.gmra.mrb[0].mxu0 %v1910
      %v2084 = vpop.f32.mrb[0].mxu0
      %v2085 = vadd.f32 0.0, %v2084
      %v2086 = vpop.f32.mrb[0].mxu0
      %2087 = vmatprep.mubr.f32.mxu0 0.0
      %2088 = vmatmul.mubr.f32.gmra.mrb[0].mxu0 %v1913
      %v2089 = vpop.f32.mrb[0].mxu0
      %v2090 = vadd.f32 0.0, %v2089
      %v2091 = vpop.f32.mrb[0].mxu0
      %2092 = vmatprep.mubr.f32.mxu0 0.0
      %2093 = vmatmul.mubr.f32.gmra.mrb[0].mxu0 %v1916
      %v2094 = vpop.f32.mrb[0].mxu0
      %v2095 = vadd.f32 0.0, %v2094
      %v2096 = vpop.f32.mrb[0].mxu0
      %2097 = vmatprep.mubr.f32.mxu0 0.0
      %2098 = vmatmul.mubr.f32.gmra.mrb[0].mxu0 %v1919
      %v2099 = vpop.f32.mrb[0].mxu0
      %v2100 = vadd.f32 0.0, %v2099
      %v2101 = vpop.f32.mrb[0].mxu0
      %2102 = vmatprep.mubr.f32.mxu0 0.0
      %2103 = vmatmul.mubr.f32.gmra.mrb[0].mxu0 %v1922
      %v2104 = vpop.f32.mrb[0].mxu0
      %v2105 = vadd.f32 0.0, %v2104
      %v2106 = vpop.f32.mrb[0].mxu0
      %2107 = vmatprep.mubr.f32.mxu0 0.0
      %2108 = vmatmul.mubr.f32.gmra.mrb[0].mxu0 %v1925
      %v2109 = vpop.f32.mrb[0].mxu0
      %v2110 = vadd.f32 0.0, %v2109
      %v2111 = vpop.f32.mrb[0].mxu0
      %2112 = vmatprep.mubr.f32.mxu0 0.0
      %2113 = vmatmul.mubr.f32.gmra.mrb[0].mxu0 %v1928
      %v2114 = vpop.f32.mrb[0].mxu0
      %v2115 = vadd.f32 0.0, %v2114
      %v2116 = vpop.f32.mrb[0].mxu0
      %2117 = vmatprep.mubr.f32.mxu0 0.0
      %2118 = vmatmul.mubr.f32.gmra.mrb[0].mxu0 %v1931
      %v2119 = vpop.f32.mrb[0].mxu0
      %v2120 = vadd.f32 0.0, %v2119
      %v2121 = vpop.f32.mrb[0].mxu0
      %2122 = vmatprep.mubr.f32.mxu0 0.0
      %2123 = vmatmul.mubr.f32.gmra.mrb[0].mxu0 %v1934
      %v2124 = vpop.f32.mrb[0].mxu0
      %v2125 = vadd.f32 0.0, %v2124
      %v2126 = vpop.f32.mrb[0].mxu0
      %2127 = vmatprep.mubr.f32.mxu0 0.0
      %2128 = vmatmul.mubr.f32.gmra.mrb[0].mxu0 %v1937
      %v2129 = vpop.f32.mrb[0].mxu0
      %v2130 = vadd.f32 0.0, %v2129
      %v2131 = vpop.f32.mrb[0].mxu0
      %2132 = vmatprep.mubr.f32.mxu0 0.0
      %2133 = vmatmul.mubr.f32.gmra.mrb[0].mxu0 %v1940
      %v2134 = vpop.f32.mrb[0].mxu0
      %v2135 = vadd.f32 0.0, %v2134
      %v2136 = vpop.f32.mrb[0].mxu0
      %2137 = vmatprep.mubr.f32.mxu0 0.0
      %2138 = vmatmul.mubr.f32.gmra.mrb[0].mxu0 %v1943
      %v2139 = vpop.f32.mrb[0].mxu0
      %v2140 = vadd.f32 0.0, %v2139
      %v2141 = vpop.f32.mrb[0].mxu0
      %2142 = vmatprep.mubr.f32.mxu0 0.0
      %2143 = vmatmul.mubr.f32.gmra.mrb[0].mxu0 %v1946
      %v2144 = vpop.f32.mrb[0].mxu0
      %v2145 = vadd.f32 0.0, %v2144
      %v2146 = vpop.f32.mrb[0].mxu0
      %2147 = vmatprep.mubr.f32.mxu0 0.0
      %2148 = vmatmul.mubr.f32.gmra.mrb[0].mxu0 %v1949
      %v2149 = vpop.f32.mrb[0].mxu0
      %v2150 = vadd.f32 0.0, %v2149
      %v2151 = vpop.f32.mrb[0].mxu0
      %2152 = vmatprep.mubr.f32.mxu0 0.0
      %2153 = vmatmul.mubr.f32.gmra.mrb[0].mxu0 %v1952
      %v2154 = vpop.f32.mrb[0].mxu0
      %v2155 = vadd.f32 0.0, %v2154
      %v2156 = vpop.f32.mrb[0].mxu0
      %2157 = vmatprep.mubr.f32.mxu0 0.0
      %2158 = vmatmul.mubr.f32.gmra.mrb[0].mxu0 %v1955
      %v2159 = vpop.f32.mrb[0].mxu0
      %v2160 = vadd.f32 0.0, %v2159
      %v2161 = vpop.f32.mrb[0].mxu0
      %2162 = vmatprep.mubr.f32.mxu0 0.0
      %2163 = vmatmul.mubr.f32.gmra.mrb[0].mxu0 %v1958
      %v2164 = vpop.f32.mrb[0].mxu0
      %v2165 = vadd.f32 0.0, %v2164
      %v2166 = vpop.f32.mrb[0].mxu0
      %2167 = vmatprep.mubr.f32.mxu0 0.0
      %2168 = vmatmul.mubr.f32.gmra.mrb[0].mxu0 %v1961
      %v2169 = vpop.f32.mrb[0].mxu0
      %v2170 = vadd.f32 0.0, %v2169
      %v2171 = vpop.f32.mrb[0].mxu0
      %2172 = vmatprep.mubr.f32.mxu0 0.0
      %2173 = vmatmul.mubr.f32.gmra.mrb[0].mxu0 %v1964
      %v2174 = vpop.f32.mrb[0].mxu0
      %v2175 = vadd.f32 0.0, %v2174
      %v2176 = vpop.f32.mrb[0].mxu0
      %2177 = vmatprep.mubr.f32.mxu0 0.0
      %2178 = vmatmul.mubr.f32.gmra.mrb[0].mxu0 %v1967
      %v2179 = vpop.f32.mrb[0].mxu0
      %v2180 = vadd.f32 0.0, %v2179
      %v2181 = vpop.f32.mrb[0].mxu0
      %2182 = vmatprep.mubr.f32.mxu0 0.0
      %2183 = vmatmul.mubr.f32.gmra.mrb[0].mxu0 %v1970
      %v2184 = vpop.f32.mrb[0].mxu0
      %v2185 = vadd.f32 0.0, %v2184
      %v2186 = vpop.f32.mrb[0].mxu0
      %2187 = vmatprep.mubr.f32.mxu0 0.0
      %2188 = vmatmul.mubr.f32.gmra.mrb[0].mxu0 %v1973
      %v2189 = vpop.f32.mrb[0].mxu0
      %v2190 = vadd.f32 0.0, %v2189
      %v2191 = vpop.f32.mrb[0].mxu0
      %2192 = vmatprep.mubr.f32.mxu0 0.0
      %2193 = vmatmul.mubr.f32.gmra.mrb[0].mxu0 %v1976
      %v2194 = vpop.f32.mrb[0].mxu0
      %v2195 = vadd.f32 0.0, %v2194
      %v2196 = vpop.f32.mrb[0].mxu0
      %2197 = vmatprep.mubr.f32.mxu0 0.0
      %2198 = vmatmul.mubr.f32.gmra.mrb[0].mxu0 %v1979
      %v2199 = vpop.f32.mrb[0].mxu0
      %v2200 = vadd.f32 0.0, %v2199
      %v2201 = vpop.f32.mrb[0].mxu0
      %2202 = vmatprep.mubr.f32.mxu0 0.0
      %2203 = vmatmul.mubr.f32.gmra.mrb[0].mxu0 %v1982
      %v2204 = vpop.f32.mrb[0].mxu0
      %v2205 = vadd.f32 0.0, %v2204
      %v2206 = vpop.f32.mrb[0].mxu0
      %2207 = vmatprep.mubr.f32.mxu0 0.0
      %2208 = vmatmul.mubr.f32.gmra.mrb[0].mxu0 %v1985
      %v2209 = vpop.f32.mrb[0].mxu0
      %v2210 = vadd.f32 0.0, %v2209
      %v2211 = vpop.f32.mrb[0].mxu0
      %2212 = vmatprep.mubr.f32.mxu0 0.0
      %2213 = vmatmul.mubr.f32.gmra.mrb[0].mxu0 %v1988
      %v2214 = vpop.f32.mrb[0].mxu0
      %v2215 = vadd.f32 0.0, %v2214
      %v2216 = vpop.f32.mrb[0].mxu0
      %2217 = vdwg.mxu0
      %v2218 = vadd.f32 %v1828, %v2060
      %v2219 = vadd.f32 %v1829, %v2065
      %v2220 = vadd.f32 %v1830, %v2070
      %v2221 = vadd.f32 %v1831, %v2075
      %v2222 = vadd.f32 %v1832, %v2080
      %v2223 = vadd.f32 %v1833, %v2085
      %v2224 = vadd.f32 %v1834, %v2090
      %v2225 = vadd.f32 %v1835, %v2095
      %v2226 = vadd.f32 %v1836, %v2100
      %v2227 = vadd.f32 %v1837, %v2105
      %v2228 = vadd.f32 %v1838, %v2110
      %v2229 = vadd.f32 %v1839, %v2115
      %v2230 = vadd.f32 %v1840, %v2120
      %v2231 = vadd.f32 %v1841, %v2125
      %v2232 = vadd.f32 %v1842, %v2130
      %v2233 = vadd.f32 %v1843, %v2135
      %v2234 = vadd.f32 %v1844, %v2140
      %v2235 = vadd.f32 %v1845, %v2145
      %v2236 = vadd.f32 %v1846, %v2150
      %v2237 = vadd.f32 %v1847, %v2155
      %v2238 = vadd.f32 %v1848, %v2160
      %v2239 = vadd.f32 %v1849, %v2165
      %v2240 = vadd.f32 %v1850, %v2170
      %v2241 = vadd.f32 %v1851, %v2175
      %v2242 = vadd.f32 %v1852, %v2180
      %v2243 = vadd.f32 %v1853, %v2185
      %v2244 = vadd.f32 %v1854, %v2190
      %v2245 = vadd.f32 %v1855, %v2195
      %v2246 = vadd.f32 %v1856, %v2200
      %v2247 = vadd.f32 %v1857, %v2205
      %v2248 = vadd.f32 %v1858, %v2210
      %v2249 = vadd.f32 %v1859, %v2215
      %v2250 = vld [vmem:[%s722 + $0x1] sm:$0xff]
      %v2251 = vld [vmem:[%s722 + $0x9] sm:$0xff]
      %v2252 = vld [vmem:[%s722 + $0x19] sm:$0xff]
      %v2253 = vld [vmem:[%s722 + $0x21] sm:$0xff]
      %v2254 = vld [vmem:[%s722 + $0x31] sm:$0xff]
      %v2255 = vld [vmem:[%s722 + $0x39] sm:$0xff]
      %v2256 = vld [vmem:[%s722 + $0x49] sm:$0xff]
      %v2257 = vld [vmem:[%s722 + $0x51] sm:$0xff]
      %v2258 = vld [vmem:[%s722 + $0x61] sm:$0xff]
      %v2259 = vld [vmem:[%s722 + $0x69] sm:$0xff]
      %v2260 = vld [vmem:[%s722 + $0x79] sm:$0xff]
      %v2261 = vld [vmem:[%s722 + $0x81] sm:$0xff]
      %v2262 = vld [vmem:[%s722 + $0x91] sm:$0xff]
      %v2263 = vld [vmem:[%s722 + $0x99] sm:$0xff]
      %v2264 = vld [vmem:[%s722 + $0xa9] sm:$0xff]
      %v2265 = vld [vmem:[%s722 + $0xb1] sm:$0xff]
      %v2266 = vld [vmem:[%s722 + $0xc1] sm:$0xff]
      %v2267 = vld [vmem:[%s722 + $0xc9] sm:$0xff]
      %v2268 = vld [vmem:[%s722 + $0xd9] sm:$0xff]
      %v2269 = vld [vmem:[%s722 + $0xe1] sm:$0xff]
      %v2270 = vld [vmem:[%s722 + $0xf1] sm:$0xff]
      %v2271 = vld [vmem:[%s722 + $0xf9] sm:$0xff]
      %v2272 = vld [vmem:[%s722 + $0x109] sm:$0xff]
      %v2273 = vld [vmem:[%s722 + $0x111] sm:$0xff]
      %v2274 = vld [vmem:[%s722 + $0x121] sm:$0xff]
      %v2275 = vld [vmem:[%s722 + $0x129] sm:$0xff]
      %v2276 = vld [vmem:[%s722 + $0x139] sm:$0xff]
      %v2277 = vld [vmem:[%s722 + $0x141] sm:$0xff]
      %v2278 = vld [vmem:[%s722 + $0x151] sm:$0xff]
      %v2279 = vld [vmem:[%s722 + $0x159] sm:$0xff]
      %v2280 = vld [vmem:[%s722 + $0x169] sm:$0xff]
      %v2281 = vld [vmem:[%s722 + $0x171] sm:$0xff]
      %s2282 = scalar_lea.vmem %s3, 16
      %v2283 = vld [vmem:[%s2282] sm:$0xf]
      %v2285 = vsel %vm319, %v2250, 0
      %v2288 = vsel %vm319, %v2251, 0
      %v2291 = vsel %vm319, %v2252, 0
      %v2294 = vsel %vm319, %v2253, 0
      %v2297 = vsel %vm319, %v2254, 0
      %v2300 = vsel %vm319, %v2255, 0
      %v2303 = vsel %vm319, %v2256, 0
      %v2306 = vsel %vm319, %v2257, 0
      %v2309 = vsel %vm319, %v2258, 0
      %v2312 = vsel %vm319, %v2259, 0
      %v2315 = vsel %vm319, %v2260, 0
      %v2318 = vsel %vm319, %v2261, 0
      %v2321 = vsel %vm319, %v2262, 0
      %v2324 = vsel %vm319, %v2263, 0
      %v2327 = vsel %vm319, %v2264, 0
      %v2330 = vsel %vm319, %v2265, 0
      %v2333 = vsel %vm319, %v2266, 0
      %v2336 = vsel %vm319, %v2267, 0
      %v2339 = vsel %vm319, %v2268, 0
      %v2342 = vsel %vm319, %v2269, 0
      %v2345 = vsel %vm319, %v2270, 0
      %v2348 = vsel %vm319, %v2271, 0
      %v2351 = vsel %vm319, %v2272, 0
      %v2354 = vsel %vm319, %v2273, 0
      %v2357 = vsel %vm319, %v2274, 0
      %v2360 = vsel %vm319, %v2275, 0
      %v2363 = vsel %vm319, %v2276, 0
      %v2366 = vsel %vm319, %v2277, 0
      %v2369 = vsel %vm319, %v2278, 0
      %v2372 = vsel %vm319, %v2279, 0
      %v2375 = vsel %vm319, %v2280, 0
      %v2378 = vsel %vm319, %v2281, 0
      %v2381 = vsel %vm416, %v2283, 0
      %2383 = vmatprep.subr.mxu0 0.0
      %2384 = vmatpush1.msra.mxu0 %v2381
      %2385 = vmatprep.subr.mxu0 0.0
      %2386 = vmatpush1.msra.mxu0 0.0
      %2387 = vmatprep.subr.mxu0 0.0
      %2388 = vmatpush1.msra.mxu0 0.0
      %2389 = vmatprep.subr.mxu0 0.0
      %2390 = vmatpush1.msra.mxu0 0.0
      %2391 = vmatprep.subr.mxu0 0.0
      %2392 = vmatpush1.msra.mxu0 0.0
      %2393 = vmatprep.subr.mxu0 0.0
      %2394 = vmatpush1.msra.mxu0 0.0
      %2395 = vmatprep.subr.mxu0 0.0
      %2396 = vmatpush1.msra.mxu0 0.0
      %2397 = vmatprep.subr.mxu0 0.0
      %2398 = vmatpush1.msra.mxu0 0.0
      %2399 = vmatprep.subr.mxu0 0.0
      %2400 = vmatpush1.msra.mxu0 0.0
      %2401 = vmatprep.subr.mxu0 0.0
      %2402 = vmatpush1.msra.mxu0 0.0
      %2403 = vmatprep.subr.mxu0 0.0
      %2404 = vmatpush1.msra.mxu0 0.0
      %2405 = vmatprep.subr.mxu0 0.0
      %2406 = vmatpush1.msra.mxu0 0.0
      %2407 = vmatprep.subr.mxu0 0.0
      %2408 = vmatpush1.msra.mxu0 0.0
      %2409 = vmatprep.subr.mxu0 0.0
      %2410 = vmatpush1.msra.mxu0 0.0
      %2411 = vmatprep.subr.mxu0 0.0
      %2412 = vmatpush1.msra.mxu0 0.0
      %2413 = vmatprep.subr.mxu0 0.0
      %2414 = vmatpush1.msra.mxu0 0.0
      %2415 = vmatprep.subr.mxu0 0.0
      %2416 = vmatpush1.msra.mxu0 0.0
      %2417 = vmatprep.subr.mxu0 0.0
      %2418 = vmatpush1.msra.mxu0 0.0
      %2419 = vmatprep.subr.mxu0 0.0
      %2420 = vmatpush1.msra.mxu0 0.0
      %2421 = vmatprep.subr.mxu0 0.0
      %2422 = vmatpush1.msra.mxu0 0.0
      %2423 = vmatprep.subr.mxu0 0.0
      %2424 = vmatpush1.msra.mxu0 0.0
      %2425 = vmatprep.subr.mxu0 0.0
      %2426 = vmatpush1.msra.mxu0 0.0
      %2427 = vmatprep.subr.mxu0 0.0
      %2428 = vmatpush1.msra.mxu0 0.0
      %2429 = vmatprep.subr.mxu0 0.0
      %2430 = vmatpush1.msra.mxu0 0.0
      %2431 = vmatprep.subr.mxu0 0.0
      %2432 = vmatpush1.msra.mxu0 0.0
      %2433 = vmatprep.subr.mxu0 0.0
      %2434 = vmatpush1.msra.mxu0 0.0
      %2435 = vmatprep.subr.mxu0 0.0
      %2436 = vmatpush1.msra.mxu0 0.0
      %2437 = vmatprep.subr.mxu0 0.0
      %2438 = vmatpush1.msra.mxu0 0.0
      %2439 = vmatprep.subr.mxu0 0.0
      %2440 = vmatpush1.msra.mxu0 0.0
      %2441 = vmatprep.subr.mxu0 0.0
      %2442 = vmatpush1.msra.mxu0 0.0
      %2443 = vmatprep.subr.mxu0 0.0
      %2444 = vmatpush1.msra.mxu0 0.0
      %2445 = vmatprep.subr.mxu0 0.0
      %2446 = vmatpush1.msra.mxu0 0.0
      %2447 = vmatprep.mubr.f32.mxu0 0.0
      %2448 = vmatmul.mubr.f32.gmra.mrb[0].mxu0 %v2285
      %v2449 = vpop.f32.mrb[0].mxu0
      %v2450 = vadd.f32 0.0, %v2449
      %v2451 = vpop.f32.mrb[0].mxu0
      %2452 = vmatprep.mubr.f32.mxu0 0.0
      %2453 = vmatmul.mubr.f32.gmra.mrb[0].mxu0 %v2288
      %v2454 = vpop.f32.mrb[0].mxu0
      %v2455 = vadd.f32 0.0, %v2454
      %v2456 = vpop.f32.mrb[0].mxu0
      %2457 = vmatprep.mubr.f32.mxu0 0.0
      %2458 = vmatmul.mubr.f32.gmra.mrb[0].mxu0 %v2291
      %v2459 = vpop.f32.mrb[0].mxu0
      %v2460 = vadd.f32 0.0, %v2459
      %v2461 = vpop.f32.mrb[0].mxu0
      %2462 = vmatprep.mubr.f32.mxu0 0.0
      %2463 = vmatmul.mubr.f32.gmra.mrb[0].mxu0 %v2294
      %v2464 = vpop.f32.mrb[0].mxu0
      %v2465 = vadd.f32 0.0, %v2464
      %v2466 = vpop.f32.mrb[0].mxu0
      %2467 = vmatprep.mubr.f32.mxu0 0.0
      %2468 = vmatmul.mubr.f32.gmra.mrb[0].mxu0 %v2297
      %v2469 = vpop.f32.mrb[0].mxu0
      %v2470 = vadd.f32 0.0, %v2469
      %v2471 = vpop.f32.mrb[0].mxu0
      %2472 = vmatprep.mubr.f32.mxu0 0.0
      %2473 = vmatmul.mubr.f32.gmra.mrb[0].mxu0 %v2300
      %v2474 = vpop.f32.mrb[0].mxu0
      %v2475 = vadd.f32 0.0, %v2474
      %v2476 = vpop.f32.mrb[0].mxu0
      %2477 = vmatprep.mubr.f32.mxu0 0.0
      %2478 = vmatmul.mubr.f32.gmra.mrb[0].mxu0 %v2303
      %v2479 = vpop.f32.mrb[0].mxu0
      %v2480 = vadd.f32 0.0, %v2479
      %v2481 = vpop.f32.mrb[0].mxu0
      %2482 = vmatprep.mubr.f32.mxu0 0.0
      %2483 = vmatmul.mubr.f32.gmra.mrb[0].mxu0 %v2306
      %v2484 = vpop.f32.mrb[0].mxu0
      %v2485 = vadd.f32 0.0, %v2484
      %v2486 = vpop.f32.mrb[0].mxu0
      %2487 = vmatprep.mubr.f32.mxu0 0.0
      %2488 = vmatmul.mubr.f32.gmra.mrb[0].mxu0 %v2309
      %v2489 = vpop.f32.mrb[0].mxu0
      %v2490 = vadd.f32 0.0, %v2489
      %v2491 = vpop.f32.mrb[0].mxu0
      %2492 = vmatprep.mubr.f32.mxu0 0.0
      %2493 = vmatmul.mubr.f32.gmra.mrb[0].mxu0 %v2312
      %v2494 = vpop.f32.mrb[0].mxu0
      %v2495 = vadd.f32 0.0, %v2494
      %v2496 = vpop.f32.mrb[0].mxu0
      %2497 = vmatprep.mubr.f32.mxu0 0.0
      %2498 = vmatmul.mubr.f32.gmra.mrb[0].mxu0 %v2315
      %v2499 = vpop.f32.mrb[0].mxu0
      %v2500 = vadd.f32 0.0, %v2499
      %v2501 = vpop.f32.mrb[0].mxu0
      %2502 = vmatprep.mubr.f32.mxu0 0.0
      %2503 = vmatmul.mubr.f32.gmra.mrb[0].mxu0 %v2318
      %v2504 = vpop.f32.mrb[0].mxu0
      %v2505 = vadd.f32 0.0, %v2504
      %v2506 = vpop.f32.mrb[0].mxu0
      %2507 = vmatprep.mubr.f32.mxu0 0.0
      %2508 = vmatmul.mubr.f32.gmra.mrb[0].mxu0 %v2321
      %v2509 = vpop.f32.mrb[0].mxu0
      %v2510 = vadd.f32 0.0, %v2509
      %v2511 = vpop.f32.mrb[0].mxu0
      %2512 = vmatprep.mubr.f32.mxu0 0.0
      %2513 = vmatmul.mubr.f32.gmra.mrb[0].mxu0 %v2324
      %v2514 = vpop.f32.mrb[0].mxu0
      %v2515 = vadd.f32 0.0, %v2514
      %v2516 = vpop.f32.mrb[0].mxu0
      %2517 = vmatprep.mubr.f32.mxu0 0.0
      %2518 = vmatmul.mubr.f32.gmra.mrb[0].mxu0 %v2327
      %v2519 = vpop.f32.mrb[0].mxu0
      %v2520 = vadd.f32 0.0, %v2519
      %v2521 = vpop.f32.mrb[0].mxu0
      %2522 = vmatprep.mubr.f32.mxu0 0.0
      %2523 = vmatmul.mubr.f32.gmra.mrb[0].mxu0 %v2330
      %v2524 = vpop.f32.mrb[0].mxu0
      %v2525 = vadd.f32 0.0, %v2524
      %v2526 = vpop.f32.mrb[0].mxu0
      %2527 = vmatprep.mubr.f32.mxu0 0.0
      %2528 = vmatmul.mubr.f32.gmra.mrb[0].mxu0 %v2333
      %v2529 = vpop.f32.mrb[0].mxu0
      %v2530 = vadd.f32 0.0, %v2529
      %v2531 = vpop.f32.mrb[0].mxu0
      %2532 = vmatprep.mubr.f32.mxu0 0.0
      %2533 = vmatmul.mubr.f32.gmra.mrb[0].mxu0 %v2336
      %v2534 = vpop.f32.mrb[0].mxu0
      %v2535 = vadd.f32 0.0, %v2534
      %v2536 = vpop.f32.mrb[0].mxu0
      %2537 = vmatprep.mubr.f32.mxu0 0.0
      %2538 = vmatmul.mubr.f32.gmra.mrb[0].mxu0 %v2339
      %v2539 = vpop.f32.mrb[0].mxu0
      %v2540 = vadd.f32 0.0, %v2539
      %v2541 = vpop.f32.mrb[0].mxu0
      %2542 = vmatprep.mubr.f32.mxu0 0.0
      %2543 = vmatmul.mubr.f32.gmra.mrb[0].mxu0 %v2342
      %v2544 = vpop.f32.mrb[0].mxu0
      %v2545 = vadd.f32 0.0, %v2544
      %v2546 = vpop.f32.mrb[0].mxu0
      %2547 = vmatprep.mubr.f32.mxu0 0.0
      %2548 = vmatmul.mubr.f32.gmra.mrb[0].mxu0 %v2345
      %v2549 = vpop.f32.mrb[0].mxu0
      %v2550 = vadd.f32 0.0, %v2549
      %v2551 = vpop.f32.mrb[0].mxu0
      %2552 = vmatprep.mubr.f32.mxu0 0.0
      %2553 = vmatmul.mubr.f32.gmra.mrb[0].mxu0 %v2348
      %v2554 = vpop.f32.mrb[0].mxu0
      %v2555 = vadd.f32 0.0, %v2554
      %v2556 = vpop.f32.mrb[0].mxu0
      %2557 = vmatprep.mubr.f32.mxu0 0.0
      %2558 = vmatmul.mubr.f32.gmra.mrb[0].mxu0 %v2351
      %v2559 = vpop.f32.mrb[0].mxu0
      %v2560 = vadd.f32 0.0, %v2559
      %v2561 = vpop.f32.mrb[0].mxu0
      %2562 = vmatprep.mubr.f32.mxu0 0.0
      %2563 = vmatmul.mubr.f32.gmra.mrb[0].mxu0 %v2354
      %v2564 = vpop.f32.mrb[0].mxu0
      %v2565 = vadd.f32 0.0, %v2564
      %v2566 = vpop.f32.mrb[0].mxu0
      %2567 = vmatprep.mubr.f32.mxu0 0.0
      %2568 = vmatmul.mubr.f32.gmra.mrb[0].mxu0 %v2357
      %v2569 = vpop.f32.mrb[0].mxu0
      %v2570 = vadd.f32 0.0, %v2569
      %v2571 = vpop.f32.mrb[0].mxu0
      %2572 = vmatprep.mubr.f32.mxu0 0.0
      %2573 = vmatmul.mubr.f32.gmra.mrb[0].mxu0 %v2360
      %v2574 = vpop.f32.mrb[0].mxu0
      %v2575 = vadd.f32 0.0, %v2574
      %v2576 = vpop.f32.mrb[0].mxu0
      %2577 = vmatprep.mubr.f32.mxu0 0.0
      %2578 = vmatmul.mubr.f32.gmra.mrb[0].mxu0 %v2363
      %v2579 = vpop.f32.mrb[0].mxu0
      %v2580 = vadd.f32 0.0, %v2579
      %v2581 = vpop.f32.mrb[0].mxu0
      %2582 = vmatprep.mubr.f32.mxu0 0.0
      %2583 = vmatmul.mubr.f32.gmra.mrb[0].mxu0 %v2366
      %v2584 = vpop.f32.mrb[0].mxu0
      %v2585 = vadd.f32 0.0, %v2584
      %v2586 = vpop.f32.mrb[0].mxu0
      %2587 = vmatprep.mubr.f32.mxu0 0.0
      %2588 = vmatmul.mubr.f32.gmra.mrb[0].mxu0 %v2369
      %v2589 = vpop.f32.mrb[0].mxu0
      %v2590 = vadd.f32 0.0, %v2589
      %v2591 = vpop.f32.mrb[0].mxu0
      %2592 = vmatprep.mubr.f32.mxu0 0.0
      %2593 = vmatmul.mubr.f32.gmra.mrb[0].mxu0 %v2372
      %v2594 = vpop.f32.mrb[0].mxu0
      %v2595 = vadd.f32 0.0, %v2594
      %v2596 = vpop.f32.mrb[0].mxu0
      %2597 = vmatprep.mubr.f32.mxu0 0.0
      %2598 = vmatmul.mubr.f32.gmra.mrb[0].mxu0 %v2375
      %v2599 = vpop.f32.mrb[0].mxu0
      %v2600 = vadd.f32 0.0, %v2599
      %v2601 = vpop.f32.mrb[0].mxu0
      %2602 = vmatprep.mubr.f32.mxu0 0.0
      %2603 = vmatmul.mubr.f32.gmra.mrb[0].mxu0 %v2378
      %v2604 = vpop.f32.mrb[0].mxu0
      %v2605 = vadd.f32 0.0, %v2604
      %v2606 = vpop.f32.mrb[0].mxu0
      %2607 = vdwg.mxu0
      %v2608 = vadd.f32 %v2218, %v2450
      %v2609 = vadd.f32 %v2219, %v2455
      %v2610 = vadd.f32 %v2220, %v2460
      %v2611 = vadd.f32 %v2221, %v2465
      %v2612 = vadd.f32 %v2222, %v2470
      %v2613 = vadd.f32 %v2223, %v2475
      %v2614 = vadd.f32 %v2224, %v2480
      %v2615 = vadd.f32 %v2225, %v2485
      %v2616 = vadd.f32 %v2226, %v2490
      %v2617 = vadd.f32 %v2227, %v2495
      %v2618 = vadd.f32 %v2228, %v2500
      %v2619 = vadd.f32 %v2229, %v2505
      %v2620 = vadd.f32 %v2230, %v2510
      %v2621 = vadd.f32 %v2231, %v2515
      %v2622 = vadd.f32 %v2232, %v2520
      %v2623 = vadd.f32 %v2233, %v2525
      %v2624 = vadd.f32 %v2234, %v2530
      %v2625 = vadd.f32 %v2235, %v2535
      %v2626 = vadd.f32 %v2236, %v2540
      %v2627 = vadd.f32 %v2237, %v2545
      %v2628 = vadd.f32 %v2238, %v2550
      %v2629 = vadd.f32 %v2239, %v2555
      %v2630 = vadd.f32 %v2240, %v2560
      %v2631 = vadd.f32 %v2241, %v2565
      %v2632 = vadd.f32 %v2242, %v2570
      %v2633 = vadd.f32 %v2243, %v2575
      %v2634 = vadd.f32 %v2244, %v2580
      %v2635 = vadd.f32 %v2245, %v2585
      %v2636 = vadd.f32 %v2246, %v2590
      %v2637 = vadd.f32 %v2247, %v2595
      %v2638 = vadd.f32 %v2248, %v2600
      %v2639 = vadd.f32 %v2249, %v2605
      %v2640 = vld [vmem:[%s722 + $0x2] sm:$0xff]
      %v2641 = vld [vmem:[%s722 + $0xa] sm:$0xff]
      %v2642 = vld [vmem:[%s722 + $0x1a] sm:$0xff]
      %v2643 = vld [vmem:[%s722 + $0x22] sm:$0xff]
      %v2644 = vld [vmem:[%s722 + $0x32] sm:$0xff]
      %v2645 = vld [vmem:[%s722 + $0x3a] sm:$0xff]
      %v2646 = vld [vmem:[%s722 + $0x4a] sm:$0xff]
      %v2647 = vld [vmem:[%s722 + $0x52] sm:$0xff]
      %v2648 = vld [vmem:[%s722 + $0x62] sm:$0xff]
      %v2649 = vld [vmem:[%s722 + $0x6a] sm:$0xff]
      %v2650 = vld [vmem:[%s722 + $0x7a] sm:$0xff]
      %v2651 = vld [vmem:[%s722 + $0x82] sm:$0xff]
      %v2652 = vld [vmem:[%s722 + $0x92] sm:$0xff]
      %v2653 = vld [vmem:[%s722 + $0x9a] sm:$0xff]
      %v2654 = vld [vmem:[%s722 + $0xaa] sm:$0xff]
      %v2655 = vld [vmem:[%s722 + $0xb2] sm:$0xff]
      %v2656 = vld [vmem:[%s722 + $0xc2] sm:$0xff]
      %v2657 = vld [vmem:[%s722 + $0xca] sm:$0xff]
      %v2658 = vld [vmem:[%s722 + $0xda] sm:$0xff]
      %v2659 = vld [vmem:[%s722 + $0xe2] sm:$0xff]
      %v2660 = vld [vmem:[%s722 + $0xf2] sm:$0xff]
      %v2661 = vld [vmem:[%s722 + $0xfa] sm:$0xff]
      %v2662 = vld [vmem:[%s722 + $0x10a] sm:$0xff]
      %v2663 = vld [vmem:[%s722 + $0x112] sm:$0xff]
      %v2664 = vld [vmem:[%s722 + $0x122] sm:$0xff]
      %v2665 = vld [vmem:[%s722 + $0x12a] sm:$0xff]
      %v2666 = vld [vmem:[%s722 + $0x13a] sm:$0xff]
      %v2667 = vld [vmem:[%s722 + $0x142] sm:$0xff]
      %v2668 = vld [vmem:[%s722 + $0x152] sm:$0xff]
      %v2669 = vld [vmem:[%s722 + $0x15a] sm:$0xff]
      %v2670 = vld [vmem:[%s722 + $0x16a] sm:$0xff]
      %v2671 = vld [vmem:[%s722 + $0x172] sm:$0xff]
      %s2672 = scalar_lea.vmem %s3, 20
      %v2673 = vld [vmem:[%s2672] sm:$0xf]
      %v2675 = vsel %vm319, %v2640, 0
      %v2678 = vsel %vm319, %v2641, 0
      %v2681 = vsel %vm319, %v2642, 0
      %v2684 = vsel %vm319, %v2643, 0
      %v2687 = vsel %vm319, %v2644, 0
      %v2690 = vsel %vm319, %v2645, 0
      %v2693 = vsel %vm319, %v2646, 0
      %v2696 = vsel %vm319, %v2647, 0
      %v2699 = vsel %vm319, %v2648, 0
      %v2702 = vsel %vm319, %v2649, 0
      %v2705 = vsel %vm319, %v2650, 0
      %v2708 = vsel %vm319, %v2651, 0
      %v2711 = vsel %vm319, %v2652, 0
      %v2714 = vsel %vm319, %v2653, 0
      %v2717 = vsel %vm319, %v2654, 0
      %v2720 = vsel %vm319, %v2655, 0
      %v2723 = vsel %vm319, %v2656, 0
      %v2726 = vsel %vm319, %v2657, 0
      %v2729 = vsel %vm319, %v2658, 0
      %v2732 = vsel %vm319, %v2659, 0
      %v2735 = vsel %vm319, %v2660, 0
      %v2738 = vsel %vm319, %v2661, 0
      %v2741 = vsel %vm319, %v2662, 0
      %v2744 = vsel %vm319, %v2663, 0
      %v2747 = vsel %vm319, %v2664, 0
      %v2750 = vsel %vm319, %v2665, 0
      %v2753 = vsel %vm319, %v2666, 0
      %v2756 = vsel %vm319, %v2667, 0
      %v2759 = vsel %vm319, %v2668, 0
      %v2762 = vsel %vm319, %v2669, 0
      %v2765 = vsel %vm319, %v2670, 0
      %v2768 = vsel %vm319, %v2671, 0
      %v2771 = vsel %vm416, %v2673, 0
      %2773 = vmatprep.subr.mxu0 0.0
      %2774 = vmatpush1.msra.mxu0 %v2771
      %2775 = vmatprep.subr.mxu0 0.0
      %2776 = vmatpush1.msra.mxu0 0.0
      %2777 = vmatprep.subr.mxu0 0.0
      %2778 = vmatpush1.msra.mxu0 0.0
      %2779 = vmatprep.subr.mxu0 0.0
      %2780 = vmatpush1.msra.mxu0 0.0
      %2781 = vmatprep.subr.mxu0 0.0
      %2782 = vmatpush1.msra.mxu0 0.0
      %2783 = vmatprep.subr.mxu0 0.0
      %2784 = vmatpush1.msra.mxu0 0.0
      %2785 = vmatprep.subr.mxu0 0.0
      %2786 = vmatpush1.msra.mxu0 0.0
      %2787 = vmatprep.subr.mxu0 0.0
      %2788 = vmatpush1.msra.mxu0 0.0
      %2789 = vmatprep.subr.mxu0 0.0
      %2790 = vmatpush1.msra.mxu0 0.0
      %2791 = vmatprep.subr.mxu0 0.0
      %2792 = vmatpush1.msra.mxu0 0.0
      %2793 = vmatprep.subr.mxu0 0.0
      %2794 = vmatpush1.msra.mxu0 0.0
      %2795 = vmatprep.subr.mxu0 0.0
      %2796 = vmatpush1.msra.mxu0 0.0
      %2797 = vmatprep.subr.mxu0 0.0
      %2798 = vmatpush1.msra.mxu0 0.0
      %2799 = vmatprep.subr.mxu0 0.0
      %2800 = vmatpush1.msra.mxu0 0.0
      %2801 = vmatprep.subr.mxu0 0.0
      %2802 = vmatpush1.msra.mxu0 0.0
      %2803 = vmatprep.subr.mxu0 0.0
      %2804 = vmatpush1.msra.mxu0 0.0
      %2805 = vmatprep.subr.mxu0 0.0
      %2806 = vmatpush1.msra.mxu0 0.0
      %2807 = vmatprep.subr.mxu0 0.0
      %2808 = vmatpush1.msra.mxu0 0.0
      %2809 = vmatprep.subr.mxu0 0.0
      %2810 = vmatpush1.msra.mxu0 0.0
      %2811 = vmatprep.subr.mxu0 0.0
      %2812 = vmatpush1.msra.mxu0 0.0
      %2813 = vmatprep.subr.mxu0 0.0
      %2814 = vmatpush1.msra.mxu0 0.0
      %2815 = vmatprep.subr.mxu0 0.0
      %2816 = vmatpush1.msra.mxu0 0.0
      %2817 = vmatprep.subr.mxu0 0.0
      %2818 = vmatpush1.msra.mxu0 0.0
      %2819 = vmatprep.subr.mxu0 0.0
      %2820 = vmatpush1.msra.mxu0 0.0
      %2821 = vmatprep.subr.mxu0 0.0
      %2822 = vmatpush1.msra.mxu0 0.0
      %2823 = vmatprep.subr.mxu0 0.0
      %2824 = vmatpush1.msra.mxu0 0.0
      %2825 = vmatprep.subr.mxu0 0.0
      %2826 = vmatpush1.msra.mxu0 0.0
      %2827 = vmatprep.subr.mxu0 0.0
      %2828 = vmatpush1.msra.mxu0 0.0
      %2829 = vmatprep.subr.mxu0 0.0
      %2830 = vmatpush1.msra.mxu0 0.0
      %2831 = vmatprep.subr.mxu0 0.0
      %2832 = vmatpush1.msra.mxu0 0.0
      %2833 = vmatprep.subr.mxu0 0.0
      %2834 = vmatpush1.msra.mxu0 0.0
      %2835 = vmatprep.subr.mxu0 0.0
      %2836 = vmatpush1.msra.mxu0 0.0
      %2837 = vmatprep.mubr.f32.mxu0 0.0
      %2838 = vmatmul.mubr.f32.gmra.mrb[0].mxu0 %v2675
      %v2839 = vpop.f32.mrb[0].mxu0
      %v2840 = vadd.f32 0.0, %v2839
      %v2841 = vpop.f32.mrb[0].mxu0
      %2842 = vmatprep.mubr.f32.mxu0 0.0
      %2843 = vmatmul.mubr.f32.gmra.mrb[0].mxu0 %v2678
      %v2844 = vpop.f32.mrb[0].mxu0
      %v2845 = vadd.f32 0.0, %v2844
      %v2846 = vpop.f32.mrb[0].mxu0
      %2847 = vmatprep.mubr.f32.mxu0 0.0
      %2848 = vmatmul.mubr.f32.gmra.mrb[0].mxu0 %v2681
      %v2849 = vpop.f32.mrb[0].mxu0
      %v2850 = vadd.f32 0.0, %v2849
      %v2851 = vpop.f32.mrb[0].mxu0
      %2852 = vmatprep.mubr.f32.mxu0 0.0
      %2853 = vmatmul.mubr.f32.gmra.mrb[0].mxu0 %v2684
      %v2854 = vpop.f32.mrb[0].mxu0
      %v2855 = vadd.f32 0.0, %v2854
      %v2856 = vpop.f32.mrb[0].mxu0
      %2857 = vmatprep.mubr.f32.mxu0 0.0
      %2858 = vmatmul.mubr.f32.gmra.mrb[0].mxu0 %v2687
      %v2859 = vpop.f32.mrb[0].mxu0
      %v2860 = vadd.f32 0.0, %v2859
      %v2861 = vpop.f32.mrb[0].mxu0
      %2862 = vmatprep.mubr.f32.mxu0 0.0
      %2863 = vmatmul.mubr.f32.gmra.mrb[0].mxu0 %v2690
      %v2864 = vpop.f32.mrb[0].mxu0
      %v2865 = vadd.f32 0.0, %v2864
      %v2866 = vpop.f32.mrb[0].mxu0
      %2867 = vmatprep.mubr.f32.mxu0 0.0
      %2868 = vmatmul.mubr.f32.gmra.mrb[0].mxu0 %v2693
      %v2869 = vpop.f32.mrb[0].mxu0
      %v2870 = vadd.f32 0.0, %v2869
      %v2871 = vpop.f32.mrb[0].mxu0
      %2872 = vmatprep.mubr.f32.mxu0 0.0
      %2873 = vmatmul.mubr.f32.gmra.mrb[0].mxu0 %v2696
      %v2874 = vpop.f32.mrb[0].mxu0
      %v2875 = vadd.f32 0.0, %v2874
      %v2876 = vpop.f32.mrb[0].mxu0
      %2877 = vmatprep.mubr.f32.mxu0 0.0
      %2878 = vmatmul.mubr.f32.gmra.mrb[0].mxu0 %v2699
      %v2879 = vpop.f32.mrb[0].mxu0
      %v2880 = vadd.f32 0.0, %v2879
      %v2881 = vpop.f32.mrb[0].mxu0
      %2882 = vmatprep.mubr.f32.mxu0 0.0
      %2883 = vmatmul.mubr.f32.gmra.mrb[0].mxu0 %v2702
      %v2884 = vpop.f32.mrb[0].mxu0
      %v2885 = vadd.f32 0.0, %v2884
      %v2886 = vpop.f32.mrb[0].mxu0
      %2887 = vmatprep.mubr.f32.mxu0 0.0
      %2888 = vmatmul.mubr.f32.gmra.mrb[0].mxu0 %v2705
      %v2889 = vpop.f32.mrb[0].mxu0
      %v2890 = vadd.f32 0.0, %v2889
      %v2891 = vpop.f32.mrb[0].mxu0
      %2892 = vmatprep.mubr.f32.mxu0 0.0
      %2893 = vmatmul.mubr.f32.gmra.mrb[0].mxu0 %v2708
      %v2894 = vpop.f32.mrb[0].mxu0
      %v2895 = vadd.f32 0.0, %v2894
      %v2896 = vpop.f32.mrb[0].mxu0
      %2897 = vmatprep.mubr.f32.mxu0 0.0
      %2898 = vmatmul.mubr.f32.gmra.mrb[0].mxu0 %v2711
      %v2899 = vpop.f32.mrb[0].mxu0
      %v2900 = vadd.f32 0.0, %v2899
      %v2901 = vpop.f32.mrb[0].mxu0
      %2902 = vmatprep.mubr.f32.mxu0 0.0
      %2903 = vmatmul.mubr.f32.gmra.mrb[0].mxu0 %v2714
      %v2904 = vpop.f32.mrb[0].mxu0
      %v2905 = vadd.f32 0.0, %v2904
      %v2906 = vpop.f32.mrb[0].mxu0
      %2907 = vmatprep.mubr.f32.mxu0 0.0
      %2908 = vmatmul.mubr.f32.gmra.mrb[0].mxu0 %v2717
      %v2909 = vpop.f32.mrb[0].mxu0
      %v2910 = vadd.f32 0.0, %v2909
      %v2911 = vpop.f32.mrb[0].mxu0
      %2912 = vmatprep.mubr.f32.mxu0 0.0
      %2913 = vmatmul.mubr.f32.gmra.mrb[0].mxu0 %v2720
      %v2914 = vpop.f32.mrb[0].mxu0
      %v2915 = vadd.f32 0.0, %v2914
      %v2916 = vpop.f32.mrb[0].mxu0
      %2917 = vmatprep.mubr.f32.mxu0 0.0
      %2918 = vmatmul.mubr.f32.gmra.mrb[0].mxu0 %v2723
      %v2919 = vpop.f32.mrb[0].mxu0
      %v2920 = vadd.f32 0.0, %v2919
      %v2921 = vpop.f32.mrb[0].mxu0
      %2922 = vmatprep.mubr.f32.mxu0 0.0
      %2923 = vmatmul.mubr.f32.gmra.mrb[0].mxu0 %v2726
      %v2924 = vpop.f32.mrb[0].mxu0
      %v2925 = vadd.f32 0.0, %v2924
      %v2926 = vpop.f32.mrb[0].mxu0
      %2927 = vmatprep.mubr.f32.mxu0 0.0
      %2928 = vmatmul.mubr.f32.gmra.mrb[0].mxu0 %v2729
      %v2929 = vpop.f32.mrb[0].mxu0
      %v2930 = vadd.f32 0.0, %v2929
      %v2931 = vpop.f32.mrb[0].mxu0
      %2932 = vmatprep.mubr.f32.mxu0 0.0
      %2933 = vmatmul.mubr.f32.gmra.mrb[0].mxu0 %v2732
      %v2934 = vpop.f32.mrb[0].mxu0
      %v2935 = vadd.f32 0.0, %v2934
      %v2936 = vpop.f32.mrb[0].mxu0
      %2937 = vmatprep.mubr.f32.mxu0 0.0
      %2938 = vmatmul.mubr.f32.gmra.mrb[0].mxu0 %v2735
      %v2939 = vpop.f32.mrb[0].mxu0
      %v2940 = vadd.f32 0.0, %v2939
      %v2941 = vpop.f32.mrb[0].mxu0
      %2942 = vmatprep.mubr.f32.mxu0 0.0
      %2943 = vmatmul.mubr.f32.gmra.mrb[0].mxu0 %v2738
      %v2944 = vpop.f32.mrb[0].mxu0
      %v2945 = vadd.f32 0.0, %v2944
      %v2946 = vpop.f32.mrb[0].mxu0
      %2947 = vmatprep.mubr.f32.mxu0 0.0
      %2948 = vmatmul.mubr.f32.gmra.mrb[0].mxu0 %v2741
      %v2949 = vpop.f32.mrb[0].mxu0
      %v2950 = vadd.f32 0.0, %v2949
      %v2951 = vpop.f32.mrb[0].mxu0
      %2952 = vmatprep.mubr.f32.mxu0 0.0
      %2953 = vmatmul.mubr.f32.gmra.mrb[0].mxu0 %v2744
      %v2954 = vpop.f32.mrb[0].mxu0
      %v2955 = vadd.f32 0.0, %v2954
      %v2956 = vpop.f32.mrb[0].mxu0
      %2957 = vmatprep.mubr.f32.mxu0 0.0
      %2958 = vmatmul.mubr.f32.gmra.mrb[0].mxu0 %v2747
      %v2959 = vpop.f32.mrb[0].mxu0
      %v2960 = vadd.f32 0.0, %v2959
      %v2961 = vpop.f32.mrb[0].mxu0
      %2962 = vmatprep.mubr.f32.mxu0 0.0
      %2963 = vmatmul.mubr.f32.gmra.mrb[0].mxu0 %v2750
      %v2964 = vpop.f32.mrb[0].mxu0
      %v2965 = vadd.f32 0.0, %v2964
      %v2966 = vpop.f32.mrb[0].mxu0
      %2967 = vmatprep.mubr.f32.mxu0 0.0
      %2968 = vmatmul.mubr.f32.gmra.mrb[0].mxu0 %v2753
      %v2969 = vpop.f32.mrb[0].mxu0
      %v2970 = vadd.f32 0.0, %v2969
      %v2971 = vpop.f32.mrb[0].mxu0
      %2972 = vmatprep.mubr.f32.mxu0 0.0
      %2973 = vmatmul.mubr.f32.gmra.mrb[0].mxu0 %v2756
      %v2974 = vpop.f32.mrb[0].mxu0
      %v2975 = vadd.f32 0.0, %v2974
      %v2976 = vpop.f32.mrb[0].mxu0
      %2977 = vmatprep.mubr.f32.mxu0 0.0
      %2978 = vmatmul.mubr.f32.gmra.mrb[0].mxu0 %v2759
      %v2979 = vpop.f32.mrb[0].mxu0
      %v2980 = vadd.f32 0.0, %v2979
      %v2981 = vpop.f32.mrb[0].mxu0
      %2982 = vmatprep.mubr.f32.mxu0 0.0
      %2983 = vmatmul.mubr.f32.gmra.mrb[0].mxu0 %v2762
      %v2984 = vpop.f32.mrb[0].mxu0
      %v2985 = vadd.f32 0.0, %v2984
      %v2986 = vpop.f32.mrb[0].mxu0
      %2987 = vmatprep.mubr.f32.mxu0 0.0
      %2988 = vmatmul.mubr.f32.gmra.mrb[0].mxu0 %v2765
      %v2989 = vpop.f32.mrb[0].mxu0
      %v2990 = vadd.f32 0.0, %v2989
      %v2991 = vpop.f32.mrb[0].mxu0
      %2992 = vmatprep.mubr.f32.mxu0 0.0
      %2993 = vmatmul.mubr.f32.gmra.mrb[0].mxu0 %v2768
      %v2994 = vpop.f32.mrb[0].mxu0
      %v2995 = vadd.f32 0.0, %v2994
      %v2996 = vpop.f32.mrb[0].mxu0
      %2997 = vdwg.mxu0
      %v2998 = vadd.f32 %v2608, %v2840
      %v2999 = vadd.f32 %v2609, %v2845
      %v3000 = vadd.f32 %v2610, %v2850
      %v3001 = vadd.f32 %v2611, %v2855
      %v3002 = vadd.f32 %v2612, %v2860
      %v3003 = vadd.f32 %v2613, %v2865
      %v3004 = vadd.f32 %v2614, %v2870
      %v3005 = vadd.f32 %v2615, %v2875
      %v3006 = vadd.f32 %v2616, %v2880
      %v3007 = vadd.f32 %v2617, %v2885
      %v3008 = vadd.f32 %v2618, %v2890
      %v3009 = vadd.f32 %v2619, %v2895
      %v3010 = vadd.f32 %v2620, %v2900
      %v3011 = vadd.f32 %v2621, %v2905
      %v3012 = vadd.f32 %v2622, %v2910
      %v3013 = vadd.f32 %v2623, %v2915
      %v3014 = vadd.f32 %v2624, %v2920
      %v3015 = vadd.f32 %v2625, %v2925
      %v3016 = vadd.f32 %v2626, %v2930
      %v3017 = vadd.f32 %v2627, %v2935
      %v3018 = vadd.f32 %v2628, %v2940
      %v3019 = vadd.f32 %v2629, %v2945
      %v3020 = vadd.f32 %v2630, %v2950
      %v3021 = vadd.f32 %v2631, %v2955
      %v3022 = vadd.f32 %v2632, %v2960
      %v3023 = vadd.f32 %v2633, %v2965
      %v3024 = vadd.f32 %v2634, %v2970
      %v3025 = vadd.f32 %v2635, %v2975
      %v3026 = vadd.f32 %v2636, %v2980
      %v3027 = vadd.f32 %v2637, %v2985
      %v3028 = vadd.f32 %v2638, %v2990
      %v3029 = vadd.f32 %v2639, %v2995
      %s3030 = scalar_lea.vmem [#allocation2], 48
      %v3031 = vld [vmem:[%s3030] sm:$0xff]
      %v3032 = vld [vmem:[%s3030 + $0x8] sm:$0xff]
      %v3033 = vld [vmem:[%s3030 + $0x18] sm:$0xff]
      %v3034 = vld [vmem:[%s3030 + $0x20] sm:$0xff]
      %v3035 = vld [vmem:[%s3030 + $0x30] sm:$0xff]
      %v3036 = vld [vmem:[%s3030 + $0x38] sm:$0xff]
      %v3037 = vld [vmem:[%s3030 + $0x48] sm:$0xff]
      %v3038 = vld [vmem:[%s3030 + $0x50] sm:$0xff]
      %v3039 = vld [vmem:[%s3030 + $0x60] sm:$0xff]
      %v3040 = vld [vmem:[%s3030 + $0x68] sm:$0xff]
      %v3041 = vld [vmem:[%s3030 + $0x78] sm:$0xff]
      %v3042 = vld [vmem:[%s3030 + $0x80] sm:$0xff]
      %v3043 = vld [vmem:[%s3030 + $0x90] sm:$0xff]
      %v3044 = vld [vmem:[%s3030 + $0x98] sm:$0xff]
      %v3045 = vld [vmem:[%s3030 + $0xa8] sm:$0xff]
      %v3046 = vld [vmem:[%s3030 + $0xb0] sm:$0xff]
      %v3047 = vld [vmem:[%s3030 + $0xc0] sm:$0xff]
      %v3048 = vld [vmem:[%s3030 + $0xc8] sm:$0xff]
      %v3049 = vld [vmem:[%s3030 + $0xd8] sm:$0xff]
      %v3050 = vld [vmem:[%s3030 + $0xe0] sm:$0xff]
      %v3051 = vld [vmem:[%s3030 + $0xf0] sm:$0xff]
      %v3052 = vld [vmem:[%s3030 + $0xf8] sm:$0xff]
      %v3053 = vld [vmem:[%s3030 + $0x108] sm:$0xff]
      %v3054 = vld [vmem:[%s3030 + $0x110] sm:$0xff]
      %v3055 = vld [vmem:[%s3030 + $0x120] sm:$0xff]
      %v3056 = vld [vmem:[%s3030 + $0x128] sm:$0xff]
      %v3057 = vld [vmem:[%s3030 + $0x138] sm:$0xff]
      %v3058 = vld [vmem:[%s3030 + $0x140] sm:$0xff]
      %v3059 = vld [vmem:[%s3030 + $0x150] sm:$0xff]
      %v3060 = vld [vmem:[%s3030 + $0x158] sm:$0xff]
      %v3061 = vld [vmem:[%s3030 + $0x168] sm:$0xff]
      %v3062 = vld [vmem:[%s3030 + $0x170] sm:$0xff]
      %s3063 = scalar_lea.vmem %s3, 24
      %v3064 = vld [vmem:[%s3063] sm:$0xf]
      %v3066 = vsel %vm319, %v3031, 0
      %v3069 = vsel %vm319, %v3032, 0
      %v3072 = vsel %vm319, %v3033, 0
      %v3075 = vsel %vm319, %v3034, 0
      %v3078 = vsel %vm319, %v3035, 0
      %v3081 = vsel %vm319, %v3036, 0
      %v3084 = vsel %vm319, %v3037, 0
      %v3087 = vsel %vm319, %v3038, 0
      %v3090 = vsel %vm319, %v3039, 0
      %v3093 = vsel %vm319, %v3040, 0
      %v3096 = vsel %vm319, %v3041, 0
      %v3099 = vsel %vm319, %v3042, 0
      %v3102 = vsel %vm319, %v3043, 0
      %v3105 = vsel %vm319, %v3044, 0
      %v3108 = vsel %vm319, %v3045, 0
      %v3111 = vsel %vm319, %v3046, 0
      %v3114 = vsel %vm319, %v3047, 0
      %v3117 = vsel %vm319, %v3048, 0
      %v3120 = vsel %vm319, %v3049, 0
      %v3123 = vsel %vm319, %v3050, 0
      %v3126 = vsel %vm319, %v3051, 0
      %v3129 = vsel %vm319, %v3052, 0
      %v3132 = vsel %vm319, %v3053, 0
      %v3135 = vsel %vm319, %v3054, 0
      %v3138 = vsel %vm319, %v3055, 0
      %v3141 = vsel %vm319, %v3056, 0
      %v3144 = vsel %vm319, %v3057, 0
      %v3147 = vsel %vm319, %v3058, 0
      %v3150 = vsel %vm319, %v3059, 0
      %v3153 = vsel %vm319, %v3060, 0
      %v3156 = vsel %vm319, %v3061, 0
      %v3159 = vsel %vm319, %v3062, 0
      %v3162 = vsel %vm416, %v3064, 0
      %3164 = vmatprep.subr.mxu0 0.0
      %3165 = vmatpush1.msra.mxu0 %v3162
      %3166 = vmatprep.subr.mxu0 0.0
      %3167 = vmatpush1.msra.mxu0 0.0
      %3168 = vmatprep.subr.mxu0 0.0
      %3169 = vmatpush1.msra.mxu0 0.0
      %3170 = vmatprep.subr.mxu0 0.0
      %3171 = vmatpush1.msra.mxu0 0.0
      %3172 = vmatprep.subr.mxu0 0.0
      %3173 = vmatpush1.msra.mxu0 0.0
      %3174 = vmatprep.subr.mxu0 0.0
      %3175 = vmatpush1.msra.mxu0 0.0
      %3176 = vmatprep.subr.mxu0 0.0
      %3177 = vmatpush1.msra.mxu0 0.0
      %3178 = vmatprep.subr.mxu0 0.0
      %3179 = vmatpush1.msra.mxu0 0.0
      %3180 = vmatprep.subr.mxu0 0.0
      %3181 = vmatpush1.msra.mxu0 0.0
      %3182 = vmatprep.subr.mxu0 0.0
      %3183 = vmatpush1.msra.mxu0 0.0
      %3184 = vmatprep.subr.mxu0 0.0
      %3185 = vmatpush1.msra.mxu0 0.0
      %3186 = vmatprep.subr.mxu0 0.0
      %3187 = vmatpush1.msra.mxu0 0.0
      %3188 = vmatprep.subr.mxu0 0.0
      %3189 = vmatpush1.msra.mxu0 0.0
      %3190 = vmatprep.subr.mxu0 0.0
      %3191 = vmatpush1.msra.mxu0 0.0
      %3192 = vmatprep.subr.mxu0 0.0
      %3193 = vmatpush1.msra.mxu0 0.0
      %3194 = vmatprep.subr.mxu0 0.0
      %3195 = vmatpush1.msra.mxu0 0.0
      %3196 = vmatprep.subr.mxu0 0.0
      %3197 = vmatpush1.msra.mxu0 0.0
      %3198 = vmatprep.subr.mxu0 0.0
      %3199 = vmatpush1.msra.mxu0 0.0
      %3200 = vmatprep.subr.mxu0 0.0
      %3201 = vmatpush1.msra.mxu0 0.0
      %3202 = vmatprep.subr.mxu0 0.0
      %3203 = vmatpush1.msra.mxu0 0.0
      %3204 = vmatprep.subr.mxu0 0.0
      %3205 = vmatpush1.msra.mxu0 0.0
      %3206 = vmatprep.subr.mxu0 0.0
      %3207 = vmatpush1.msra.mxu0 0.0
      %3208 = vmatprep.subr.mxu0 0.0
      %3209 = vmatpush1.msra.mxu0 0.0
      %3210 = vmatprep.subr.mxu0 0.0
      %3211 = vmatpush1.msra.mxu0 0.0
      %3212 = vmatprep.subr.mxu0 0.0
      %3213 = vmatpush1.msra.mxu0 0.0
      %3214 = vmatprep.subr.mxu0 0.0
      %3215 = vmatpush1.msra.mxu0 0.0
      %3216 = vmatprep.subr.mxu0 0.0
      %3217 = vmatpush1.msra.mxu0 0.0
      %3218 = vmatprep.subr.mxu0 0.0
      %3219 = vmatpush1.msra.mxu0 0.0
      %3220 = vmatprep.subr.mxu0 0.0
      %3221 = vmatpush1.msra.mxu0 0.0
      %3222 = vmatprep.subr.mxu0 0.0
      %3223 = vmatpush1.msra.mxu0 0.0
      %3224 = vmatprep.subr.mxu0 0.0
      %3225 = vmatpush1.msra.mxu0 0.0
      %3226 = vmatprep.subr.mxu0 0.0
      %3227 = vmatpush1.msra.mxu0 0.0
      %3228 = vmatprep.mubr.f32.mxu0 0.0
      %3229 = vmatmul.mubr.f32.gmra.mrb[0].mxu0 %v3066
      %v3230 = vpop.f32.mrb[0].mxu0
      %v3231 = vadd.f32 0.0, %v3230
      %v3232 = vpop.f32.mrb[0].mxu0
      %3233 = vmatprep.mubr.f32.mxu0 0.0
      %3234 = vmatmul.mubr.f32.gmra.mrb[0].mxu0 %v3069
      %v3235 = vpop.f32.mrb[0].mxu0
      %v3236 = vadd.f32 0.0, %v3235
      %v3237 = vpop.f32.mrb[0].mxu0
      %3238 = vmatprep.mubr.f32.mxu0 0.0
      %3239 = vmatmul.mubr.f32.gmra.mrb[0].mxu0 %v3072
      %v3240 = vpop.f32.mrb[0].mxu0
      %v3241 = vadd.f32 0.0, %v3240
      %v3242 = vpop.f32.mrb[0].mxu0
      %3243 = vmatprep.mubr.f32.mxu0 0.0
      %3244 = vmatmul.mubr.f32.gmra.mrb[0].mxu0 %v3075
      %v3245 = vpop.f32.mrb[0].mxu0
      %v3246 = vadd.f32 0.0, %v3245
      %v3247 = vpop.f32.mrb[0].mxu0
      %3248 = vmatprep.mubr.f32.mxu0 0.0
      %3249 = vmatmul.mubr.f32.gmra.mrb[0].mxu0 %v3078
      %v3250 = vpop.f32.mrb[0].mxu0
      %v3251 = vadd.f32 0.0, %v3250
      %v3252 = vpop.f32.mrb[0].mxu0
      %3253 = vmatprep.mubr.f32.mxu0 0.0
      %3254 = vmatmul.mubr.f32.gmra.mrb[0].mxu0 %v3081
      %v3255 = vpop.f32.mrb[0].mxu0
      %v3256 = vadd.f32 0.0, %v3255
      %v3257 = vpop.f32.mrb[0].mxu0
      %3258 = vmatprep.mubr.f32.mxu0 0.0
      %3259 = vmatmul.mubr.f32.gmra.mrb[0].mxu0 %v3084
      %v3260 = vpop.f32.mrb[0].mxu0
      %v3261 = vadd.f32 0.0, %v3260
      %v3262 = vpop.f32.mrb[0].mxu0
      %3263 = vmatprep.mubr.f32.mxu0 0.0
      %3264 = vmatmul.mubr.f32.gmra.mrb[0].mxu0 %v3087
      %v3265 = vpop.f32.mrb[0].mxu0
      %v3266 = vadd.f32 0.0, %v3265
      %v3267 = vpop.f32.mrb[0].mxu0
      %3268 = vmatprep.mubr.f32.mxu0 0.0
      %3269 = vmatmul.mubr.f32.gmra.mrb[0].mxu0 %v3090
      %v3270 = vpop.f32.mrb[0].mxu0
      %v3271 = vadd.f32 0.0, %v3270
      %v3272 = vpop.f32.mrb[0].mxu0
      %3273 = vmatprep.mubr.f32.mxu0 0.0
      %3274 = vmatmul.mubr.f32.gmra.mrb[0].mxu0 %v3093
      %v3275 = vpop.f32.mrb[0].mxu0
      %v3276 = vadd.f32 0.0, %v3275
      %v3277 = vpop.f32.mrb[0].mxu0
      %3278 = vmatprep.mubr.f32.mxu0 0.0
      %3279 = vmatmul.mubr.f32.gmra.mrb[0].mxu0 %v3096
      %v3280 = vpop.f32.mrb[0].mxu0
      %v3281 = vadd.f32 0.0, %v3280
      %v3282 = vpop.f32.mrb[0].mxu0
      %3283 = vmatprep.mubr.f32.mxu0 0.0
      %3284 = vmatmul.mubr.f32.gmra.mrb[0].mxu0 %v3099
      %v3285 = vpop.f32.mrb[0].mxu0
      %v3286 = vadd.f32 0.0, %v3285
      %v3287 = vpop.f32.mrb[0].mxu0
      %3288 = vmatprep.mubr.f32.mxu0 0.0
      %3289 = vmatmul.mubr.f32.gmra.mrb[0].mxu0 %v3102
      %v3290 = vpop.f32.mrb[0].mxu0
      %v3291 = vadd.f32 0.0, %v3290
      %v3292 = vpop.f32.mrb[0].mxu0
      %3293 = vmatprep.mubr.f32.mxu0 0.0
      %3294 = vmatmul.mubr.f32.gmra.mrb[0].mxu0 %v3105
      %v3295 = vpop.f32.mrb[0].mxu0
      %v3296 = vadd.f32 0.0, %v3295
      %v3297 = vpop.f32.mrb[0].mxu0
      %3298 = vmatprep.mubr.f32.mxu0 0.0
      %3299 = vmatmul.mubr.f32.gmra.mrb[0].mxu0 %v3108
      %v3300 = vpop.f32.mrb[0].mxu0
      %v3301 = vadd.f32 0.0, %v3300
      %v3302 = vpop.f32.mrb[0].mxu0
      %3303 = vmatprep.mubr.f32.mxu0 0.0
      %3304 = vmatmul.mubr.f32.gmra.mrb[0].mxu0 %v3111
      %v3305 = vpop.f32.mrb[0].mxu0
      %v3306 = vadd.f32 0.0, %v3305
      %v3307 = vpop.f32.mrb[0].mxu0
      %3308 = vmatprep.mubr.f32.mxu0 0.0
      %3309 = vmatmul.mubr.f32.gmra.mrb[0].mxu0 %v3114
      %v3310 = vpop.f32.mrb[0].mxu0
      %v3311 = vadd.f32 0.0, %v3310
      %v3312 = vpop.f32.mrb[0].mxu0
      %3313 = vmatprep.mubr.f32.mxu0 0.0
      %3314 = vmatmul.mubr.f32.gmra.mrb[0].mxu0 %v3117
      %v3315 = vpop.f32.mrb[0].mxu0
      %v3316 = vadd.f32 0.0, %v3315
      %v3317 = vpop.f32.mrb[0].mxu0
      %3318 = vmatprep.mubr.f32.mxu0 0.0
      %3319 = vmatmul.mubr.f32.gmra.mrb[0].mxu0 %v3120
      %v3320 = vpop.f32.mrb[0].mxu0
      %v3321 = vadd.f32 0.0, %v3320
      %v3322 = vpop.f32.mrb[0].mxu0
      %3323 = vmatprep.mubr.f32.mxu0 0.0
      %3324 = vmatmul.mubr.f32.gmra.mrb[0].mxu0 %v3123
      %v3325 = vpop.f32.mrb[0].mxu0
      %v3326 = vadd.f32 0.0, %v3325
      %v3327 = vpop.f32.mrb[0].mxu0
      %3328 = vmatprep.mubr.f32.mxu0 0.0
      %3329 = vmatmul.mubr.f32.gmra.mrb[0].mxu0 %v3126
      %v3330 = vpop.f32.mrb[0].mxu0
      %v3331 = vadd.f32 0.0, %v3330
      %v3332 = vpop.f32.mrb[0].mxu0
      %3333 = vmatprep.mubr.f32.mxu0 0.0
      %3334 = vmatmul.mubr.f32.gmra.mrb[0].mxu0 %v3129
      %v3335 = vpop.f32.mrb[0].mxu0
      %v3336 = vadd.f32 0.0, %v3335
      %v3337 = vpop.f32.mrb[0].mxu0
      %3338 = vmatprep.mubr.f32.mxu0 0.0
      %3339 = vmatmul.mubr.f32.gmra.mrb[0].mxu0 %v3132
      %v3340 = vpop.f32.mrb[0].mxu0
      %v3341 = vadd.f32 0.0, %v3340
      %v3342 = vpop.f32.mrb[0].mxu0
      %3343 = vmatprep.mubr.f32.mxu0 0.0
      %3344 = vmatmul.mubr.f32.gmra.mrb[0].mxu0 %v3135
      %v3345 = vpop.f32.mrb[0].mxu0
      %v3346 = vadd.f32 0.0, %v3345
      %v3347 = vpop.f32.mrb[0].mxu0
      %3348 = vmatprep.mubr.f32.mxu0 0.0
      %3349 = vmatmul.mubr.f32.gmra.mrb[0].mxu0 %v3138
      %v3350 = vpop.f32.mrb[0].mxu0
      %v3351 = vadd.f32 0.0, %v3350
      %v3352 = vpop.f32.mrb[0].mxu0
      %3353 = vmatprep.mubr.f32.mxu0 0.0
      %3354 = vmatmul.mubr.f32.gmra.mrb[0].mxu0 %v3141
      %v3355 = vpop.f32.mrb[0].mxu0
      %v3356 = vadd.f32 0.0, %v3355
      %v3357 = vpop.f32.mrb[0].mxu0
      %3358 = vmatprep.mubr.f32.mxu0 0.0
      %3359 = vmatmul.mubr.f32.gmra.mrb[0].mxu0 %v3144
      %v3360 = vpop.f32.mrb[0].mxu0
      %v3361 = vadd.f32 0.0, %v3360
      %v3362 = vpop.f32.mrb[0].mxu0
      %3363 = vmatprep.mubr.f32.mxu0 0.0
      %3364 = vmatmul.mubr.f32.gmra.mrb[0].mxu0 %v3147
      %v3365 = vpop.f32.mrb[0].mxu0
      %v3366 = vadd.f32 0.0, %v3365
      %v3367 = vpop.f32.mrb[0].mxu0
      %3368 = vmatprep.mubr.f32.mxu0 0.0
      %3369 = vmatmul.mubr.f32.gmra.mrb[0].mxu0 %v3150
      %v3370 = vpop.f32.mrb[0].mxu0
      %v3371 = vadd.f32 0.0, %v3370
      %v3372 = vpop.f32.mrb[0].mxu0
      %3373 = vmatprep.mubr.f32.mxu0 0.0
      %3374 = vmatmul.mubr.f32.gmra.mrb[0].mxu0 %v3153
      %v3375 = vpop.f32.mrb[0].mxu0
      %v3376 = vadd.f32 0.0, %v3375
      %v3377 = vpop.f32.mrb[0].mxu0
      %3378 = vmatprep.mubr.f32.mxu0 0.0
      %3379 = vmatmul.mubr.f32.gmra.mrb[0].mxu0 %v3156
      %v3380 = vpop.f32.mrb[0].mxu0
      %v3381 = vadd.f32 0.0, %v3380
      %v3382 = vpop.f32.mrb[0].mxu0
      %3383 = vmatprep.mubr.f32.mxu0 0.0
      %3384 = vmatmul.mubr.f32.gmra.mrb[0].mxu0 %v3159
      %v3385 = vpop.f32.mrb[0].mxu0
      %v3386 = vadd.f32 0.0, %v3385
      %v3387 = vpop.f32.mrb[0].mxu0
      %3388 = vdwg.mxu0
      %v3389 = vadd.f32 %v2998, %v3231
      %v3390 = vadd.f32 %v2999, %v3236
      %v3391 = vadd.f32 %v3000, %v3241
      %v3392 = vadd.f32 %v3001, %v3246
      %v3393 = vadd.f32 %v3002, %v3251
      %v3394 = vadd.f32 %v3003, %v3256
      %v3395 = vadd.f32 %v3004, %v3261
      %v3396 = vadd.f32 %v3005, %v3266
      %v3397 = vadd.f32 %v3006, %v3271
      %v3398 = vadd.f32 %v3007, %v3276
      %v3399 = vadd.f32 %v3008, %v3281
      %v3400 = vadd.f32 %v3009, %v3286
      %v3401 = vadd.f32 %v3010, %v3291
      %v3402 = vadd.f32 %v3011, %v3296
      %v3403 = vadd.f32 %v3012, %v3301
      %v3404 = vadd.f32 %v3013, %v3306
      %v3405 = vadd.f32 %v3014, %v3311
      %v3406 = vadd.f32 %v3015, %v3316
      %v3407 = vadd.f32 %v3016, %v3321
      %v3408 = vadd.f32 %v3017, %v3326
      %v3409 = vadd.f32 %v3018, %v3331
      %v3410 = vadd.f32 %v3019, %v3336
      %v3411 = vadd.f32 %v3020, %v3341
      %v3412 = vadd.f32 %v3021, %v3346
      %v3413 = vadd.f32 %v3022, %v3351
      %v3414 = vadd.f32 %v3023, %v3356
      %v3415 = vadd.f32 %v3024, %v3361
      %v3416 = vadd.f32 %v3025, %v3366
      %v3417 = vadd.f32 %v3026, %v3371
      %v3418 = vadd.f32 %v3027, %v3376
      %v3419 = vadd.f32 %v3028, %v3381
      %v3420 = vadd.f32 %v3029, %v3386
      %v3421 = vld [vmem:[%s3030 + $0x1] sm:$0xff]
      %v3422 = vld [vmem:[%s3030 + $0x9] sm:$0xff]
      %v3423 = vld [vmem:[%s3030 + $0x19] sm:$0xff]
      %v3424 = vld [vmem:[%s3030 + $0x21] sm:$0xff]
      %v3425 = vld [vmem:[%s3030 + $0x31] sm:$0xff]
      %v3426 = vld [vmem:[%s3030 + $0x39] sm:$0xff]
      %v3427 = vld [vmem:[%s3030 + $0x49] sm:$0xff]
      %v3428 = vld [vmem:[%s3030 + $0x51] sm:$0xff]
      %v3429 = vld [vmem:[%s3030 + $0x61] sm:$0xff]
      %v3430 = vld [vmem:[%s3030 + $0x69] sm:$0xff]
      %v3431 = vld [vmem:[%s3030 + $0x79] sm:$0xff]
      %v3432 = vld [vmem:[%s3030 + $0x81] sm:$0xff]
      %v3433 = vld [vmem:[%s3030 + $0x91] sm:$0xff]
      %v3434 = vld [vmem:[%s3030 + $0x99] sm:$0xff]
      %v3435 = vld [vmem:[%s3030 + $0xa9] sm:$0xff]
      %v3436 = vld [vmem:[%s3030 + $0xb1] sm:$0xff]
      %v3437 = vld [vmem:[%s3030 + $0xc1] sm:$0xff]
      %v3438 = vld [vmem:[%s3030 + $0xc9] sm:$0xff]
      %v3439 = vld [vmem:[%s3030 + $0xd9] sm:$0xff]
      %v3440 = vld [vmem:[%s3030 + $0xe1] sm:$0xff]
      %v3441 = vld [vmem:[%s3030 + $0xf1] sm:$0xff]
      %v3442 = vld [vmem:[%s3030 + $0xf9] sm:$0xff]
      %v3443 = vld [vmem:[%s3030 + $0x109] sm:$0xff]
      %v3444 = vld [vmem:[%s3030 + $0x111] sm:$0xff]
      %v3445 = vld [vmem:[%s3030 + $0x121] sm:$0xff]
      %v3446 = vld [vmem:[%s3030 + $0x129] sm:$0xff]
      %v3447 = vld [vmem:[%s3030 + $0x139] sm:$0xff]
      %v3448 = vld [vmem:[%s3030 + $0x141] sm:$0xff]
      %v3449 = vld [vmem:[%s3030 + $0x151] sm:$0xff]
      %v3450 = vld [vmem:[%s3030 + $0x159] sm:$0xff]
      %v3451 = vld [vmem:[%s3030 + $0x169] sm:$0xff]
      %v3452 = vld [vmem:[%s3030 + $0x171] sm:$0xff]
      %s3453 = scalar_lea.vmem %s3, 28
      %v3454 = vld [vmem:[%s3453] sm:$0xf]
      %v3456 = vsel %vm319, %v3421, 0
      %v3459 = vsel %vm319, %v3422, 0
      %v3462 = vsel %vm319, %v3423, 0
      %v3465 = vsel %vm319, %v3424, 0
      %v3468 = vsel %vm319, %v3425, 0
      %v3471 = vsel %vm319, %v3426, 0
      %v3474 = vsel %vm319, %v3427, 0
      %v3477 = vsel %vm319, %v3428, 0
      %v3480 = vsel %vm319, %v3429, 0
      %v3483 = vsel %vm319, %v3430, 0
      %v3486 = vsel %vm319, %v3431, 0
      %v3489 = vsel %vm319, %v3432, 0
      %v3492 = vsel %vm319, %v3433, 0
      %v3495 = vsel %vm319, %v3434, 0
      %v3498 = vsel %vm319, %v3435, 0
      %v3501 = vsel %vm319, %v3436, 0
      %v3504 = vsel %vm319, %v3437, 0
      %v3507 = vsel %vm319, %v3438, 0
      %v3510 = vsel %vm319, %v3439, 0
      %v3513 = vsel %vm319, %v3440, 0
      %v3516 = vsel %vm319, %v3441, 0
      %v3519 = vsel %vm319, %v3442, 0
      %v3522 = vsel %vm319, %v3443, 0
      %v3525 = vsel %vm319, %v3444, 0
      %v3528 = vsel %vm319, %v3445, 0
      %v3531 = vsel %vm319, %v3446, 0
      %v3534 = vsel %vm319, %v3447, 0
      %v3537 = vsel %vm319, %v3448, 0
      %v3540 = vsel %vm319, %v3449, 0
      %v3543 = vsel %vm319, %v3450, 0
      %v3546 = vsel %vm319, %v3451, 0
      %v3549 = vsel %vm319, %v3452, 0
      %v3552 = vsel %vm416, %v3454, 0
      %3554 = vmatprep.subr.mxu0 0.0
      %3555 = vmatpush1.msra.mxu0 %v3552
      %3556 = vmatprep.subr.mxu0 0.0
      %3557 = vmatpush1.msra.mxu0 0.0
      %3558 = vmatprep.subr.mxu0 0.0
      %3559 = vmatpush1.msra.mxu0 0.0
      %3560 = vmatprep.subr.mxu0 0.0
      %3561 = vmatpush1.msra.mxu0 0.0
      %3562 = vmatprep.subr.mxu0 0.0
      %3563 = vmatpush1.msra.mxu0 0.0
      %3564 = vmatprep.subr.mxu0 0.0
      %3565 = vmatpush1.msra.mxu0 0.0
      %3566 = vmatprep.subr.mxu0 0.0
      %3567 = vmatpush1.msra.mxu0 0.0
      %3568 = vmatprep.subr.mxu0 0.0
      %3569 = vmatpush1.msra.mxu0 0.0
      %3570 = vmatprep.subr.mxu0 0.0
      %3571 = vmatpush1.msra.mxu0 0.0
      %3572 = vmatprep.subr.mxu0 0.0
      %3573 = vmatpush1.msra.mxu0 0.0
      %3574 = vmatprep.subr.mxu0 0.0
      %3575 = vmatpush1.msra.mxu0 0.0
      %3576 = vmatprep.subr.mxu0 0.0
      %3577 = vmatpush1.msra.mxu0 0.0
      %3578 = vmatprep.subr.mxu0 0.0
      %3579 = vmatpush1.msra.mxu0 0.0
      %3580 = vmatprep.subr.mxu0 0.0
      %3581 = vmatpush1.msra.mxu0 0.0
      %3582 = vmatprep.subr.mxu0 0.0
      %3583 = vmatpush1.msra.mxu0 0.0
      %3584 = vmatprep.subr.mxu0 0.0
      %3585 = vmatpush1.msra.mxu0 0.0
      %3586 = vmatprep.subr.mxu0 0.0
      %3587 = vmatpush1.msra.mxu0 0.0
      %3588 = vmatprep.subr.mxu0 0.0
      %3589 = vmatpush1.msra.mxu0 0.0
      %3590 = vmatprep.subr.mxu0 0.0
      %3591 = vmatpush1.msra.mxu0 0.0
      %3592 = vmatprep.subr.mxu0 0.0
      %3593 = vmatpush1.msra.mxu0 0.0
      %3594 = vmatprep.subr.mxu0 0.0
      %3595 = vmatpush1.msra.mxu0 0.0
      %3596 = vmatprep.subr.mxu0 0.0
      %3597 = vmatpush1.msra.mxu0 0.0
      %3598 = vmatprep.subr.mxu0 0.0
      %3599 = vmatpush1.msra.mxu0 0.0
      %3600 = vmatprep.subr.mxu0 0.0
      %3601 = vmatpush1.msra.mxu0 0.0
      %3602 = vmatprep.subr.mxu0 0.0
      %3603 = vmatpush1.msra.mxu0 0.0
      %3604 = vmatprep.subr.mxu0 0.0
      %3605 = vmatpush1.msra.mxu0 0.0
      %3606 = vmatprep.subr.mxu0 0.0
      %3607 = vmatpush1.msra.mxu0 0.0
      %3608 = vmatprep.subr.mxu0 0.0
      %3609 = vmatpush1.msra.mxu0 0.0
      %3610 = vmatprep.subr.mxu0 0.0
      %3611 = vmatpush1.msra.mxu0 0.0
      %3612 = vmatprep.subr.mxu0 0.0
      %3613 = vmatpush1.msra.mxu0 0.0
      %3614 = vmatprep.subr.mxu0 0.0
      %3615 = vmatpush1.msra.mxu0 0.0
      %3616 = vmatprep.subr.mxu0 0.0
      %3617 = vmatpush1.msra.mxu0 0.0
      %3618 = vmatprep.mubr.f32.mxu0 0.0
      %3619 = vmatmul.mubr.f32.gmra.mrb[0].mxu0 %v3456
      %v3620 = vpop.f32.mrb[0].mxu0
      %v3621 = vadd.f32 0.0, %v3620
      %v3622 = vpop.f32.mrb[0].mxu0
      %3623 = vmatprep.mubr.f32.mxu0 0.0
      %3624 = vmatmul.mubr.f32.gmra.mrb[0].mxu0 %v3459
      %v3625 = vpop.f32.mrb[0].mxu0
      %v3626 = vadd.f32 0.0, %v3625
      %v3627 = vpop.f32.mrb[0].mxu0
      %3628 = vmatprep.mubr.f32.mxu0 0.0
      %3629 = vmatmul.mubr.f32.gmra.mrb[0].mxu0 %v3462
      %v3630 = vpop.f32.mrb[0].mxu0
      %v3631 = vadd.f32 0.0, %v3630
      %v3632 = vpop.f32.mrb[0].mxu0
      %3633 = vmatprep.mubr.f32.mxu0 0.0
      %3634 = vmatmul.mubr.f32.gmra.mrb[0].mxu0 %v3465
      %v3635 = vpop.f32.mrb[0].mxu0
      %v3636 = vadd.f32 0.0, %v3635
      %v3637 = vpop.f32.mrb[0].mxu0
      %3638 = vmatprep.mubr.f32.mxu0 0.0
      %3639 = vmatmul.mubr.f32.gmra.mrb[0].mxu0 %v3468
      %v3640 = vpop.f32.mrb[0].mxu0
      %v3641 = vadd.f32 0.0, %v3640
      %v3642 = vpop.f32.mrb[0].mxu0
      %3643 = vmatprep.mubr.f32.mxu0 0.0
      %3644 = vmatmul.mubr.f32.gmra.mrb[0].mxu0 %v3471
      %v3645 = vpop.f32.mrb[0].mxu0
      %v3646 = vadd.f32 0.0, %v3645
      %v3647 = vpop.f32.mrb[0].mxu0
      %3648 = vmatprep.mubr.f32.mxu0 0.0
      %3649 = vmatmul.mubr.f32.gmra.mrb[0].mxu0 %v3474
      %v3650 = vpop.f32.mrb[0].mxu0
      %v3651 = vadd.f32 0.0, %v3650
      %v3652 = vpop.f32.mrb[0].mxu0
      %3653 = vmatprep.mubr.f32.mxu0 0.0
      %3654 = vmatmul.mubr.f32.gmra.mrb[0].mxu0 %v3477
      %v3655 = vpop.f32.mrb[0].mxu0
      %v3656 = vadd.f32 0.0, %v3655
      %v3657 = vpop.f32.mrb[0].mxu0
      %3658 = vmatprep.mubr.f32.mxu0 0.0
      %3659 = vmatmul.mubr.f32.gmra.mrb[0].mxu0 %v3480
      %v3660 = vpop.f32.mrb[0].mxu0
      %v3661 = vadd.f32 0.0, %v3660
      %v3662 = vpop.f32.mrb[0].mxu0
      %3663 = vmatprep.mubr.f32.mxu0 0.0
      %3664 = vmatmul.mubr.f32.gmra.mrb[0].mxu0 %v3483
      %v3665 = vpop.f32.mrb[0].mxu0
      %v3666 = vadd.f32 0.0, %v3665
      %v3667 = vpop.f32.mrb[0].mxu0
      %3668 = vmatprep.mubr.f32.mxu0 0.0
      %3669 = vmatmul.mubr.f32.gmra.mrb[0].mxu0 %v3486
      %v3670 = vpop.f32.mrb[0].mxu0
      %v3671 = vadd.f32 0.0, %v3670
      %v3672 = vpop.f32.mrb[0].mxu0
      %3673 = vmatprep.mubr.f32.mxu0 0.0
      %3674 = vmatmul.mubr.f32.gmra.mrb[0].mxu0 %v3489
      %v3675 = vpop.f32.mrb[0].mxu0
      %v3676 = vadd.f32 0.0, %v3675
      %v3677 = vpop.f32.mrb[0].mxu0
      %3678 = vmatprep.mubr.f32.mxu0 0.0
      %3679 = vmatmul.mubr.f32.gmra.mrb[0].mxu0 %v3492
      %v3680 = vpop.f32.mrb[0].mxu0
      %v3681 = vadd.f32 0.0, %v3680
      %v3682 = vpop.f32.mrb[0].mxu0
      %3683 = vmatprep.mubr.f32.mxu0 0.0
      %3684 = vmatmul.mubr.f32.gmra.mrb[0].mxu0 %v3495
      %v3685 = vpop.f32.mrb[0].mxu0
      %v3686 = vadd.f32 0.0, %v3685
      %v3687 = vpop.f32.mrb[0].mxu0
      %3688 = vmatprep.mubr.f32.mxu0 0.0
      %3689 = vmatmul.mubr.f32.gmra.mrb[0].mxu0 %v3498
      %v3690 = vpop.f32.mrb[0].mxu0
      %v3691 = vadd.f32 0.0, %v3690
      %v3692 = vpop.f32.mrb[0].mxu0
      %3693 = vmatprep.mubr.f32.mxu0 0.0
      %3694 = vmatmul.mubr.f32.gmra.mrb[0].mxu0 %v3501
      %v3695 = vpop.f32.mrb[0].mxu0
      %v3696 = vadd.f32 0.0, %v3695
      %v3697 = vpop.f32.mrb[0].mxu0
      %3698 = vmatprep.mubr.f32.mxu0 0.0
      %3699 = vmatmul.mubr.f32.gmra.mrb[0].mxu0 %v3504
      %v3700 = vpop.f32.mrb[0].mxu0
      %v3701 = vadd.f32 0.0, %v3700
      %v3702 = vpop.f32.mrb[0].mxu0
      %3703 = vmatprep.mubr.f32.mxu0 0.0
      %3704 = vmatmul.mubr.f32.gmra.mrb[0].mxu0 %v3507
      %v3705 = vpop.f32.mrb[0].mxu0
      %v3706 = vadd.f32 0.0, %v3705
      %v3707 = vpop.f32.mrb[0].mxu0
      %3708 = vmatprep.mubr.f32.mxu0 0.0
      %3709 = vmatmul.mubr.f32.gmra.mrb[0].mxu0 %v3510
      %v3710 = vpop.f32.mrb[0].mxu0
      %v3711 = vadd.f32 0.0, %v3710
      %v3712 = vpop.f32.mrb[0].mxu0
      %3713 = vmatprep.mubr.f32.mxu0 0.0
      %3714 = vmatmul.mubr.f32.gmra.mrb[0].mxu0 %v3513
      %v3715 = vpop.f32.mrb[0].mxu0
      %v3716 = vadd.f32 0.0, %v3715
      %v3717 = vpop.f32.mrb[0].mxu0
      %3718 = vmatprep.mubr.f32.mxu0 0.0
      %3719 = vmatmul.mubr.f32.gmra.mrb[0].mxu0 %v3516
      %v3720 = vpop.f32.mrb[0].mxu0
      %v3721 = vadd.f32 0.0, %v3720
      %v3722 = vpop.f32.mrb[0].mxu0
      %3723 = vmatprep.mubr.f32.mxu0 0.0
      %3724 = vmatmul.mubr.f32.gmra.mrb[0].mxu0 %v3519
      %v3725 = vpop.f32.mrb[0].mxu0
      %v3726 = vadd.f32 0.0, %v3725
      %v3727 = vpop.f32.mrb[0].mxu0
      %3728 = vmatprep.mubr.f32.mxu0 0.0
      %3729 = vmatmul.mubr.f32.gmra.mrb[0].mxu0 %v3522
      %v3730 = vpop.f32.mrb[0].mxu0
      %v3731 = vadd.f32 0.0, %v3730
      %v3732 = vpop.f32.mrb[0].mxu0
      %3733 = vmatprep.mubr.f32.mxu0 0.0
      %3734 = vmatmul.mubr.f32.gmra.mrb[0].mxu0 %v3525
      %v3735 = vpop.f32.mrb[0].mxu0
      %v3736 = vadd.f32 0.0, %v3735
      %v3737 = vpop.f32.mrb[0].mxu0
      %3738 = vmatprep.mubr.f32.mxu0 0.0
      %3739 = vmatmul.mubr.f32.gmra.mrb[0].mxu0 %v3528
      %v3740 = vpop.f32.mrb[0].mxu0
      %v3741 = vadd.f32 0.0, %v3740
      %v3742 = vpop.f32.mrb[0].mxu0
      %3743 = vmatprep.mubr.f32.mxu0 0.0
      %3744 = vmatmul.mubr.f32.gmra.mrb[0].mxu0 %v3531
      %v3745 = vpop.f32.mrb[0].mxu0
      %v3746 = vadd.f32 0.0, %v3745
      %v3747 = vpop.f32.mrb[0].mxu0
      %3748 = vmatprep.mubr.f32.mxu0 0.0
      %3749 = vmatmul.mubr.f32.gmra.mrb[0].mxu0 %v3534
      %v3750 = vpop.f32.mrb[0].mxu0
      %v3751 = vadd.f32 0.0, %v3750
      %v3752 = vpop.f32.mrb[0].mxu0
      %3753 = vmatprep.mubr.f32.mxu0 0.0
      %3754 = vmatmul.mubr.f32.gmra.mrb[0].mxu0 %v3537
      %v3755 = vpop.f32.mrb[0].mxu0
      %v3756 = vadd.f32 0.0, %v3755
      %v3757 = vpop.f32.mrb[0].mxu0
      %3758 = vmatprep.mubr.f32.mxu0 0.0
      %3759 = vmatmul.mubr.f32.gmra.mrb[0].mxu0 %v3540
      %v3760 = vpop.f32.mrb[0].mxu0
      %v3761 = vadd.f32 0.0, %v3760
      %v3762 = vpop.f32.mrb[0].mxu0
      %3763 = vmatprep.mubr.f32.mxu0 0.0
      %3764 = vmatmul.mubr.f32.gmra.mrb[0].mxu0 %v3543
      %v3765 = vpop.f32.mrb[0].mxu0
      %v3766 = vadd.f32 0.0, %v3765
      %v3767 = vpop.f32.mrb[0].mxu0
      %3768 = vmatprep.mubr.f32.mxu0 0.0
      %3769 = vmatmul.mubr.f32.gmra.mrb[0].mxu0 %v3546
      %v3770 = vpop.f32.mrb[0].mxu0
      %v3771 = vadd.f32 0.0, %v3770
      %v3772 = vpop.f32.mrb[0].mxu0
      %3773 = vmatprep.mubr.f32.mxu0 0.0
      %3774 = vmatmul.mubr.f32.gmra.mrb[0].mxu0 %v3549
      %v3775 = vpop.f32.mrb[0].mxu0
      %v3776 = vadd.f32 0.0, %v3775
      %v3777 = vpop.f32.mrb[0].mxu0
      %3778 = vdwg.mxu0
      %v3779 = vadd.f32 %v3389, %v3621
      %v3780 = vadd.f32 %v3390, %v3626
      %v3781 = vadd.f32 %v3391, %v3631
      %v3782 = vadd.f32 %v3392, %v3636
      %v3783 = vadd.f32 %v3393, %v3641
      %v3784 = vadd.f32 %v3394, %v3646
      %v3785 = vadd.f32 %v3395, %v3651
      %v3786 = vadd.f32 %v3396, %v3656
      %v3787 = vadd.f32 %v3397, %v3661
      %v3788 = vadd.f32 %v3398, %v3666
      %v3789 = vadd.f32 %v3399, %v3671
      %v3790 = vadd.f32 %v3400, %v3676
      %v3791 = vadd.f32 %v3401, %v3681
      %v3792 = vadd.f32 %v3402, %v3686
      %v3793 = vadd.f32 %v3403, %v3691
      %v3794 = vadd.f32 %v3404, %v3696
      %v3795 = vadd.f32 %v3405, %v3701
      %v3796 = vadd.f32 %v3406, %v3706
      %v3797 = vadd.f32 %v3407, %v3711
      %v3798 = vadd.f32 %v3408, %v3716
      %v3799 = vadd.f32 %v3409, %v3721
      %v3800 = vadd.f32 %v3410, %v3726
      %v3801 = vadd.f32 %v3411, %v3731
      %v3802 = vadd.f32 %v3412, %v3736
      %v3803 = vadd.f32 %v3413, %v3741
      %v3804 = vadd.f32 %v3414, %v3746
      %v3805 = vadd.f32 %v3415, %v3751
      %v3806 = vadd.f32 %v3416, %v3756
      %v3807 = vadd.f32 %v3417, %v3761
      %v3808 = vadd.f32 %v3418, %v3766
      %v3809 = vadd.f32 %v3419, %v3771
      %v3810 = vadd.f32 %v3420, %v3776
      %v3811 = vld [vmem:[%s3030 + $0x2] sm:$0xff]
      %v3812 = vld [vmem:[%s3030 + $0xa] sm:$0xff]
      %v3813 = vld [vmem:[%s3030 + $0x1a] sm:$0xff]
      %v3814 = vld [vmem:[%s3030 + $0x22] sm:$0xff]
      %v3815 = vld [vmem:[%s3030 + $0x32] sm:$0xff]
      %v3816 = vld [vmem:[%s3030 + $0x3a] sm:$0xff]
      %v3817 = vld [vmem:[%s3030 + $0x4a] sm:$0xff]
      %v3818 = vld [vmem:[%s3030 + $0x52] sm:$0xff]
      %v3819 = vld [vmem:[%s3030 + $0x62] sm:$0xff]
      %v3820 = vld [vmem:[%s3030 + $0x6a] sm:$0xff]
      %v3821 = vld [vmem:[%s3030 + $0x7a] sm:$0xff]
      %v3822 = vld [vmem:[%s3030 + $0x82] sm:$0xff]
      %v3823 = vld [vmem:[%s3030 + $0x92] sm:$0xff]
      %v3824 = vld [vmem:[%s3030 + $0x9a] sm:$0xff]
      %v3825 = vld [vmem:[%s3030 + $0xaa] sm:$0xff]
      %v3826 = vld [vmem:[%s3030 + $0xb2] sm:$0xff]
      %v3827 = vld [vmem:[%s3030 + $0xc2] sm:$0xff]
      %v3828 = vld [vmem:[%s3030 + $0xca] sm:$0xff]
      %v3829 = vld [vmem:[%s3030 + $0xda] sm:$0xff]
      %v3830 = vld [vmem:[%s3030 + $0xe2] sm:$0xff]
      %v3831 = vld [vmem:[%s3030 + $0xf2] sm:$0xff]
      %v3832 = vld [vmem:[%s3030 + $0xfa] sm:$0xff]
      %v3833 = vld [vmem:[%s3030 + $0x10a] sm:$0xff]
      %v3834 = vld [vmem:[%s3030 + $0x112] sm:$0xff]
      %v3835 = vld [vmem:[%s3030 + $0x122] sm:$0xff]
      %v3836 = vld [vmem:[%s3030 + $0x12a] sm:$0xff]
      %v3837 = vld [vmem:[%s3030 + $0x13a] sm:$0xff]
      %v3838 = vld [vmem:[%s3030 + $0x142] sm:$0xff]
      %v3839 = vld [vmem:[%s3030 + $0x152] sm:$0xff]
      %v3840 = vld [vmem:[%s3030 + $0x15a] sm:$0xff]
      %v3841 = vld [vmem:[%s3030 + $0x16a] sm:$0xff]
      %v3842 = vld [vmem:[%s3030 + $0x172] sm:$0xff]
      %s3843 = scalar_lea.vmem %s3, 32
      %v3844 = vld [vmem:[%s3843] sm:$0xf]
      %v3846 = vsel %vm319, %v3811, 0
      %v3849 = vsel %vm319, %v3812, 0
      %v3852 = vsel %vm319, %v3813, 0
      %v3855 = vsel %vm319, %v3814, 0
      %v3858 = vsel %vm319, %v3815, 0
      %v3861 = vsel %vm319, %v3816, 0
      %v3864 = vsel %vm319, %v3817, 0
      %v3867 = vsel %vm319, %v3818, 0
      %v3870 = vsel %vm319, %v3819, 0
      %v3873 = vsel %vm319, %v3820, 0
      %v3876 = vsel %vm319, %v3821, 0
      %v3879 = vsel %vm319, %v3822, 0
      %v3882 = vsel %vm319, %v3823, 0
      %v3885 = vsel %vm319, %v3824, 0
      %v3888 = vsel %vm319, %v3825, 0
      %v3891 = vsel %vm319, %v3826, 0
      %v3894 = vsel %vm319, %v3827, 0
      %v3897 = vsel %vm319, %v3828, 0
      %v3900 = vsel %vm319, %v3829, 0
      %v3903 = vsel %vm319, %v3830, 0
      %v3906 = vsel %vm319, %v3831, 0
      %v3909 = vsel %vm319, %v3832, 0
      %v3912 = vsel %vm319, %v3833, 0
      %v3915 = vsel %vm319, %v3834, 0
      %v3918 = vsel %vm319, %v3835, 0
      %v3921 = vsel %vm319, %v3836, 0
      %v3924 = vsel %vm319, %v3837, 0
      %v3927 = vsel %vm319, %v3838, 0
      %v3930 = vsel %vm319, %v3839, 0
      %v3933 = vsel %vm319, %v3840, 0
      %v3936 = vsel %vm319, %v3841, 0
      %v3939 = vsel %vm319, %v3842, 0
      %v3942 = vsel %vm416, %v3844, 0
      %3944 = vmatprep.subr.mxu0 0.0
      %3945 = vmatpush1.msra.mxu0 %v3942
      %3946 = vmatprep.subr.mxu0 0.0
      %3947 = vmatpush1.msra.mxu0 0.0
      %3948 = vmatprep.subr.mxu0 0.0
      %3949 = vmatpush1.msra.mxu0 0.0
      %3950 = vmatprep.subr.mxu0 0.0
      %3951 = vmatpush1.msra.mxu0 0.0
      %3952 = vmatprep.subr.mxu0 0.0
      %3953 = vmatpush1.msra.mxu0 0.0
      %3954 = vmatprep.subr.mxu0 0.0
      %3955 = vmatpush1.msra.mxu0 0.0
      %3956 = vmatprep.subr.mxu0 0.0
      %3957 = vmatpush1.msra.mxu0 0.0
      %3958 = vmatprep.subr.mxu0 0.0
      %3959 = vmatpush1.msra.mxu0 0.0
      %3960 = vmatprep.subr.mxu0 0.0
      %3961 = vmatpush1.msra.mxu0 0.0
      %3962 = vmatprep.subr.mxu0 0.0
      %3963 = vmatpush1.msra.mxu0 0.0
      %3964 = vmatprep.subr.mxu0 0.0
      %3965 = vmatpush1.msra.mxu0 0.0
      %3966 = vmatprep.subr.mxu0 0.0
      %3967 = vmatpush1.msra.mxu0 0.0
      %3968 = vmatprep.subr.mxu0 0.0
      %3969 = vmatpush1.msra.mxu0 0.0
      %3970 = vmatprep.subr.mxu0 0.0
      %3971 = vmatpush1.msra.mxu0 0.0
      %3972 = vmatprep.subr.mxu0 0.0
      %3973 = vmatpush1.msra.mxu0 0.0
      %3974 = vmatprep.subr.mxu0 0.0
      %3975 = vmatpush1.msra.mxu0 0.0
      %3976 = vmatprep.subr.mxu0 0.0
      %3977 = vmatpush1.msra.mxu0 0.0
      %3978 = vmatprep.subr.mxu0 0.0
      %3979 = vmatpush1.msra.mxu0 0.0
      %3980 = vmatprep.subr.mxu0 0.0
      %3981 = vmatpush1.msra.mxu0 0.0
      %3982 = vmatprep.subr.mxu0 0.0
      %3983 = vmatpush1.msra.mxu0 0.0
      %3984 = vmatprep.subr.mxu0 0.0
      %3985 = vmatpush1.msra.mxu0 0.0
      %3986 = vmatprep.subr.mxu0 0.0
      %3987 = vmatpush1.msra.mxu0 0.0
      %3988 = vmatprep.subr.mxu0 0.0
      %3989 = vmatpush1.msra.mxu0 0.0
      %3990 = vmatprep.subr.mxu0 0.0
      %3991 = vmatpush1.msra.mxu0 0.0
      %3992 = vmatprep.subr.mxu0 0.0
      %3993 = vmatpush1.msra.mxu0 0.0
      %3994 = vmatprep.subr.mxu0 0.0
      %3995 = vmatpush1.msra.mxu0 0.0
      %3996 = vmatprep.subr.mxu0 0.0
      %3997 = vmatpush1.msra.mxu0 0.0
      %3998 = vmatprep.subr.mxu0 0.0
      %3999 = vmatpush1.msra.mxu0 0.0
      %4000 = vmatprep.subr.mxu0 0.0
      %4001 = vmatpush1.msra.mxu0 0.0
      %4002 = vmatprep.subr.mxu0 0.0
      %4003 = vmatpush1.msra.mxu0 0.0
      %4004 = vmatprep.subr.mxu0 0.0
      %4005 = vmatpush1.msra.mxu0 0.0
      %4006 = vmatprep.subr.mxu0 0.0
      %4007 = vmatpush1.msra.mxu0 0.0
      %4008 = vmatprep.mubr.f32.mxu0 0.0
      %4009 = vmatmul.mubr.f32.gmra.mrb[0].mxu0 %v3846
      %v4010 = vpop.f32.mrb[0].mxu0
      %v4011 = vadd.f32 0.0, %v4010
      %v4012 = vpop.f32.mrb[0].mxu0
      %4013 = vmatprep.mubr.f32.mxu0 0.0
      %4014 = vmatmul.mubr.f32.gmra.mrb[0].mxu0 %v3849
      %v4015 = vpop.f32.mrb[0].mxu0
      %v4016 = vadd.f32 0.0, %v4015
      %v4017 = vpop.f32.mrb[0].mxu0
      %4018 = vmatprep.mubr.f32.mxu0 0.0
      %4019 = vmatmul.mubr.f32.gmra.mrb[0].mxu0 %v3852
      %v4020 = vpop.f32.mrb[0].mxu0
      %v4021 = vadd.f32 0.0, %v4020
      %v4022 = vpop.f32.mrb[0].mxu0
      %4023 = vmatprep.mubr.f32.mxu0 0.0
      %4024 = vmatmul.mubr.f32.gmra.mrb[0].mxu0 %v3855
      %v4025 = vpop.f32.mrb[0].mxu0
      %v4026 = vadd.f32 0.0, %v4025
      %v4027 = vpop.f32.mrb[0].mxu0
      %4028 = vmatprep.mubr.f32.mxu0 0.0
      %4029 = vmatmul.mubr.f32.gmra.mrb[0].mxu0 %v3858
      %v4030 = vpop.f32.mrb[0].mxu0
      %v4031 = vadd.f32 0.0, %v4030
      %v4032 = vpop.f32.mrb[0].mxu0
      %4033 = vmatprep.mubr.f32.mxu0 0.0
      %4034 = vmatmul.mubr.f32.gmra.mrb[0].mxu0 %v3861
      %v4035 = vpop.f32.mrb[0].mxu0
      %v4036 = vadd.f32 0.0, %v4035
      %v4037 = vpop.f32.mrb[0].mxu0
      %4038 = vmatprep.mubr.f32.mxu0 0.0
      %4039 = vmatmul.mubr.f32.gmra.mrb[0].mxu0 %v3864
      %v4040 = vpop.f32.mrb[0].mxu0
      %v4041 = vadd.f32 0.0, %v4040
      %v4042 = vpop.f32.mrb[0].mxu0
      %4043 = vmatprep.mubr.f32.mxu0 0.0
      %4044 = vmatmul.mubr.f32.gmra.mrb[0].mxu0 %v3867
      %v4045 = vpop.f32.mrb[0].mxu0
      %v4046 = vadd.f32 0.0, %v4045
      %v4047 = vpop.f32.mrb[0].mxu0
      %4048 = vmatprep.mubr.f32.mxu0 0.0
      %4049 = vmatmul.mubr.f32.gmra.mrb[0].mxu0 %v3870
      %v4050 = vpop.f32.mrb[0].mxu0
      %v4051 = vadd.f32 0.0, %v4050
      %v4052 = vpop.f32.mrb[0].mxu0
      %4053 = vmatprep.mubr.f32.mxu0 0.0
      %4054 = vmatmul.mubr.f32.gmra.mrb[0].mxu0 %v3873
      %v4055 = vpop.f32.mrb[0].mxu0
      %v4056 = vadd.f32 0.0, %v4055
      %v4057 = vpop.f32.mrb[0].mxu0
      %4058 = vmatprep.mubr.f32.mxu0 0.0
      %4059 = vmatmul.mubr.f32.gmra.mrb[0].mxu0 %v3876
      %v4060 = vpop.f32.mrb[0].mxu0
      %v4061 = vadd.f32 0.0, %v4060
      %v4062 = vpop.f32.mrb[0].mxu0
      %4063 = vmatprep.mubr.f32.mxu0 0.0
      %4064 = vmatmul.mubr.f32.gmra.mrb[0].mxu0 %v3879
      %v4065 = vpop.f32.mrb[0].mxu0
      %v4066 = vadd.f32 0.0, %v4065
      %v4067 = vpop.f32.mrb[0].mxu0
      %4068 = vmatprep.mubr.f32.mxu0 0.0
      %4069 = vmatmul.mubr.f32.gmra.mrb[0].mxu0 %v3882
      %v4070 = vpop.f32.mrb[0].mxu0
      %v4071 = vadd.f32 0.0, %v4070
      %v4072 = vpop.f32.mrb[0].mxu0
      %4073 = vmatprep.mubr.f32.mxu0 0.0
      %4074 = vmatmul.mubr.f32.gmra.mrb[0].mxu0 %v3885
      %v4075 = vpop.f32.mrb[0].mxu0
      %v4076 = vadd.f32 0.0, %v4075
      %v4077 = vpop.f32.mrb[0].mxu0
      %4078 = vmatprep.mubr.f32.mxu0 0.0
      %4079 = vmatmul.mubr.f32.gmra.mrb[0].mxu0 %v3888
      %v4080 = vpop.f32.mrb[0].mxu0
      %v4081 = vadd.f32 0.0, %v4080
      %v4082 = vpop.f32.mrb[0].mxu0
      %4083 = vmatprep.mubr.f32.mxu0 0.0
      %4084 = vmatmul.mubr.f32.gmra.mrb[0].mxu0 %v3891
      %v4085 = vpop.f32.mrb[0].mxu0
      %v4086 = vadd.f32 0.0, %v4085
      %v4087 = vpop.f32.mrb[0].mxu0
      %4088 = vmatprep.mubr.f32.mxu0 0.0
      %4089 = vmatmul.mubr.f32.gmra.mrb[0].mxu0 %v3894
      %v4090 = vpop.f32.mrb[0].mxu0
      %v4091 = vadd.f32 0.0, %v4090
      %v4092 = vpop.f32.mrb[0].mxu0
      %4093 = vmatprep.mubr.f32.mxu0 0.0
      %4094 = vmatmul.mubr.f32.gmra.mrb[0].mxu0 %v3897
      %v4095 = vpop.f32.mrb[0].mxu0
      %v4096 = vadd.f32 0.0, %v4095
      %v4097 = vpop.f32.mrb[0].mxu0
      %4098 = vmatprep.mubr.f32.mxu0 0.0
      %4099 = vmatmul.mubr.f32.gmra.mrb[0].mxu0 %v3900
      %v4100 = vpop.f32.mrb[0].mxu0
      %v4101 = vadd.f32 0.0, %v4100
      %v4102 = vpop.f32.mrb[0].mxu0
      %4103 = vmatprep.mubr.f32.mxu0 0.0
      %4104 = vmatmul.mubr.f32.gmra.mrb[0].mxu0 %v3903
      %v4105 = vpop.f32.mrb[0].mxu0
      %v4106 = vadd.f32 0.0, %v4105
      %v4107 = vpop.f32.mrb[0].mxu0
      %4108 = vmatprep.mubr.f32.mxu0 0.0
      %4109 = vmatmul.mubr.f32.gmra.mrb[0].mxu0 %v3906
      %v4110 = vpop.f32.mrb[0].mxu0
      %v4111 = vadd.f32 0.0, %v4110
      %v4112 = vpop.f32.mrb[0].mxu0
      %4113 = vmatprep.mubr.f32.mxu0 0.0
      %4114 = vmatmul.mubr.f32.gmra.mrb[0].mxu0 %v3909
      %v4115 = vpop.f32.mrb[0].mxu0
      %v4116 = vadd.f32 0.0, %v4115
      %v4117 = vpop.f32.mrb[0].mxu0
      %4118 = vmatprep.mubr.f32.mxu0 0.0
      %4119 = vmatmul.mubr.f32.gmra.mrb[0].mxu0 %v3912
      %v4120 = vpop.f32.mrb[0].mxu0
      %v4121 = vadd.f32 0.0, %v4120
      %v4122 = vpop.f32.mrb[0].mxu0
      %4123 = vmatprep.mubr.f32.mxu0 0.0
      %4124 = vmatmul.mubr.f32.gmra.mrb[0].mxu0 %v3915
      %v4125 = vpop.f32.mrb[0].mxu0
      %v4126 = vadd.f32 0.0, %v4125
      %v4127 = vpop.f32.mrb[0].mxu0
      %4128 = vmatprep.mubr.f32.mxu0 0.0
      %4129 = vmatmul.mubr.f32.gmra.mrb[0].mxu0 %v3918
      %v4130 = vpop.f32.mrb[0].mxu0
      %v4131 = vadd.f32 0.0, %v4130
      %v4132 = vpop.f32.mrb[0].mxu0
      %4133 = vmatprep.mubr.f32.mxu0 0.0
      %4134 = vmatmul.mubr.f32.gmra.mrb[0].mxu0 %v3921
      %v4135 = vpop.f32.mrb[0].mxu0
      %v4136 = vadd.f32 0.0, %v4135
      %v4137 = vpop.f32.mrb[0].mxu0
      %4138 = vmatprep.mubr.f32.mxu0 0.0
      %4139 = vmatmul.mubr.f32.gmra.mrb[0].mxu0 %v3924
      %v4140 = vpop.f32.mrb[0].mxu0
      %v4141 = vadd.f32 0.0, %v4140
      %v4142 = vpop.f32.mrb[0].mxu0
      %4143 = vmatprep.mubr.f32.mxu0 0.0
      %4144 = vmatmul.mubr.f32.gmra.mrb[0].mxu0 %v3927
      %v4145 = vpop.f32.mrb[0].mxu0
      %v4146 = vadd.f32 0.0, %v4145
      %v4147 = vpop.f32.mrb[0].mxu0
      %4148 = vmatprep.mubr.f32.mxu0 0.0
      %4149 = vmatmul.mubr.f32.gmra.mrb[0].mxu0 %v3930
      %v4150 = vpop.f32.mrb[0].mxu0
      %v4151 = vadd.f32 0.0, %v4150
      %v4152 = vpop.f32.mrb[0].mxu0
      %4153 = vmatprep.mubr.f32.mxu0 0.0
      %4154 = vmatmul.mubr.f32.gmra.mrb[0].mxu0 %v3933
      %v4155 = vpop.f32.mrb[0].mxu0
      %v4156 = vadd.f32 0.0, %v4155
      %v4157 = vpop.f32.mrb[0].mxu0
      %4158 = vmatprep.mubr.f32.mxu0 0.0
      %4159 = vmatmul.mubr.f32.gmra.mrb[0].mxu0 %v3936
      %v4160 = vpop.f32.mrb[0].mxu0
      %v4161 = vadd.f32 0.0, %v4160
      %v4162 = vpop.f32.mrb[0].mxu0
      %4163 = vmatprep.mubr.f32.mxu0 0.0
      %4164 = vmatmul.mubr.f32.gmra.mrb[0].mxu0 %v3939
      %v4165 = vpop.f32.mrb[0].mxu0
      %v4166 = vadd.f32 0.0, %v4165
      %v4167 = vpop.f32.mrb[0].mxu0
      %4168 = vdwg.mxu0
      %v4169 = vadd.f32 %v3779, %v4011
      %v4170 = vadd.f32 %v3780, %v4016
      %v4171 = vadd.f32 %v3781, %v4021
      %v4172 = vadd.f32 %v3782, %v4026
      %v4173 = vadd.f32 %v3783, %v4031
      %v4174 = vadd.f32 %v3784, %v4036
      %v4175 = vadd.f32 %v3785, %v4041
      %v4176 = vadd.f32 %v3786, %v4046
      %v4177 = vadd.f32 %v3787, %v4051
      %v4178 = vadd.f32 %v3788, %v4056
      %v4179 = vadd.f32 %v3789, %v4061
      %v4180 = vadd.f32 %v3790, %v4066
      %v4181 = vadd.f32 %v3791, %v4071
      %v4182 = vadd.f32 %v3792, %v4076
      %v4183 = vadd.f32 %v3793, %v4081
      %v4184 = vadd.f32 %v3794, %v4086
      %v4185 = vadd.f32 %v3795, %v4091
      %v4186 = vadd.f32 %v3796, %v4096
      %v4187 = vadd.f32 %v3797, %v4101
      %v4188 = vadd.f32 %v3798, %v4106
      %v4189 = vadd.f32 %v3799, %v4111
      %v4190 = vadd.f32 %v3800, %v4116
      %v4191 = vadd.f32 %v3801, %v4121
      %v4192 = vadd.f32 %v3802, %v4126
      %v4193 = vadd.f32 %v3803, %v4131
      %v4194 = vadd.f32 %v3804, %v4136
      %v4195 = vadd.f32 %v3805, %v4141
      %v4196 = vadd.f32 %v3806, %v4146
      %v4197 = vadd.f32 %v3807, %v4151
      %v4198 = vadd.f32 %v3808, %v4156
      %v4199 = vadd.f32 %v3809, %v4161
      %v4200 = vadd.f32 %v3810, %v4166
      %v4201 = vld [vmem:[%s4] sm:$0x1]
      %v4203 = vlaneseq
      %v4204 = vshrl.u32 %v4203, 7
      %v4205 = vsub.s32 0, %v4204
      %v4206 = vrot.slane %v4201, %v4205
      %v4208 = vadd.f32 %v4169, %v4206
      %v4209 = vadd.f32 %v4170, %v4206
      %v4210 = vadd.f32 %v4171, %v4206
      %v4211 = vadd.f32 %v4172, %v4206
      %v4212 = vadd.f32 %v4173, %v4206
      %v4213 = vadd.f32 %v4174, %v4206
      %v4214 = vadd.f32 %v4175, %v4206
      %v4215 = vadd.f32 %v4176, %v4206
      %v4216 = vadd.f32 %v4177, %v4206
      %v4217 = vadd.f32 %v4178, %v4206
      %v4218 = vadd.f32 %v4179, %v4206
      %v4219 = vadd.f32 %v4180, %v4206
      %v4220 = vadd.f32 %v4181, %v4206
      %v4221 = vadd.f32 %v4182, %v4206
      %v4222 = vadd.f32 %v4183, %v4206
      %v4223 = vadd.f32 %v4184, %v4206
      %v4224 = vadd.f32 %v4185, %v4206
      %v4225 = vadd.f32 %v4186, %v4206
      %v4226 = vadd.f32 %v4187, %v4206
      %v4227 = vadd.f32 %v4188, %v4206
      %v4228 = vadd.f32 %v4189, %v4206
      %v4229 = vadd.f32 %v4190, %v4206
      %v4230 = vadd.f32 %v4191, %v4206
      %v4231 = vadd.f32 %v4192, %v4206
      %v4232 = vadd.f32 %v4193, %v4206
      %v4233 = vadd.f32 %v4194, %v4206
      %v4234 = vadd.f32 %v4195, %v4206
      %v4235 = vadd.f32 %v4196, %v4206
      %v4236 = vadd.f32 %v4197, %v4206
      %v4237 = vadd.f32 %v4198, %v4206
      %v4238 = vadd.f32 %v4199, %v4206
      %v4239 = vadd.f32 %v4200, %v4206
      %v4240 = vmax.f32 %v4208, 0.0
      %v4241 = vmax.f32 %v4209, 0.0
      %v4242 = vmax.f32 %v4210, 0.0
      %v4243 = vmax.f32 %v4211, 0.0
      %v4244 = vmax.f32 %v4212, 0.0
      %v4245 = vmax.f32 %v4213, 0.0
      %v4246 = vmax.f32 %v4214, 0.0
      %v4247 = vmax.f32 %v4215, 0.0
      %v4248 = vmax.f32 %v4216, 0.0
      %v4249 = vmax.f32 %v4217, 0.0
      %v4250 = vmax.f32 %v4218, 0.0
      %v4251 = vmax.f32 %v4219, 0.0
      %v4252 = vmax.f32 %v4220, 0.0
      %v4253 = vmax.f32 %v4221, 0.0
      %v4254 = vmax.f32 %v4222, 0.0
      %v4255 = vmax.f32 %v4223, 0.0
      %v4256 = vmax.f32 %v4224, 0.0
      %v4257 = vmax.f32 %v4225, 0.0
      %v4258 = vmax.f32 %v4226, 0.0
      %v4259 = vmax.f32 %v4227, 0.0
      %v4260 = vmax.f32 %v4228, 0.0
      %v4261 = vmax.f32 %v4229, 0.0
      %v4262 = vmax.f32 %v4230, 0.0
      %v4263 = vmax.f32 %v4231, 0.0
      %v4264 = vmax.f32 %v4232, 0.0
      %v4265 = vmax.f32 %v4233, 0.0
      %v4266 = vmax.f32 %v4234, 0.0
      %v4267 = vmax.f32 %v4235, 0.0
      %v4268 = vmax.f32 %v4236, 0.0
      %v4269 = vmax.f32 %v4237, 0.0
      %v4270 = vmax.f32 %v4238, 0.0
      %v4271 = vmax.f32 %v4239, 0.0
      %4272 = vrot.lane.b32.xlu0 %v279, 4
      %v4273 = vpop.permute.xlu0 %4272
      %4274 = vrot.lane.b32.xlu0 %v280, 4
      %v4275 = vpop.permute.xlu0 %4274
      %4276 = vrot.lane.b32.xlu0 %v281, 4
      %v4277 = vpop.permute.xlu0 %4276
      %4278 = vrot.lane.b32.xlu0 %v282, 4
      %v4279 = vpop.permute.xlu0 %4278
      %4280 = vrot.lane.b32.xlu0 %v283, 4
      %v4281 = vpop.permute.xlu0 %4280
      %4282 = vrot.lane.b32.xlu0 %v284, 4
      %v4283 = vpop.permute.xlu0 %4282
      %4284 = vrot.lane.b32.xlu0 %v285, 4
      %v4285 = vpop.permute.xlu0 %4284
      %4286 = vrot.lane.b32.xlu0 %v286, 4
      %v4287 = vpop.permute.xlu0 %4286
      %4288 = vrot.lane.b32.xlu0 %v287, 4
      %v4289 = vpop.permute.xlu0 %4288
      %4290 = vrot.lane.b32.xlu0 %v288, 4
      %v4291 = vpop.permute.xlu0 %4290
      %4292 = vrot.lane.b32.xlu0 %v289, 4
      %v4293 = vpop.permute.xlu0 %4292
      %4294 = vrot.lane.b32.xlu0 %v290, 4
      %v4295 = vpop.permute.xlu0 %4294
      %4296 = vrot.lane.b32.xlu0 %v291, 4
      %v4297 = vpop.permute.xlu0 %4296
      %4298 = vrot.lane.b32.xlu0 %v292, 4
      %v4299 = vpop.permute.xlu0 %4298
      %4300 = vrot.lane.b32.xlu0 %v293, 4
      %v4301 = vpop.permute.xlu0 %4300
      %4302 = vrot.lane.b32.xlu0 %v294, 4
      %v4303 = vpop.permute.xlu0 %4302
      %4304 = vrot.lane.b32.xlu0 %v295, 4
      %v4305 = vpop.permute.xlu0 %4304
      %4306 = vrot.lane.b32.xlu0 %v296, 4
      %v4307 = vpop.permute.xlu0 %4306
      %4308 = vrot.lane.b32.xlu0 %v297, 4
      %v4309 = vpop.permute.xlu0 %4308
      %4310 = vrot.lane.b32.xlu0 %v298, 4
      %v4311 = vpop.permute.xlu0 %4310
      %4312 = vrot.lane.b32.xlu0 %v299, 4
      %v4313 = vpop.permute.xlu0 %4312
      %4314 = vrot.lane.b32.xlu0 %v300, 4
      %v4315 = vpop.permute.xlu0 %4314
      %4316 = vrot.lane.b32.xlu0 %v301, 4
      %v4317 = vpop.permute.xlu0 %4316
      %4318 = vrot.lane.b32.xlu0 %v302, 4
      %v4319 = vpop.permute.xlu0 %4318
      %4320 = vrot.lane.b32.xlu0 %v303, 4
      %v4321 = vpop.permute.xlu0 %4320
      %4322 = vrot.lane.b32.xlu0 %v304, 4
      %v4323 = vpop.permute.xlu0 %4322
      %4324 = vrot.lane.b32.xlu0 %v305, 4
      %v4325 = vpop.permute.xlu0 %4324
      %4326 = vrot.lane.b32.xlu0 %v306, 4
      %v4327 = vpop.permute.xlu0 %4326
      %4328 = vrot.lane.b32.xlu0 %v307, 4
      %v4329 = vpop.permute.xlu0 %4328
      %4330 = vrot.lane.b32.xlu0 %v308, 4
      %v4331 = vpop.permute.xlu0 %4330
      %4332 = vrot.lane.b32.xlu0 %v309, 4
      %v4333 = vpop.permute.xlu0 %4332
      %4334 = vrot.lane.b32.xlu0 %v310, 4
      %v4335 = vpop.permute.xlu0 %4334
      %v4368 = vsel %vm319, %v4240, %v4273
      %v4369 = vsel %vm319, %v4241, %v4275
      %v4370 = vsel %vm319, %v4242, %v4277
      %v4371 = vsel %vm319, %v4243, %v4279
      %v4372 = vsel %vm319, %v4244, %v4281
      %v4373 = vsel %vm319, %v4245, %v4283
      %v4374 = vsel %vm319, %v4246, %v4285
      %v4375 = vsel %vm319, %v4247, %v4287
      %v4376 = vsel %vm319, %v4248, %v4289
      %v4377 = vsel %vm319, %v4249, %v4291
      %v4378 = vsel %vm319, %v4250, %v4293
      %v4379 = vsel %vm319, %v4251, %v4295
      %v4380 = vsel %vm319, %v4252, %v4297
      %v4381 = vsel %vm319, %v4253, %v4299
      %v4382 = vsel %vm319, %v4254, %v4301
      %v4383 = vsel %vm319, %v4255, %v4303
      %v4384 = vsel %vm319, %v4256, %v4305
      %v4385 = vsel %vm319, %v4257, %v4307
      %v4386 = vsel %vm319, %v4258, %v4309
      %v4387 = vsel %vm319, %v4259, %v4311
      %v4388 = vsel %vm319, %v4260, %v4313
      %v4389 = vsel %vm319, %v4261, %v4315
      %v4390 = vsel %vm319, %v4262, %v4317
      %v4391 = vsel %vm319, %v4263, %v4319
      %v4392 = vsel %vm319, %v4264, %v4321
      %v4393 = vsel %vm319, %v4265, %v4323
      %v4394 = vsel %vm319, %v4266, %v4325
      %v4395 = vsel %vm319, %v4267, %v4327
      %v4396 = vsel %vm319, %v4268, %v4329
      %v4397 = vsel %vm319, %v4269, %v4331
      %v4398 = vsel %vm319, %v4270, %v4333
      %v4399 = vsel %vm319, %v4271, %v4335
      %v4400 = vld [vmem:[%s5] sm:$0xff]
      %v4401 = vld [vmem:[%s6] sm:$0x1]
      %v4403 = vlaneseq
      %v4404 = vshrl.u32 %v4403, 7
      %v4405 = vsub.s32 0, %v4404
      %v4406 = vrot.slane %v4401, %v4405
      %vm4408 = vcmask 64512
      %v4410 = vsel %vm4408, %v4368, 0
      %v4413 = vsel %vm4408, %v4369, 0
      %v4416 = vsel %vm4408, %v4370, 0
      %v4419 = vsel %vm4408, %v4371, 0
      %v4422 = vsel %vm4408, %v4372, 0
      %v4425 = vsel %vm4408, %v4373, 0
      %v4428 = vsel %vm4408, %v4374, 0
      %v4431 = vsel %vm4408, %v4375, 0
      %v4434 = vsel %vm4408, %v4376, 0
      %v4437 = vsel %vm4408, %v4377, 0
      %v4440 = vsel %vm4408, %v4378, 0
      %v4443 = vsel %vm4408, %v4379, 0
      %v4446 = vsel %vm4408, %v4380, 0
      %v4449 = vsel %vm4408, %v4381, 0
      %v4452 = vsel %vm4408, %v4382, 0
      %v4455 = vsel %vm4408, %v4383, 0
      %v4458 = vsel %vm4408, %v4384, 0
      %v4461 = vsel %vm4408, %v4385, 0
      %v4464 = vsel %vm4408, %v4386, 0
      %v4467 = vsel %vm4408, %v4387, 0
      %v4470 = vsel %vm4408, %v4388, 0
      %v4473 = vsel %vm4408, %v4389, 0
      %v4476 = vsel %vm4408, %v4390, 0
      %v4479 = vsel %vm4408, %v4391, 0
      %v4482 = vsel %vm4408, %v4392, 0
      %v4485 = vsel %vm4408, %v4393, 0
      %v4488 = vsel %vm4408, %v4394, 0
      %v4491 = vsel %vm4408, %v4395, 0
      %v4494 = vsel %vm4408, %v4396, 0
      %v4497 = vsel %vm4408, %v4397, 0
      %v4500 = vsel %vm4408, %v4398, 0
      %v4503 = vsel %vm4408, %v4399, 0
      %4505 = vmatprep.subr.mxu0 0.0
      %4506 = vmatpush1.msra.mxu0 %v4400
      %4507 = vmatprep.subr.mxu0 0.0
      %4508 = vmatpush1.msra.mxu0 0.0
      %4509 = vmatprep.subr.mxu0 0.0
      %4510 = vmatpush1.msra.mxu0 0.0
      %4511 = vmatprep.subr.mxu0 0.0
      %4512 = vmatpush1.msra.mxu0 0.0
      %4513 = vmatprep.subr.mxu0 0.0
      %4514 = vmatpush1.msra.mxu0 0.0
      %4515 = vmatprep.subr.mxu0 0.0
      %4516 = vmatpush1.msra.mxu0 0.0
      %4517 = vmatprep.subr.mxu0 0.0
      %4518 = vmatpush1.msra.mxu0 0.0
      %4519 = vmatprep.subr.mxu0 0.0
      %4520 = vmatpush1.msra.mxu0 0.0
      %4521 = vmatprep.subr.mxu0 0.0
      %4522 = vmatpush1.msra.mxu0 0.0
      %4523 = vmatprep.subr.mxu0 0.0
      %4524 = vmatpush1.msra.mxu0 0.0
      %4525 = vmatprep.subr.mxu0 0.0
      %4526 = vmatpush1.msra.mxu0 0.0
      %4527 = vmatprep.subr.mxu0 0.0
      %4528 = vmatpush1.msra.mxu0 0.0
      %4529 = vmatprep.subr.mxu0 0.0
      %4530 = vmatpush1.msra.mxu0 0.0
      %4531 = vmatprep.subr.mxu0 0.0
      %4532 = vmatpush1.msra.mxu0 0.0
      %4533 = vmatprep.subr.mxu0 0.0
      %4534 = vmatpush1.msra.mxu0 0.0
      %4535 = vmatprep.subr.mxu0 0.0
      %4536 = vmatpush1.msra.mxu0 0.0
      %4537 = vmatprep.subr.mxu0 0.0
      %4538 = vmatpush1.msra.mxu0 0.0
      %4539 = vmatprep.subr.mxu0 0.0
      %4540 = vmatpush1.msra.mxu0 0.0
      %4541 = vmatprep.subr.mxu0 0.0
      %4542 = vmatpush1.msra.mxu0 0.0
      %4543 = vmatprep.subr.mxu0 0.0
      %4544 = vmatpush1.msra.mxu0 0.0
      %4545 = vmatprep.subr.mxu0 0.0
      %4546 = vmatpush1.msra.mxu0 0.0
      %4547 = vmatprep.subr.mxu0 0.0
      %4548 = vmatpush1.msra.mxu0 0.0
      %4549 = vmatprep.subr.mxu0 0.0
      %4550 = vmatpush1.msra.mxu0 0.0
      %4551 = vmatprep.subr.mxu0 0.0
      %4552 = vmatpush1.msra.mxu0 0.0
      %4553 = vmatprep.subr.mxu0 0.0
      %4554 = vmatpush1.msra.mxu0 0.0
      %4555 = vmatprep.subr.mxu0 0.0
      %4556 = vmatpush1.msra.mxu0 0.0
      %4557 = vmatprep.subr.mxu0 0.0
      %4558 = vmatpush1.msra.mxu0 0.0
      %4559 = vmatprep.subr.mxu0 0.0
      %4560 = vmatpush1.msra.mxu0 0.0
      %4561 = vmatprep.subr.mxu0 0.0
      %4562 = vmatpush1.msra.mxu0 0.0
      %4563 = vmatprep.subr.mxu0 0.0
      %4564 = vmatpush1.msra.mxu0 0.0
      %4565 = vmatprep.subr.mxu0 0.0
      %4566 = vmatpush1.msra.mxu0 0.0
      %4567 = vmatprep.subr.mxu0 0.0
      %4568 = vmatpush1.msra.mxu0 0.0
      %4569 = vmatprep.mubr.f32.mxu0 0.0
      %4570 = vmatmul.mubr.f32.gmra.mrb[0].mxu0 %v4410
      %v4571 = vpop.f32.mrb[0].mxu0
      %v4572 = vadd.f32 %v4406, %v4571
      %v4573 = vpop.f32.mrb[0].mxu0
      %4574 = vmatprep.mubr.f32.mxu0 0.0
      %4575 = vmatmul.mubr.f32.gmra.mrb[0].mxu0 %v4413
      %v4576 = vpop.f32.mrb[0].mxu0
      %v4577 = vadd.f32 %v4406, %v4576
      %v4578 = vpop.f32.mrb[0].mxu0
      %4579 = vmatprep.mubr.f32.mxu0 0.0
      %4580 = vmatmul.mubr.f32.gmra.mrb[0].mxu0 %v4416
      %v4581 = vpop.f32.mrb[0].mxu0
      %v4582 = vadd.f32 %v4406, %v4581
      %v4583 = vpop.f32.mrb[0].mxu0
      %4584 = vmatprep.mubr.f32.mxu0 0.0
      %4585 = vmatmul.mubr.f32.gmra.mrb[0].mxu0 %v4419
      %v4586 = vpop.f32.mrb[0].mxu0
      %v4587 = vadd.f32 %v4406, %v4586
      %v4588 = vpop.f32.mrb[0].mxu0
      %4589 = vmatprep.mubr.f32.mxu0 0.0
      %4590 = vmatmul.mubr.f32.gmra.mrb[0].mxu0 %v4422
      %v4591 = vpop.f32.mrb[0].mxu0
      %v4592 = vadd.f32 %v4406, %v4591
      %v4593 = vpop.f32.mrb[0].mxu0
      %4594 = vmatprep.mubr.f32.mxu0 0.0
      %4595 = vmatmul.mubr.f32.gmra.mrb[0].mxu0 %v4425
      %v4596 = vpop.f32.mrb[0].mxu0
      %v4597 = vadd.f32 %v4406, %v4596
      %v4598 = vpop.f32.mrb[0].mxu0
      %4599 = vmatprep.mubr.f32.mxu0 0.0
      %4600 = vmatmul.mubr.f32.gmra.mrb[0].mxu0 %v4428
      %v4601 = vpop.f32.mrb[0].mxu0
      %v4602 = vadd.f32 %v4406, %v4601
      %v4603 = vpop.f32.mrb[0].mxu0
      %4604 = vmatprep.mubr.f32.mxu0 0.0
      %4605 = vmatmul.mubr.f32.gmra.mrb[0].mxu0 %v4431
      %v4606 = vpop.f32.mrb[0].mxu0
      %v4607 = vadd.f32 %v4406, %v4606
      %v4608 = vpop.f32.mrb[0].mxu0
      %4609 = vmatprep.mubr.f32.mxu0 0.0
      %4610 = vmatmul.mubr.f32.gmra.mrb[0].mxu0 %v4434
      %v4611 = vpop.f32.mrb[0].mxu0
      %v4612 = vadd.f32 %v4406, %v4611
      %v4613 = vpop.f32.mrb[0].mxu0
      %4614 = vmatprep.mubr.f32.mxu0 0.0
      %4615 = vmatmul.mubr.f32.gmra.mrb[0].mxu0 %v4437
      %v4616 = vpop.f32.mrb[0].mxu0
      %v4617 = vadd.f32 %v4406, %v4616
      %v4618 = vpop.f32.mrb[0].mxu0
      %4619 = vmatprep.mubr.f32.mxu0 0.0
      %4620 = vmatmul.mubr.f32.gmra.mrb[0].mxu0 %v4440
      %v4621 = vpop.f32.mrb[0].mxu0
      %v4622 = vadd.f32 %v4406, %v4621
      %v4623 = vpop.f32.mrb[0].mxu0
      %4624 = vmatprep.mubr.f32.mxu0 0.0
      %4625 = vmatmul.mubr.f32.gmra.mrb[0].mxu0 %v4443
      %v4626 = vpop.f32.mrb[0].mxu0
      %v4627 = vadd.f32 %v4406, %v4626
      %v4628 = vpop.f32.mrb[0].mxu0
      %4629 = vmatprep.mubr.f32.mxu0 0.0
      %4630 = vmatmul.mubr.f32.gmra.mrb[0].mxu0 %v4446
      %v4631 = vpop.f32.mrb[0].mxu0
      %v4632 = vadd.f32 %v4406, %v4631
      %v4633 = vpop.f32.mrb[0].mxu0
      %4634 = vmatprep.mubr.f32.mxu0 0.0
      %4635 = vmatmul.mubr.f32.gmra.mrb[0].mxu0 %v4449
      %v4636 = vpop.f32.mrb[0].mxu0
      %v4637 = vadd.f32 %v4406, %v4636
      %v4638 = vpop.f32.mrb[0].mxu0
      %4639 = vmatprep.mubr.f32.mxu0 0.0
      %4640 = vmatmul.mubr.f32.gmra.mrb[0].mxu0 %v4452
      %v4641 = vpop.f32.mrb[0].mxu0
      %v4642 = vadd.f32 %v4406, %v4641
      %v4643 = vpop.f32.mrb[0].mxu0
      %4644 = vmatprep.mubr.f32.mxu0 0.0
      %4645 = vmatmul.mubr.f32.gmra.mrb[0].mxu0 %v4455
      %v4646 = vpop.f32.mrb[0].mxu0
      %v4647 = vadd.f32 %v4406, %v4646
      %v4648 = vpop.f32.mrb[0].mxu0
      %4649 = vmatprep.mubr.f32.mxu0 0.0
      %4650 = vmatmul.mubr.f32.gmra.mrb[0].mxu0 %v4458
      %v4651 = vpop.f32.mrb[0].mxu0
      %v4652 = vadd.f32 %v4406, %v4651
      %v4653 = vpop.f32.mrb[0].mxu0
      %4654 = vmatprep.mubr.f32.mxu0 0.0
      %4655 = vmatmul.mubr.f32.gmra.mrb[0].mxu0 %v4461
      %v4656 = vpop.f32.mrb[0].mxu0
      %v4657 = vadd.f32 %v4406, %v4656
      %v4658 = vpop.f32.mrb[0].mxu0
      %4659 = vmatprep.mubr.f32.mxu0 0.0
      %4660 = vmatmul.mubr.f32.gmra.mrb[0].mxu0 %v4464
      %v4661 = vpop.f32.mrb[0].mxu0
      %v4662 = vadd.f32 %v4406, %v4661
      %v4663 = vpop.f32.mrb[0].mxu0
      %4664 = vmatprep.mubr.f32.mxu0 0.0
      %4665 = vmatmul.mubr.f32.gmra.mrb[0].mxu0 %v4467
      %v4666 = vpop.f32.mrb[0].mxu0
      %v4667 = vadd.f32 %v4406, %v4666
      %v4668 = vpop.f32.mrb[0].mxu0
      %4669 = vmatprep.mubr.f32.mxu0 0.0
      %4670 = vmatmul.mubr.f32.gmra.mrb[0].mxu0 %v4470
      %v4671 = vpop.f32.mrb[0].mxu0
      %v4672 = vadd.f32 %v4406, %v4671
      %v4673 = vpop.f32.mrb[0].mxu0
      %4674 = vmatprep.mubr.f32.mxu0 0.0
      %4675 = vmatmul.mubr.f32.gmra.mrb[0].mxu0 %v4473
      %v4676 = vpop.f32.mrb[0].mxu0
      %v4677 = vadd.f32 %v4406, %v4676
      %v4678 = vpop.f32.mrb[0].mxu0
      %4679 = vmatprep.mubr.f32.mxu0 0.0
      %4680 = vmatmul.mubr.f32.gmra.mrb[0].mxu0 %v4476
      %v4681 = vpop.f32.mrb[0].mxu0
      %v4682 = vadd.f32 %v4406, %v4681
      %v4683 = vpop.f32.mrb[0].mxu0
      %4684 = vmatprep.mubr.f32.mxu0 0.0
      %4685 = vmatmul.mubr.f32.gmra.mrb[0].mxu0 %v4479
      %v4686 = vpop.f32.mrb[0].mxu0
      %v4687 = vadd.f32 %v4406, %v4686
      %v4688 = vpop.f32.mrb[0].mxu0
      %4689 = vmatprep.mubr.f32.mxu0 0.0
      %4690 = vmatmul.mubr.f32.gmra.mrb[0].mxu0 %v4482
      %v4691 = vpop.f32.mrb[0].mxu0
      %v4692 = vadd.f32 %v4406, %v4691
      %v4693 = vpop.f32.mrb[0].mxu0
      %4694 = vmatprep.mubr.f32.mxu0 0.0
      %4695 = vmatmul.mubr.f32.gmra.mrb[0].mxu0 %v4485
      %v4696 = vpop.f32.mrb[0].mxu0
      %v4697 = vadd.f32 %v4406, %v4696
      %v4698 = vpop.f32.mrb[0].mxu0
      %4699 = vmatprep.mubr.f32.mxu0 0.0
      %4700 = vmatmul.mubr.f32.gmra.mrb[0].mxu0 %v4488
      %v4701 = vpop.f32.mrb[0].mxu0
      %v4702 = vadd.f32 %v4406, %v4701
      %v4703 = vpop.f32.mrb[0].mxu0
      %4704 = vmatprep.mubr.f32.mxu0 0.0
      %4705 = vmatmul.mubr.f32.gmra.mrb[0].mxu0 %v4491
      %v4706 = vpop.f32.mrb[0].mxu0
      %v4707 = vadd.f32 %v4406, %v4706
      %v4708 = vpop.f32.mrb[0].mxu0
      %4709 = vmatprep.mubr.f32.mxu0 0.0
      %4710 = vmatmul.mubr.f32.gmra.mrb[0].mxu0 %v4494
      %v4711 = vpop.f32.mrb[0].mxu0
      %v4712 = vadd.f32 %v4406, %v4711
      %v4713 = vpop.f32.mrb[0].mxu0
      %4714 = vmatprep.mubr.f32.mxu0 0.0
      %4715 = vmatmul.mubr.f32.gmra.mrb[0].mxu0 %v4497
      %v4716 = vpop.f32.mrb[0].mxu0
      %v4717 = vadd.f32 %v4406, %v4716
      %v4718 = vpop.f32.mrb[0].mxu0
      %4719 = vmatprep.mubr.f32.mxu0 0.0
      %4720 = vmatmul.mubr.f32.gmra.mrb[0].mxu0 %v4500
      %v4721 = vpop.f32.mrb[0].mxu0
      %v4722 = vadd.f32 %v4406, %v4721
      %v4723 = vpop.f32.mrb[0].mxu0
      %4724 = vmatprep.mubr.f32.mxu0 0.0
      %4725 = vmatmul.mubr.f32.gmra.mrb[0].mxu0 %v4503
      %v4726 = vpop.f32.mrb[0].mxu0
      %v4727 = vadd.f32 %v4406, %v4726
      %v4728 = vpop.f32.mrb[0].mxu0
      %4729 = vdwg.mxu0
      %v4730 = vmax.f32 %v4572, 0.0
      %v4731 = vmax.f32 %v4577, 0.0
      %v4732 = vmax.f32 %v4582, 0.0
      %v4733 = vmax.f32 %v4587, 0.0
      %v4734 = vmax.f32 %v4592, 0.0
      %v4735 = vmax.f32 %v4597, 0.0
      %v4736 = vmax.f32 %v4602, 0.0
      %v4737 = vmax.f32 %v4607, 0.0
      %v4738 = vmax.f32 %v4612, 0.0
      %v4739 = vmax.f32 %v4617, 0.0
      %v4740 = vmax.f32 %v4622, 0.0
      %v4741 = vmax.f32 %v4627, 0.0
      %v4742 = vmax.f32 %v4632, 0.0
      %v4743 = vmax.f32 %v4637, 0.0
      %v4744 = vmax.f32 %v4642, 0.0
      %v4745 = vmax.f32 %v4647, 0.0
      %v4746 = vmax.f32 %v4652, 0.0
      %v4747 = vmax.f32 %v4657, 0.0
      %v4748 = vmax.f32 %v4662, 0.0
      %v4749 = vmax.f32 %v4667, 0.0
      %v4750 = vmax.f32 %v4672, 0.0
      %v4751 = vmax.f32 %v4677, 0.0
      %v4752 = vmax.f32 %v4682, 0.0
      %v4753 = vmax.f32 %v4687, 0.0
      %v4754 = vmax.f32 %v4692, 0.0
      %v4755 = vmax.f32 %v4697, 0.0
      %v4756 = vmax.f32 %v4702, 0.0
      %v4757 = vmax.f32 %v4707, 0.0
      %v4758 = vmax.f32 %v4712, 0.0
      %v4759 = vmax.f32 %v4717, 0.0
      %v4760 = vmax.f32 %v4722, 0.0
      %v4761 = vmax.f32 %v4727, 0.0
      %vm4762 = vcmask 130048
      %4763 = vst.msk [vmem:[%s278] sm:$0xff] %vm4762, %v4730
      %4764 = vst.msk [vmem:[%s278 + $0x8] sm:$0xff] %vm4762, %v4731
      %4765 = vst.msk [vmem:[%s278 + $0x10] sm:$0xff] %vm4762, %v4732
      %4766 = vst.msk [vmem:[%s278 + $0x18] sm:$0xff] %vm4762, %v4733
      %4767 = vst.msk [vmem:[%s278 + $0x20] sm:$0xff] %vm4762, %v4734
      %4768 = vst.msk [vmem:[%s278 + $0x28] sm:$0xff] %vm4762, %v4735
      %4769 = vst.msk [vmem:[%s278 + $0x30] sm:$0xff] %vm4762, %v4736
      %4770 = vst.msk [vmem:[%s278 + $0x38] sm:$0xff] %vm4762, %v4737
      %4771 = vst.msk [vmem:[%s278 + $0x40] sm:$0xff] %vm4762, %v4738
      %4772 = vst.msk [vmem:[%s278 + $0x48] sm:$0xff] %vm4762, %v4739
      %4773 = vst.msk [vmem:[%s278 + $0x50] sm:$0xff] %vm4762, %v4740
      %4774 = vst.msk [vmem:[%s278 + $0x58] sm:$0xff] %vm4762, %v4741
      %4775 = vst.msk [vmem:[%s278 + $0x60] sm:$0xff] %vm4762, %v4742
      %4776 = vst.msk [vmem:[%s278 + $0x68] sm:$0xff] %vm4762, %v4743
      %4777 = vst.msk [vmem:[%s278 + $0x70] sm:$0xff] %vm4762, %v4744
      %4778 = vst.msk [vmem:[%s278 + $0x78] sm:$0xff] %vm4762, %v4745
      %4779 = vst.msk [vmem:[%s278 + $0x80] sm:$0xff] %vm4762, %v4746
      %4780 = vst.msk [vmem:[%s278 + $0x88] sm:$0xff] %vm4762, %v4747
      %4781 = vst.msk [vmem:[%s278 + $0x90] sm:$0xff] %vm4762, %v4748
      %4782 = vst.msk [vmem:[%s278 + $0x98] sm:$0xff] %vm4762, %v4749
      %4783 = vst.msk [vmem:[%s278 + $0xa0] sm:$0xff] %vm4762, %v4750
      %4784 = vst.msk [vmem:[%s278 + $0xa8] sm:$0xff] %vm4762, %v4751
      %4785 = vst.msk [vmem:[%s278 + $0xb0] sm:$0xff] %vm4762, %v4752
      %4786 = vst.msk [vmem:[%s278 + $0xb8] sm:$0xff] %vm4762, %v4753
      %4787 = vst.msk [vmem:[%s278 + $0xc0] sm:$0xff] %vm4762, %v4754
      %4788 = vst.msk [vmem:[%s278 + $0xc8] sm:$0xff] %vm4762, %v4755
      %4789 = vst.msk [vmem:[%s278 + $0xd0] sm:$0xff] %vm4762, %v4756
      %4790 = vst.msk [vmem:[%s278 + $0xd8] sm:$0xff] %vm4762, %v4757
      %4791 = vst.msk [vmem:[%s278 + $0xe0] sm:$0xff] %vm4762, %v4758
      %4792 = vst.msk [vmem:[%s278 + $0xe8] sm:$0xff] %vm4762, %v4759
      %4793 = vst.msk [vmem:[%s278 + $0xf0] sm:$0xff] %vm4762, %v4760
      %4794 = vst.msk [vmem:[%s278 + $0xf8] sm:$0xff] %vm4762, %v4761
      %p4795 = scmp.lt.s32.totalorder %s18, 1
      %s4796 = scalar_select %p4795, %s18, 1
      %s4797 = smul.addr %s4796, 32
      %s4798 = smul.addr %s4797, 8
      %s4799 = scalar_lea.vmem %s7, %s4798
      // Predicated region
      $region49: #{tpu_custom_call.1} parent=47 // pred_check
        %p4800 = pneg %p188
      $region50: #{tpu_custom_call.1} parent=47 // pred_check_branch
        %4802 = sbr.rel (%p4800) target = $region52
      $region51: #{tpu_custom_call.1} parent=47 // pred_region
        _
      $region52: #{tpu_custom_call.1} parent=47 // pred_fallthru
        _
    $region48: #{tpu_custom_call.1} parent=5 // pred_fallthru
      _
    %p4803 = scmp.le.s32.totalorder 2, %s13
    // Predicated region
    $region53: #{tpu_custom_call.1} parent=5 // pred_check
      %p4804 = pneg %p4803
    $region54: #{tpu_custom_call.1} parent=5 // pred_check_branch
      %4806 = sbr.rel (%p4804) target = $region56
    $region55: #{tpu_custom_call.1} parent=5 // pred_region
      %s4807 = ssub.s32 %s13, 2
      // Predicated region
      $region57: #{tpu_custom_call.1} parent=55 // pred_check
        %p4808 = pneg %p194
      $region58: #{tpu_custom_call.1} parent=55 // pred_check_branch
        %4810 = sbr.rel (%p4808) target = $region60
      $region59: #{tpu_custom_call.1} parent=55 // pred_region
        %p4811 = scmp.lt.s32.totalorder %s19, 1
        %s4812 = scalar_select %p4811, %s19, 1
        %s4813 = smul.addr %s4812, 32
        %s4814 = smul.addr %s4813, 8
        %s4815 = scalar_lea.vmem %s7, %s4814
      $region60: #{tpu_custom_call.1} parent=55 // pred_fallthru
        _
    $region56: #{tpu_custom_call.1} parent=5 // pred_fallthru
      _
  $region6: #{tpu_custom_call.1} parent=0 // loop_footer
    %s17 = sadd.s32 1, %s13
  $region7: #{tpu_custom_call.1} parent=0 // loop_footer_branch
    %12 = sbr.rel target = $region3
  $region8: #{tpu_custom_call.1} parent=0 // loop_exit
    _

</llo_original>
